<compile_context>
chip_gen: v7x
topology: tpu7x:2x2x1
jax: 0.10.0
libtpu: 0.0.40
codegen_flags: <defaults>
</compile_context>

<pallas_src>
import functools

import jax
import jax.numpy as jnp
from jax.experimental import pallas as pl
from jax.experimental.pallas import tpu as pltpu


def _round_up(x, m):
    return ((x + m - 1) // m) * m


def _pad2(a, rows, cols):
    r, c = a.shape
    return jnp.pad(a, ((0, rows - r), (0, cols - c)))


def _pack_gate_weights(w, H, Kp, Hp):
    """w: (3H, K) PyTorch layout, gate order [r, z, n] -> (Kp, 3*Hp) bf16."""
    cols = []
    for g in range(3):
        blk = w[g * H:(g + 1) * H, :].T          # (K, H)
        cols.append(_pad2(blk, Kp, Hp))
    return jnp.concatenate(cols, axis=1).astype(jnp.bfloat16)


def _pack_gate_bias(b_ih, b_hh, H, Hp):
    """Fold b_hh into r/z; keep b_hh_n separate (lives inside r*(W_hn h + b_hn))."""
    segs = []
    for g, add_hh in ((0, True), (1, True), (2, False)):
        seg = b_ih[g * H:(g + 1) * H]
        if add_hh:
            seg = seg + b_hh[g * H:(g + 1) * H]
        segs.append(jnp.pad(seg, (0, Hp - H)))
    bi = jnp.concatenate(segs).reshape(1, 3 * Hp).astype(jnp.float32)
    bhn = jnp.pad(b_hh[2 * H:3 * H], (0, Hp - H)).reshape(1, Hp).astype(jnp.float32)
    return bi, bhn


# ----------------------------------------------------------------------------
# Fused kernel: one grid step == one (batch block, time block). For each layer:
# hoisted input projection (one wide matmul -> gi scratch), then TT recurrent
# steps with h carried in VMEM scratch. The MLP head runs on the last time block.
# ----------------------------------------------------------------------------
def _fused_gru_head_kernel(x_ref, *refs, L, num_hidden, TT, T, Hp, need_mask):
    layer_refs = refs[:4 * L]
    wfi_ref, bfi_ref, wfh_ref, bfh_ref, wfo_ref, bfo_ref = refs[4 * L:4 * L + 6]
    out_ref = refs[4 * L + 6]
    gi_ref, act_ref, h_ref = refs[4 * L + 7:4 * L + 10]

    tb = pl.program_id(1)
    BB = act_ref.shape[1]

    @pl.when(tb == 0)
    def _():
        h_ref[...] = jnp.zeros_like(h_ref)

    for l in range(L):
        wi_ref, wh_ref, bi_ref, bhn_ref = layer_refs[4 * l:4 * l + 4]

        # Hoisted input projection for the whole time block: one wide bf16
        # matmul (K x 3Hp), f32 accumulation, r/z biases pre-folded. Stored to
        # VMEM scratch so it is not live in vregs across the recurrent loop.
        inp = x_ref[...] if l == 0 else act_ref[...]        # bf16 (TT, BB, K)
        K = inp.shape[-1]
        gi_ref[...] = (
            jnp.dot(inp.reshape(TT * BB, K), wi_ref[...],
                    preferred_element_type=jnp.float32)
            + bi_ref[...]).reshape(TT, BB, 3 * Hp)

        # Hoist the b_hh_n broadcast out of the recurrent loop.
        bhn = jnp.broadcast_to(bhn_ref[...], (BB, Hp))
        write_act = l < L - 1   # only intermediate layers feed a next layer

        def step(tl, h, wh_ref=wh_ref, bhn=bhn, write_act=write_act):
            gi = gi_ref[tl]                                  # f32 (BB, 3Hp)
            gh = jnp.dot(h.astype(jnp.bfloat16), wh_ref[...],
                         preferred_element_type=jnp.float32)  # one dot / step
            r = jax.nn.sigmoid(gi[:, 0:Hp] + gh[:, 0:Hp])
            z = jax.nn.sigmoid(gi[:, Hp:2 * Hp] + gh[:, Hp:2 * Hp])
            n = jnp.tanh(gi[:, 2 * Hp:3 * Hp] + r * (gh[:, 2 * Hp:3 * Hp] + bhn))
            h_new = n + z * (h - n)                          # == (1-z)*n + z*h
            if need_mask:
                # Hold h on padded (invalid) time steps of the last time block.
                h_new = jnp.where(tb * TT + tl < T, h_new, h)
            if write_act:
                act_ref[tl] = h_new.astype(act_ref.dtype)
            return h_new

        h_ref[l] = jax.lax.fori_loop(0, TT, step, h_ref[l], unroll=True)

    # MLP head fused onto the final hidden state of the last layer; only the
    # last time block writes the output block.
    @pl.when(tb == pl.num_programs(1) - 1)
    def _():
        a = jnp.maximum(
            jnp.dot(h_ref[L - 1].astype(jnp.bfloat16), wfi_ref[...],
                    preferred_element_type=jnp.float32) + bfi_ref[...], 0.0)
        for _ in range(num_hidden):
            a = jnp.maximum(
                jnp.dot(a.astype(jnp.bfloat16), wfh_ref[...],
                        preferred_element_type=jnp.float32) + bfh_ref[...], 0.0)
        out_ref[...] = (
            jnp.dot(a.astype(jnp.bfloat16), wfo_ref[...],
                    preferred_element_type=jnp.float32)
            + bfo_ref[...]).astype(out_ref.dtype)


# ----------------------------------------------------------------------------
# Full forward pass (matches the PyTorch module's forward; zero initial h0).
# ----------------------------------------------------------------------------
def gru_forward(params, x, *, num_hidden):
    B, T, D = x.shape
    L = len(params["gru"])
    H = params["gru"][0]["w_hh"].shape[1]
    HD = params["fc_in"]["w"].shape[0]
    O = params["fc_out"]["w"].shape[0]

    # Lane-dense padding (multiples of 128) and sublane-friendly batch padding.
    Hp = _round_up(H, 128)
    Dp = _round_up(D, 128)
    HDp = _round_up(HD, 128)
    Op = _round_up(O, 128)
    Bp = _round_up(B, 16)                     # bf16 sublane packing (reshape-safe)
    TT = min(T, 32)                           # never collapse the time block
    Tp = _round_up(T, TT)
    need_mask = Tp != T
    # Split the batch axis when large enough so the "parallel" grid axis can
    # shard across v7x's two TensorCores (keep BB a multiple of 16).
    BB = Bp // 2 if Bp % 32 == 0 else Bp
    n_bblk = Bp // BB

    # x -> time-major, padded (Tp, Bp, Dp) bf16.
    x_t = jnp.transpose(x, (1, 0, 2)).astype(jnp.bfloat16)
    x_t = jnp.pad(x_t, ((0, Tp - T), (0, Bp - B), (0, Dp - D)))

    args = [x_t]
    in_specs = [pl.BlockSpec((TT, BB, Dp), lambda b, t: (t, b, 0))]

    for l, layer in enumerate(params["gru"]):
        Kp = Dp if l == 0 else Hp
        w_ih = jnp.asarray(layer["w_ih"], jnp.float32)
        w_hh = jnp.asarray(layer["w_hh"], jnp.float32)
        b_ih = jnp.asarray(layer["b_ih"], jnp.float32)
        b_hh = jnp.asarray(layer["b_hh"], jnp.float32)
        wi = _pack_gate_weights(w_ih, H, Kp, Hp)         # (Kp, 3Hp) bf16
        wh = _pack_gate_weights(w_hh, H, Hp, Hp)         # (Hp, 3Hp) bf16
        bi, bhn = _pack_gate_bias(b_ih, b_hh, H, Hp)
        args += [wi, wh, bi, bhn]
        in_specs += [
            pl.BlockSpec((Kp, 3 * Hp), lambda b, t: (0, 0)),
            pl.BlockSpec((Hp, 3 * Hp), lambda b, t: (0, 0)),
            pl.BlockSpec((1, 3 * Hp), lambda b, t: (0, 0)),
            pl.BlockSpec((1, Hp), lambda b, t: (0, 0)),
        ]

    # MLP head weights (lane-dense, transposed for right-matmul).
    wfi = _pad2(jnp.asarray(params["fc_in"]["w"], jnp.float32).T, Hp, HDp).astype(jnp.bfloat16)
    bfi = jnp.pad(jnp.asarray(params["fc_in"]["b"], jnp.float32), (0, HDp - HD)).reshape(1, HDp)
    wfh = _pad2(jnp.asarray(params["fc_hidden"]["w"], jnp.float32).T, HDp, HDp).astype(jnp.bfloat16)
    bfh = jnp.pad(jnp.asarray(params["fc_hidden"]["b"], jnp.float32), (0, HDp - HD)).reshape(1, HDp)
    wfo = _pad2(jnp.asarray(params["fc_out"]["w"], jnp.float32).T, HDp, Op).astype(jnp.bfloat16)
    bfo = jnp.pad(jnp.asarray(params["fc_out"]["b"], jnp.float32), (0, Op - O)).reshape(1, Op)
    args += [wfi, bfi, wfh, bfh, wfo, bfo]
    in_specs += [
        pl.BlockSpec((Hp, HDp), lambda b, t: (0, 0)),
        pl.BlockSpec((1, HDp), lambda b, t: (0, 0)),
        pl.BlockSpec((HDp, HDp), lambda b, t: (0, 0)),
        pl.BlockSpec((1, HDp), lambda b, t: (0, 0)),
        pl.BlockSpec((HDp, Op), lambda b, t: (0, 0)),
        pl.BlockSpec((1, Op), lambda b, t: (0, 0)),
    ]

    kernel = functools.partial(
        _fused_gru_head_kernel,
        L=L, num_hidden=num_hidden, TT=TT, T=T, Hp=Hp, need_mask=need_mask)

    out = pl.pallas_call(
        kernel,
        out_shape=jax.ShapeDtypeStruct((Bp, Op), jnp.float32),
        grid=(n_bblk, Tp // TT),
        in_specs=in_specs,
        out_specs=pl.BlockSpec((BB, Op), lambda b, t: (b, 0)),
        scratch_shapes=[
            pltpu.VMEM((TT, BB, 3 * Hp), jnp.float32),   # hoisted input projection
            pltpu.VMEM((TT, BB, Hp), jnp.bfloat16),      # inter-layer activations
            pltpu.VMEM((L, BB, Hp), jnp.float32),        # carried hidden states
        ],
        compiler_params=pltpu.CompilerParams(
            dimension_semantics=("parallel", "arbitrary"),
            vmem_limit_bytes=48 * 1024 * 1024),
    )(*args)

    return out[:B, :O]


# ----------------------------------------------------------------------------
# Deterministic parameter init (PyTorch-style uniform(-1/sqrt(fan), 1/sqrt(fan)))
# ----------------------------------------------------------------------------
def init_params(key, input_size, gru_size, gru_layers, hidden_size, output_size):
    def uniform(k, shape, bound):
        return jax.random.uniform(k, shape, jnp.float32, -bound, bound)

    params = {"gru": []}
    kg = 1.0 / jnp.sqrt(gru_size)
    for l in range(gru_layers):
        d_in = input_size if l == 0 else gru_size
        k = jax.random.fold_in(key, 100 + l)
        k1, k2, k3, k4 = jax.random.split(k, 4)
        params["gru"].append({
            "w_ih": uniform(k1, (3 * gru_size, d_in), kg),
            "w_hh": uniform(k2, (3 * gru_size, gru_size), kg),
            "b_ih": uniform(k3, (3 * gru_size,), kg),
            "b_hh": uniform(k4, (3 * gru_size,), kg),
        })

    def linear(k, fan_in, fan_out):
        kb = 1.0 / jnp.sqrt(fan_in)
        k1, k2 = jax.random.split(k)
        return {"w": uniform(k1, (fan_out, fan_in), kb),
                "b": uniform(k2, (fan_out,), kb)}

    params["fc_in"] = linear(jax.random.fold_in(key, 200), gru_size, hidden_size)
    params["fc_hidden"] = linear(jax.random.fold_in(key, 201), hidden_size, hidden_size)
    params["fc_out"] = linear(jax.random.fold_in(key, 202), hidden_size, output_size)
    return params


# ----------------------------------------------------------------------------
# Pure-JAX f32 reference (same math as torch.nn.GRU + linears) for verification.
# ----------------------------------------------------------------------------
def gru_forward_ref(params, x, *, num_hidden):
    def cell(h, x_t, w_ih, w_hh, b_ih, b_hh):
        H = h.shape[-1]
        gi = x_t @ w_ih.T + b_ih
        gh = h @ w_hh.T + b_hh
        r = jax.nn.sigmoid(gi[:, :H] + gh[:, :H])
        z = jax.nn.sigmoid(gi[:, H:2 * H] + gh[:, H:2 * H])
        n = jnp.tanh(gi[:, 2 * H:] + r * gh[:, 2 * H:])
        return (1.0 - z) * n + z * h

    x_t = jnp.transpose(x, (1, 0, 2)).astype(jnp.float32)   # (T, B, D)
    for layer in params["gru"]:
        B = x_t.shape[1]
        H = layer["w_hh"].shape[1]
        h = jnp.zeros((B, H), jnp.float32)

        def step(h, xt, layer=layer):
            h_new = cell(h, xt, layer["w_ih"], layer["w_hh"],
                         layer["b_ih"], layer["b_hh"])
            return h_new, h_new

        _, x_t = jax.lax.scan(step, h, x_t)
    out = x_t[-1]
    out = jnp.maximum(out @ params["fc_in"]["w"].T + params["fc_in"]["b"], 0.0)
    for _ in range(num_hidden):
        out = jnp.maximum(out @ params["fc_hidden"]["w"].T + params["fc_hidden"]["b"], 0.0)
    return out @ params["fc_out"]["w"].T + params["fc_out"]["b"]


if __name__ == "__main__":
    # Small shapes consistent with the module's forward signature.
    B, T = 2, 8
    input_size, gru_size, gru_layers = 4, 32, 2
    hidden_size, num_hidden, output_size = 32, 1, 1

    key = jax.random.PRNGKey(0)
    params = init_params(key, input_size, gru_size, gru_layers,
                         hidden_size, output_size)
    x = jax.random.normal(jax.random.fold_in(key, 999),
                          (B, T, input_size), jnp.float32)

    out = gru_forward(params, x, num_hidden=num_hidden)
    out = jax.block_until_ready(out)

    ref = gru_forward_ref(params, x, num_hidden=num_hidden)
    assert out.shape == (B, output_size), out.shape
    # bf16 MXU operands (f32 accumulation) -> relaxed tolerance vs the f32 reference.
    assert jnp.allclose(out, ref, rtol=5e-2, atol=5e-2), (out, ref)

    print("KERNEL_OK")
</pallas_src>

<mosaic_0001>
module attributes {stable_mosaic.version = 11 : i64} {
  func.func @_fused_gru_head_kernel(%arg0: i32, %arg1: i32, %arg2: memref<8x16x128xbf16, #tpu.memory_space<vmem>>, %arg3: memref<128x384xbf16, #tpu.memory_space<vmem>>, %arg4: memref<128x384xbf16, #tpu.memory_space<vmem>>, %arg5: memref<1x384xf32, #tpu.memory_space<vmem>>, %arg6: memref<1x128xf32, #tpu.memory_space<vmem>>, %arg7: memref<128x384xbf16, #tpu.memory_space<vmem>>, %arg8: memref<128x384xbf16, #tpu.memory_space<vmem>>, %arg9: memref<1x384xf32, #tpu.memory_space<vmem>>, %arg10: memref<1x128xf32, #tpu.memory_space<vmem>>, %arg11: memref<128x128xbf16, #tpu.memory_space<vmem>>, %arg12: memref<1x128xf32, #tpu.memory_space<vmem>>, %arg13: memref<128x128xbf16, #tpu.memory_space<vmem>>, %arg14: memref<1x128xf32, #tpu.memory_space<vmem>>, %arg15: memref<128x128xbf16, #tpu.memory_space<vmem>>, %arg16: memref<1x128xf32, #tpu.memory_space<vmem>>, %arg17: memref<16x128xf32, #tpu.memory_space<vmem>>, %arg18: memref<8x16x384xf32, #tpu.memory_space<vmem>>, %arg19: memref<8x16x128xbf16, #tpu.memory_space<vmem>>, %arg20: memref<2x16x128xf32, #tpu.memory_space<vmem>>) attributes {dimension_semantics = [#tpu.dimension_semantics<parallel>, #tpu.dimension_semantics<arbitrary>], iteration_bounds = array<i64: 1, 1>, scalar_prefetch = 0 : i64, scratch_operands = 3 : i64, tpu.core_type = #tpu.core_type<tc>, window_params = [{transform_indices = @transform_0, window_bounds = array<i64: 8, 16, 128>}, {pipeline_mode = #tpu.pipeline_mode<synchronous>, transform_indices = @transform_1, window_bounds = array<i64: 128, 384>}, {pipeline_mode = #tpu.pipeline_mode<synchronous>, transform_indices = @transform_2, window_bounds = array<i64: 128, 384>}, {pipeline_mode = #tpu.pipeline_mode<synchronous>, transform_indices = @transform_3, window_bounds = array<i64: 1, 384>}, {pipeline_mode = #tpu.pipeline_mode<synchronous>, transform_indices = @transform_4, window_bounds = array<i64: 1, 128>}, {pipeline_mode = #tpu.pipeline_mode<synchronous>, transform_indices = @transform_5, window_bounds = array<i64: 128, 384>}, {pipeline_mode = #tpu.pipeline_mode<synchronous>, transform_indices = @transform_6, window_bounds = array<i64: 128, 384>}, {pipeline_mode = #tpu.pipeline_mode<synchronous>, transform_indices = @transform_7, window_bounds = array<i64: 1, 384>}, {pipeline_mode = #tpu.pipeline_mode<synchronous>, transform_indices = @transform_8, window_bounds = array<i64: 1, 128>}, {pipeline_mode = #tpu.pipeline_mode<synchronous>, transform_indices = @transform_9, window_bounds = array<i64: 128, 128>}, {pipeline_mode = #tpu.pipeline_mode<synchronous>, transform_indices = @transform_10, window_bounds = array<i64: 1, 128>}, {pipeline_mode = #tpu.pipeline_mode<synchronous>, transform_indices = @transform_11, window_bounds = array<i64: 128, 128>}, {pipeline_mode = #tpu.pipeline_mode<synchronous>, transform_indices = @transform_12, window_bounds = array<i64: 1, 128>}, {pipeline_mode = #tpu.pipeline_mode<synchronous>, transform_indices = @transform_13, window_bounds = array<i64: 128, 128>}, {pipeline_mode = #tpu.pipeline_mode<synchronous>, transform_indices = @transform_14, window_bounds = array<i64: 1, 128>}, {transform_indices = @transform_15, window_bounds = array<i64: 16, 128>}]} {
    %c0_i32 = arith.constant 0 : i32
    %0 = arith.cmpi eq, %arg1, %c0_i32 : i32
    %1 = arith.extui %0 : i1 to i32
    %c0_i32_0 = arith.constant 0 : i32
    %2 = arith.cmpi ne, %1, %c0_i32_0 : i32
    scf.if %2 {
      %cst_176 = arith.constant 0.000000e+00 : f32
      %576 = vector.broadcast %cst_176 : f32 to vector<2x16x128xf32>
      %c0_177 = arith.constant 0 : index
      %c0_178 = arith.constant 0 : index
      %c0_179 = arith.constant 0 : index
      %577 = vector.load %arg20[%c0_177, %c0_178, %c0_179] : memref<2x16x128xf32, #tpu.memory_space<vmem>>, vector<2x16x128xf32>
      tpu.vector_store %arg20[%c0_177, %c0_178, %c0_179], %576 {strides = array<i32>} : memref<2x16x128xf32, #tpu.memory_space<vmem>>, vector<2x16x128xf32>,
    } else {
    }
    %c0 = arith.constant 0 : index
    %c0_1 = arith.constant 0 : index
    %c0_2 = arith.constant 0 : index
    %3 = vector.load %arg2[%c0, %c0_1, %c0_2] : memref<8x16x128xbf16, #tpu.memory_space<vmem>>, vector<8x16x128xbf16>
    %4 = vector.shape_cast %3 : vector<8x16x128xbf16> to vector<128x128xbf16>
    %c0_3 = arith.constant 0 : index
    %c0_4 = arith.constant 0 : index
    %5 = vector.load %arg3[%c0_3, %c0_4] : memref<128x384xbf16, #tpu.memory_space<vmem>>, vector<128x384xbf16>
    %cst = arith.constant dense<0.000000e+00> : vector<128x384xf32>
    %6 = tpu.matmul %4, %5, %cst {dimension_numbers = #tpu.dot_dimension_numbers<[1], [0], [0], [1], [0, 0, 1, 1], [], []>} : vector<128x128xbf16>, vector<128x384xbf16>, vector<128x384xf32> -> vector<128x384xf32>
    %c0_5 = arith.constant 0 : index
    %c0_6 = arith.constant 0 : index
    %7 = vector.load %arg5[%c0_5, %c0_6] : memref<1x384xf32, #tpu.memory_space<vmem>>, vector<1x384xf32>
    %8 = vector.broadcast %7 : vector<1x384xf32> to vector<128x384xf32>
    %9 = arith.addf %6, %8 : vector<128x384xf32>
    %10 = vector.shape_cast %9 : vector<128x384xf32> to vector<8x16x384xf32>
    %c0_7 = arith.constant 0 : index
    %c0_8 = arith.constant 0 : index
    %c0_9 = arith.constant 0 : index
    %11 = vector.load %arg18[%c0_7, %c0_8, %c0_9] : memref<8x16x384xf32, #tpu.memory_space<vmem>>, vector<8x16x384xf32>
    tpu.vector_store %arg18[%c0_7, %c0_8, %c0_9], %10 {strides = array<i32>} : memref<8x16x384xf32, #tpu.memory_space<vmem>>, vector<8x16x384xf32>,
    %c0_10 = arith.constant 0 : index
    %c0_11 = arith.constant 0 : index
    %12 = vector.load %arg6[%c0_10, %c0_11] : memref<1x128xf32, #tpu.memory_space<vmem>>, vector<1x128xf32>
    %13 = vector.shape_cast %12 : vector<1x128xf32> to vector<1x128xf32>
    %14 = vector.broadcast %13 : vector<1x128xf32> to vector<16x128xf32>
    %c0_12 = arith.constant 0 : index
    %c0_13 = arith.constant 0 : index
    %c0_14 = arith.constant 0 : index
    %15 = vector.load %arg20[%c0_12, %c0_13, %c0_14] : memref<2x16x128xf32, #tpu.memory_space<vmem>>, vector<1x16x128xf32>
    %16 = vector.shape_cast %15 : vector<1x16x128xf32> to vector<16x128xf32>
    %c0_i32_15 = arith.constant 0 : i32
    %17 = arith.index_cast %c0_i32_15 : i32 to index
    %c0_16 = arith.constant 0 : index
    %c0_17 = arith.constant 0 : index
    %18 = vector.load %arg18[%17, %c0_16, %c0_17] : memref<8x16x384xf32, #tpu.memory_space<vmem>>, vector<1x16x384xf32>
    %19 = vector.shape_cast %18 : vector<1x16x384xf32> to vector<16x384xf32>
    %20 = arith.truncf %16 : vector<16x128xf32> to vector<16x128xbf16>
    %c0_18 = arith.constant 0 : index
    %c0_19 = arith.constant 0 : index
    %21 = vector.load %arg4[%c0_18, %c0_19] : memref<128x384xbf16, #tpu.memory_space<vmem>>, vector<128x384xbf16>
    %cst_20 = arith.constant dense<0.000000e+00> : vector<16x384xf32>
    %22 = tpu.matmul %20, %21, %cst_20 {dimension_numbers = #tpu.dot_dimension_numbers<[1], [0], [0], [1], [0, 0, 1, 1], [], []>} : vector<16x128xbf16>, vector<128x384xbf16>, vector<16x384xf32> -> vector<16x384xf32>
    %23 = vector.extract_strided_slice %19 {offsets = [0, 0], sizes = [16, 128], strides = [1, 1]} : vector<16x384xf32> to vector<16x128xf32>
    %24 = vector.extract_strided_slice %22 {offsets = [0, 0], sizes = [16, 128], strides = [1, 1]} : vector<16x384xf32> to vector<16x128xf32>
    %25 = arith.addf %23, %24 : vector<16x128xf32>
    %26 = arith.negf %25 : vector<16x128xf32>
    %27 = math.exp %26 : vector<16x128xf32>
    %cst_21 = arith.constant 1.000000e+00 : f32
    %28 = vector.broadcast %cst_21 : f32 to vector<16x128xf32>
    %29 = arith.addf %28, %27 : vector<16x128xf32>
    %30 = arith.divf %28, %29 : vector<16x128xf32>
    %31 = vector.extract_strided_slice %19 {offsets = [0, 128], sizes = [16, 128], strides = [1, 1]} : vector<16x384xf32> to vector<16x128xf32>
    %32 = vector.extract_strided_slice %22 {offsets = [0, 128], sizes = [16, 128], strides = [1, 1]} : vector<16x384xf32> to vector<16x128xf32>
    %33 = arith.addf %31, %32 : vector<16x128xf32>
    %34 = arith.negf %33 : vector<16x128xf32>
    %35 = math.exp %34 : vector<16x128xf32>
    %cst_22 = arith.constant 1.000000e+00 : f32
    %36 = vector.broadcast %cst_22 : f32 to vector<16x128xf32>
    %37 = arith.addf %36, %35 : vector<16x128xf32>
    %38 = arith.divf %36, %37 : vector<16x128xf32>
    %39 = vector.extract_strided_slice %19 {offsets = [0, 256], sizes = [16, 128], strides = [1, 1]} : vector<16x384xf32> to vector<16x128xf32>
    %40 = vector.extract_strided_slice %22 {offsets = [0, 256], sizes = [16, 128], strides = [1, 1]} : vector<16x384xf32> to vector<16x128xf32>
    %41 = arith.addf %40, %14 : vector<16x128xf32>
    %42 = arith.mulf %30, %41 : vector<16x128xf32>
    %43 = arith.addf %39, %42 : vector<16x128xf32>
    %44 = math.tanh %43 : vector<16x128xf32>
    %45 = arith.subf %16, %44 : vector<16x128xf32>
    %46 = arith.mulf %38, %45 : vector<16x128xf32>
    %47 = arith.addf %44, %46 : vector<16x128xf32>
    %48 = arith.truncf %47 : vector<16x128xf32> to vector<16x128xbf16>
    %49 = arith.index_cast %c0_i32_15 : i32 to index
    %c0_23 = arith.constant 0 : index
    %c0_24 = arith.constant 0 : index
    %50 = vector.load %arg19[%49, %c0_23, %c0_24] : memref<8x16x128xbf16, #tpu.memory_space<vmem>>, vector<1x16x128xbf16>
    %51 = vector.shape_cast %50 : vector<1x16x128xbf16> to vector<16x128xbf16>
    %52 = vector.shape_cast %48 : vector<16x128xbf16> to vector<1x16x128xbf16>
    tpu.vector_store %arg19[%49, %c0_23, %c0_24], %52 {strides = array<i32>} : memref<8x16x128xbf16, #tpu.memory_space<vmem>>, vector<1x16x128xbf16>,
    %c1_i32 = arith.constant 1 : i32
    %53 = arith.index_cast %c1_i32 : i32 to index
    %c0_25 = arith.constant 0 : index
    %c0_26 = arith.constant 0 : index
    %54 = vector.load %arg18[%53, %c0_25, %c0_26] : memref<8x16x384xf32, #tpu.memory_space<vmem>>, vector<1x16x384xf32>
    %55 = vector.shape_cast %54 : vector<1x16x384xf32> to vector<16x384xf32>
    %56 = arith.truncf %47 : vector<16x128xf32> to vector<16x128xbf16>
    %c0_27 = arith.constant 0 : index
    %c0_28 = arith.constant 0 : index
    %57 = vector.load %arg4[%c0_27, %c0_28] : memref<128x384xbf16, #tpu.memory_space<vmem>>, vector<128x384xbf16>
    %cst_29 = arith.constant dense<0.000000e+00> : vector<16x384xf32>
    %58 = tpu.matmul %56, %57, %cst_29 {dimension_numbers = #tpu.dot_dimension_numbers<[1], [0], [0], [1], [0, 0, 1, 1], [], []>} : vector<16x128xbf16>, vector<128x384xbf16>, vector<16x384xf32> -> vector<16x384xf32>
    %59 = vector.extract_strided_slice %55 {offsets = [0, 0], sizes = [16, 128], strides = [1, 1]} : vector<16x384xf32> to vector<16x128xf32>
    %60 = vector.extract_strided_slice %58 {offsets = [0, 0], sizes = [16, 128], strides = [1, 1]} : vector<16x384xf32> to vector<16x128xf32>
    %61 = arith.addf %59, %60 : vector<16x128xf32>
    %62 = arith.negf %61 : vector<16x128xf32>
    %63 = math.exp %62 : vector<16x128xf32>
    %cst_30 = arith.constant 1.000000e+00 : f32
    %64 = vector.broadcast %cst_30 : f32 to vector<16x128xf32>
    %65 = arith.addf %64, %63 : vector<16x128xf32>
    %66 = arith.divf %64, %65 : vector<16x128xf32>
    %67 = vector.extract_strided_slice %55 {offsets = [0, 128], sizes = [16, 128], strides = [1, 1]} : vector<16x384xf32> to vector<16x128xf32>
    %68 = vector.extract_strided_slice %58 {offsets = [0, 128], sizes = [16, 128], strides = [1, 1]} : vector<16x384xf32> to vector<16x128xf32>
    %69 = arith.addf %67, %68 : vector<16x128xf32>
    %70 = arith.negf %69 : vector<16x128xf32>
    %71 = math.exp %70 : vector<16x128xf32>
    %cst_31 = arith.constant 1.000000e+00 : f32
    %72 = vector.broadcast %cst_31 : f32 to vector<16x128xf32>
    %73 = arith.addf %72, %71 : vector<16x128xf32>
    %74 = arith.divf %72, %73 : vector<16x128xf32>
    %75 = vector.extract_strided_slice %55 {offsets = [0, 256], sizes = [16, 128], strides = [1, 1]} : vector<16x384xf32> to vector<16x128xf32>
    %76 = vector.extract_strided_slice %58 {offsets = [0, 256], sizes = [16, 128], strides = [1, 1]} : vector<16x384xf32> to vector<16x128xf32>
    %77 = arith.addf %76, %14 : vector<16x128xf32>
    %78 = arith.mulf %66, %77 : vector<16x128xf32>
    %79 = arith.addf %75, %78 : vector<16x128xf32>
    %80 = math.tanh %79 : vector<16x128xf32>
    %81 = arith.subf %47, %80 : vector<16x128xf32>
    %82 = arith.mulf %74, %81 : vector<16x128xf32>
    %83 = arith.addf %80, %82 : vector<16x128xf32>
    %84 = arith.truncf %83 : vector<16x128xf32> to vector<16x128xbf16>
    %85 = arith.index_cast %c1_i32 : i32 to index
    %c0_32 = arith.constant 0 : index
    %c0_33 = arith.constant 0 : index
    %86 = vector.load %arg19[%85, %c0_32, %c0_33] : memref<8x16x128xbf16, #tpu.memory_space<vmem>>, vector<1x16x128xbf16>
    %87 = vector.shape_cast %86 : vector<1x16x128xbf16> to vector<16x128xbf16>
    %88 = vector.shape_cast %84 : vector<16x128xbf16> to vector<1x16x128xbf16>
    tpu.vector_store %arg19[%85, %c0_32, %c0_33], %88 {strides = array<i32>} : memref<8x16x128xbf16, #tpu.memory_space<vmem>>, vector<1x16x128xbf16>,
    %c2_i32 = arith.constant 2 : i32
    %89 = arith.index_cast %c2_i32 : i32 to index
    %c0_34 = arith.constant 0 : index
    %c0_35 = arith.constant 0 : index
    %90 = vector.load %arg18[%89, %c0_34, %c0_35] : memref<8x16x384xf32, #tpu.memory_space<vmem>>, vector<1x16x384xf32>
    %91 = vector.shape_cast %90 : vector<1x16x384xf32> to vector<16x384xf32>
    %92 = arith.truncf %83 : vector<16x128xf32> to vector<16x128xbf16>
    %c0_36 = arith.constant 0 : index
    %c0_37 = arith.constant 0 : index
    %93 = vector.load %arg4[%c0_36, %c0_37] : memref<128x384xbf16, #tpu.memory_space<vmem>>, vector<128x384xbf16>
    %cst_38 = arith.constant dense<0.000000e+00> : vector<16x384xf32>
    %94 = tpu.matmul %92, %93, %cst_38 {dimension_numbers = #tpu.dot_dimension_numbers<[1], [0], [0], [1], [0, 0, 1, 1], [], []>} : vector<16x128xbf16>, vector<128x384xbf16>, vector<16x384xf32> -> vector<16x384xf32>
    %95 = vector.extract_strided_slice %91 {offsets = [0, 0], sizes = [16, 128], strides = [1, 1]} : vector<16x384xf32> to vector<16x128xf32>
    %96 = vector.extract_strided_slice %94 {offsets = [0, 0], sizes = [16, 128], strides = [1, 1]} : vector<16x384xf32> to vector<16x128xf32>
    %97 = arith.addf %95, %96 : vector<16x128xf32>
    %98 = arith.negf %97 : vector<16x128xf32>
    %99 = math.exp %98 : vector<16x128xf32>
    %cst_39 = arith.constant 1.000000e+00 : f32
    %100 = vector.broadcast %cst_39 : f32 to vector<16x128xf32>
    %101 = arith.addf %100, %99 : vector<16x128xf32>
    %102 = arith.divf %100, %101 : vector<16x128xf32>
    %103 = vector.extract_strided_slice %91 {offsets = [0, 128], sizes = [16, 128], strides = [1, 1]} : vector<16x384xf32> to vector<16x128xf32>
    %104 = vector.extract_strided_slice %94 {offsets = [0, 128], sizes = [16, 128], strides = [1, 1]} : vector<16x384xf32> to vector<16x128xf32>
    %105 = arith.addf %103, %104 : vector<16x128xf32>
    %106 = arith.negf %105 : vector<16x128xf32>
    %107 = math.exp %106 : vector<16x128xf32>
    %cst_40 = arith.constant 1.000000e+00 : f32
    %108 = vector.broadcast %cst_40 : f32 to vector<16x128xf32>
    %109 = arith.addf %108, %107 : vector<16x128xf32>
    %110 = arith.divf %108, %109 : vector<16x128xf32>
    %111 = vector.extract_strided_slice %91 {offsets = [0, 256], sizes = [16, 128], strides = [1, 1]} : vector<16x384xf32> to vector<16x128xf32>
    %112 = vector.extract_strided_slice %94 {offsets = [0, 256], sizes = [16, 128], strides = [1, 1]} : vector<16x384xf32> to vector<16x128xf32>
    %113 = arith.addf %112, %14 : vector<16x128xf32>
    %114 = arith.mulf %102, %113 : vector<16x128xf32>
    %115 = arith.addf %111, %114 : vector<16x128xf32>
    %116 = math.tanh %115 : vector<16x128xf32>
    %117 = arith.subf %83, %116 : vector<16x128xf32>
    %118 = arith.mulf %110, %117 : vector<16x128xf32>
    %119 = arith.addf %116, %118 : vector<16x128xf32>
    %120 = arith.truncf %119 : vector<16x128xf32> to vector<16x128xbf16>
    %121 = arith.index_cast %c2_i32 : i32 to index
    %c0_41 = arith.constant 0 : index
    %c0_42 = arith.constant 0 : index
    %122 = vector.load %arg19[%121, %c0_41, %c0_42] : memref<8x16x128xbf16, #tpu.memory_space<vmem>>, vector<1x16x128xbf16>
    %123 = vector.shape_cast %122 : vector<1x16x128xbf16> to vector<16x128xbf16>
    %124 = vector.shape_cast %120 : vector<16x128xbf16> to vector<1x16x128xbf16>
    tpu.vector_store %arg19[%121, %c0_41, %c0_42], %124 {strides = array<i32>} : memref<8x16x128xbf16, #tpu.memory_space<vmem>>, vector<1x16x128xbf16>,
    %c3_i32 = arith.constant 3 : i32
    %125 = arith.index_cast %c3_i32 : i32 to index
    %c0_43 = arith.constant 0 : index
    %c0_44 = arith.constant 0 : index
    %126 = vector.load %arg18[%125, %c0_43, %c0_44] : memref<8x16x384xf32, #tpu.memory_space<vmem>>, vector<1x16x384xf32>
    %127 = vector.shape_cast %126 : vector<1x16x384xf32> to vector<16x384xf32>
    %128 = arith.truncf %119 : vector<16x128xf32> to vector<16x128xbf16>
    %c0_45 = arith.constant 0 : index
    %c0_46 = arith.constant 0 : index
    %129 = vector.load %arg4[%c0_45, %c0_46] : memref<128x384xbf16, #tpu.memory_space<vmem>>, vector<128x384xbf16>
    %cst_47 = arith.constant dense<0.000000e+00> : vector<16x384xf32>
    %130 = tpu.matmul %128, %129, %cst_47 {dimension_numbers = #tpu.dot_dimension_numbers<[1], [0], [0], [1], [0, 0, 1, 1], [], []>} : vector<16x128xbf16>, vector<128x384xbf16>, vector<16x384xf32> -> vector<16x384xf32>
    %131 = vector.extract_strided_slice %127 {offsets = [0, 0], sizes = [16, 128], strides = [1, 1]} : vector<16x384xf32> to vector<16x128xf32>
    %132 = vector.extract_strided_slice %130 {offsets = [0, 0], sizes = [16, 128], strides = [1, 1]} : vector<16x384xf32> to vector<16x128xf32>
    %133 = arith.addf %131, %132 : vector<16x128xf32>
    %134 = arith.negf %133 : vector<16x128xf32>
    %135 = math.exp %134 : vector<16x128xf32>
    %cst_48 = arith.constant 1.000000e+00 : f32
    %136 = vector.broadcast %cst_48 : f32 to vector<16x128xf32>
    %137 = arith.addf %136, %135 : vector<16x128xf32>
    %138 = arith.divf %136, %137 : vector<16x128xf32>
    %139 = vector.extract_strided_slice %127 {offsets = [0, 128], sizes = [16, 128], strides = [1, 1]} : vector<16x384xf32> to vector<16x128xf32>
    %140 = vector.extract_strided_slice %130 {offsets = [0, 128], sizes = [16, 128], strides = [1, 1]} : vector<16x384xf32> to vector<16x128xf32>
    %141 = arith.addf %139, %140 : vector<16x128xf32>
    %142 = arith.negf %141 : vector<16x128xf32>
    %143 = math.exp %142 : vector<16x128xf32>
    %cst_49 = arith.constant 1.000000e+00 : f32
    %144 = vector.broadcast %cst_49 : f32 to vector<16x128xf32>
    %145 = arith.addf %144, %143 : vector<16x128xf32>
    %146 = arith.divf %144, %145 : vector<16x128xf32>
    %147 = vector.extract_strided_slice %127 {offsets = [0, 256], sizes = [16, 128], strides = [1, 1]} : vector<16x384xf32> to vector<16x128xf32>
    %148 = vector.extract_strided_slice %130 {offsets = [0, 256], sizes = [16, 128], strides = [1, 1]} : vector<16x384xf32> to vector<16x128xf32>
    %149 = arith.addf %148, %14 : vector<16x128xf32>
    %150 = arith.mulf %138, %149 : vector<16x128xf32>
    %151 = arith.addf %147, %150 : vector<16x128xf32>
    %152 = math.tanh %151 : vector<16x128xf32>
    %153 = arith.subf %119, %152 : vector<16x128xf32>
    %154 = arith.mulf %146, %153 : vector<16x128xf32>
    %155 = arith.addf %152, %154 : vector<16x128xf32>
    %156 = arith.truncf %155 : vector<16x128xf32> to vector<16x128xbf16>
    %157 = arith.index_cast %c3_i32 : i32 to index
    %c0_50 = arith.constant 0 : index
    %c0_51 = arith.constant 0 : index
    %158 = vector.load %arg19[%157, %c0_50, %c0_51] : memref<8x16x128xbf16, #tpu.memory_space<vmem>>, vector<1x16x128xbf16>
    %159 = vector.shape_cast %158 : vector<1x16x128xbf16> to vector<16x128xbf16>
    %160 = vector.shape_cast %156 : vector<16x128xbf16> to vector<1x16x128xbf16>
    tpu.vector_store %arg19[%157, %c0_50, %c0_51], %160 {strides = array<i32>} : memref<8x16x128xbf16, #tpu.memory_space<vmem>>, vector<1x16x128xbf16>,
    %c4_i32 = arith.constant 4 : i32
    %161 = arith.index_cast %c4_i32 : i32 to index
    %c0_52 = arith.constant 0 : index
    %c0_53 = arith.constant 0 : index
    %162 = vector.load %arg18[%161, %c0_52, %c0_53] : memref<8x16x384xf32, #tpu.memory_space<vmem>>, vector<1x16x384xf32>
    %163 = vector.shape_cast %162 : vector<1x16x384xf32> to vector<16x384xf32>
    %164 = arith.truncf %155 : vector<16x128xf32> to vector<16x128xbf16>
    %c0_54 = arith.constant 0 : index
    %c0_55 = arith.constant 0 : index
    %165 = vector.load %arg4[%c0_54, %c0_55] : memref<128x384xbf16, #tpu.memory_space<vmem>>, vector<128x384xbf16>
    %cst_56 = arith.constant dense<0.000000e+00> : vector<16x384xf32>
    %166 = tpu.matmul %164, %165, %cst_56 {dimension_numbers = #tpu.dot_dimension_numbers<[1], [0], [0], [1], [0, 0, 1, 1], [], []>} : vector<16x128xbf16>, vector<128x384xbf16>, vector<16x384xf32> -> vector<16x384xf32>
    %167 = vector.extract_strided_slice %163 {offsets = [0, 0], sizes = [16, 128], strides = [1, 1]} : vector<16x384xf32> to vector<16x128xf32>
    %168 = vector.extract_strided_slice %166 {offsets = [0, 0], sizes = [16, 128], strides = [1, 1]} : vector<16x384xf32> to vector<16x128xf32>
    %169 = arith.addf %167, %168 : vector<16x128xf32>
    %170 = arith.negf %169 : vector<16x128xf32>
    %171 = math.exp %170 : vector<16x128xf32>
    %cst_57 = arith.constant 1.000000e+00 : f32
    %172 = vector.broadcast %cst_57 : f32 to vector<16x128xf32>
    %173 = arith.addf %172, %171 : vector<16x128xf32>
    %174 = arith.divf %172, %173 : vector<16x128xf32>
    %175 = vector.extract_strided_slice %163 {offsets = [0, 128], sizes = [16, 128], strides = [1, 1]} : vector<16x384xf32> to vector<16x128xf32>
    %176 = vector.extract_strided_slice %166 {offsets = [0, 128], sizes = [16, 128], strides = [1, 1]} : vector<16x384xf32> to vector<16x128xf32>
    %177 = arith.addf %175, %176 : vector<16x128xf32>
    %178 = arith.negf %177 : vector<16x128xf32>
    %179 = math.exp %178 : vector<16x128xf32>
    %cst_58 = arith.constant 1.000000e+00 : f32
    %180 = vector.broadcast %cst_58 : f32 to vector<16x128xf32>
    %181 = arith.addf %180, %179 : vector<16x128xf32>
    %182 = arith.divf %180, %181 : vector<16x128xf32>
    %183 = vector.extract_strided_slice %163 {offsets = [0, 256], sizes = [16, 128], strides = [1, 1]} : vector<16x384xf32> to vector<16x128xf32>
    %184 = vector.extract_strided_slice %166 {offsets = [0, 256], sizes = [16, 128], strides = [1, 1]} : vector<16x384xf32> to vector<16x128xf32>
    %185 = arith.addf %184, %14 : vector<16x128xf32>
    %186 = arith.mulf %174, %185 : vector<16x128xf32>
    %187 = arith.addf %183, %186 : vector<16x128xf32>
    %188 = math.tanh %187 : vector<16x128xf32>
    %189 = arith.subf %155, %188 : vector<16x128xf32>
    %190 = arith.mulf %182, %189 : vector<16x128xf32>
    %191 = arith.addf %188, %190 : vector<16x128xf32>
    %192 = arith.truncf %191 : vector<16x128xf32> to vector<16x128xbf16>
    %193 = arith.index_cast %c4_i32 : i32 to index
    %c0_59 = arith.constant 0 : index
    %c0_60 = arith.constant 0 : index
    %194 = vector.load %arg19[%193, %c0_59, %c0_60] : memref<8x16x128xbf16, #tpu.memory_space<vmem>>, vector<1x16x128xbf16>
    %195 = vector.shape_cast %194 : vector<1x16x128xbf16> to vector<16x128xbf16>
    %196 = vector.shape_cast %192 : vector<16x128xbf16> to vector<1x16x128xbf16>
    tpu.vector_store %arg19[%193, %c0_59, %c0_60], %196 {strides = array<i32>} : memref<8x16x128xbf16, #tpu.memory_space<vmem>>, vector<1x16x128xbf16>,
    %c5_i32 = arith.constant 5 : i32
    %197 = arith.index_cast %c5_i32 : i32 to index
    %c0_61 = arith.constant 0 : index
    %c0_62 = arith.constant 0 : index
    %198 = vector.load %arg18[%197, %c0_61, %c0_62] : memref<8x16x384xf32, #tpu.memory_space<vmem>>, vector<1x16x384xf32>
    %199 = vector.shape_cast %198 : vector<1x16x384xf32> to vector<16x384xf32>
    %200 = arith.truncf %191 : vector<16x128xf32> to vector<16x128xbf16>
    %c0_63 = arith.constant 0 : index
    %c0_64 = arith.constant 0 : index
    %201 = vector.load %arg4[%c0_63, %c0_64] : memref<128x384xbf16, #tpu.memory_space<vmem>>, vector<128x384xbf16>
    %cst_65 = arith.constant dense<0.000000e+00> : vector<16x384xf32>
    %202 = tpu.matmul %200, %201, %cst_65 {dimension_numbers = #tpu.dot_dimension_numbers<[1], [0], [0], [1], [0, 0, 1, 1], [], []>} : vector<16x128xbf16>, vector<128x384xbf16>, vector<16x384xf32> -> vector<16x384xf32>
    %203 = vector.extract_strided_slice %199 {offsets = [0, 0], sizes = [16, 128], strides = [1, 1]} : vector<16x384xf32> to vector<16x128xf32>
    %204 = vector.extract_strided_slice %202 {offsets = [0, 0], sizes = [16, 128], strides = [1, 1]} : vector<16x384xf32> to vector<16x128xf32>
    %205 = arith.addf %203, %204 : vector<16x128xf32>
    %206 = arith.negf %205 : vector<16x128xf32>
    %207 = math.exp %206 : vector<16x128xf32>
    %cst_66 = arith.constant 1.000000e+00 : f32
    %208 = vector.broadcast %cst_66 : f32 to vector<16x128xf32>
    %209 = arith.addf %208, %207 : vector<16x128xf32>
    %210 = arith.divf %208, %209 : vector<16x128xf32>
    %211 = vector.extract_strided_slice %199 {offsets = [0, 128], sizes = [16, 128], strides = [1, 1]} : vector<16x384xf32> to vector<16x128xf32>
    %212 = vector.extract_strided_slice %202 {offsets = [0, 128], sizes = [16, 128], strides = [1, 1]} : vector<16x384xf32> to vector<16x128xf32>
    %213 = arith.addf %211, %212 : vector<16x128xf32>
    %214 = arith.negf %213 : vector<16x128xf32>
    %215 = math.exp %214 : vector<16x128xf32>
    %cst_67 = arith.constant 1.000000e+00 : f32
    %216 = vector.broadcast %cst_67 : f32 to vector<16x128xf32>
    %217 = arith.addf %216, %215 : vector<16x128xf32>
    %218 = arith.divf %216, %217 : vector<16x128xf32>
    %219 = vector.extract_strided_slice %199 {offsets = [0, 256], sizes = [16, 128], strides = [1, 1]} : vector<16x384xf32> to vector<16x128xf32>
    %220 = vector.extract_strided_slice %202 {offsets = [0, 256], sizes = [16, 128], strides = [1, 1]} : vector<16x384xf32> to vector<16x128xf32>
    %221 = arith.addf %220, %14 : vector<16x128xf32>
    %222 = arith.mulf %210, %221 : vector<16x128xf32>
    %223 = arith.addf %219, %222 : vector<16x128xf32>
    %224 = math.tanh %223 : vector<16x128xf32>
    %225 = arith.subf %191, %224 : vector<16x128xf32>
    %226 = arith.mulf %218, %225 : vector<16x128xf32>
    %227 = arith.addf %224, %226 : vector<16x128xf32>
    %228 = arith.truncf %227 : vector<16x128xf32> to vector<16x128xbf16>
    %229 = arith.index_cast %c5_i32 : i32 to index
    %c0_68 = arith.constant 0 : index
    %c0_69 = arith.constant 0 : index
    %230 = vector.load %arg19[%229, %c0_68, %c0_69] : memref<8x16x128xbf16, #tpu.memory_space<vmem>>, vector<1x16x128xbf16>
    %231 = vector.shape_cast %230 : vector<1x16x128xbf16> to vector<16x128xbf16>
    %232 = vector.shape_cast %228 : vector<16x128xbf16> to vector<1x16x128xbf16>
    tpu.vector_store %arg19[%229, %c0_68, %c0_69], %232 {strides = array<i32>} : memref<8x16x128xbf16, #tpu.memory_space<vmem>>, vector<1x16x128xbf16>,
    %c6_i32 = arith.constant 6 : i32
    %233 = arith.index_cast %c6_i32 : i32 to index
    %c0_70 = arith.constant 0 : index
    %c0_71 = arith.constant 0 : index
    %234 = vector.load %arg18[%233, %c0_70, %c0_71] : memref<8x16x384xf32, #tpu.memory_space<vmem>>, vector<1x16x384xf32>
    %235 = vector.shape_cast %234 : vector<1x16x384xf32> to vector<16x384xf32>
    %236 = arith.truncf %227 : vector<16x128xf32> to vector<16x128xbf16>
    %c0_72 = arith.constant 0 : index
    %c0_73 = arith.constant 0 : index
    %237 = vector.load %arg4[%c0_72, %c0_73] : memref<128x384xbf16, #tpu.memory_space<vmem>>, vector<128x384xbf16>
    %cst_74 = arith.constant dense<0.000000e+00> : vector<16x384xf32>
    %238 = tpu.matmul %236, %237, %cst_74 {dimension_numbers = #tpu.dot_dimension_numbers<[1], [0], [0], [1], [0, 0, 1, 1], [], []>} : vector<16x128xbf16>, vector<128x384xbf16>, vector<16x384xf32> -> vector<16x384xf32>
    %239 = vector.extract_strided_slice %235 {offsets = [0, 0], sizes = [16, 128], strides = [1, 1]} : vector<16x384xf32> to vector<16x128xf32>
    %240 = vector.extract_strided_slice %238 {offsets = [0, 0], sizes = [16, 128], strides = [1, 1]} : vector<16x384xf32> to vector<16x128xf32>
    %241 = arith.addf %239, %240 : vector<16x128xf32>
    %242 = arith.negf %241 : vector<16x128xf32>
    %243 = math.exp %242 : vector<16x128xf32>
    %cst_75 = arith.constant 1.000000e+00 : f32
    %244 = vector.broadcast %cst_75 : f32 to vector<16x128xf32>
    %245 = arith.addf %244, %243 : vector<16x128xf32>
    %246 = arith.divf %244, %245 : vector<16x128xf32>
    %247 = vector.extract_strided_slice %235 {offsets = [0, 128], sizes = [16, 128], strides = [1, 1]} : vector<16x384xf32> to vector<16x128xf32>
    %248 = vector.extract_strided_slice %238 {offsets = [0, 128], sizes = [16, 128], strides = [1, 1]} : vector<16x384xf32> to vector<16x128xf32>
    %249 = arith.addf %247, %248 : vector<16x128xf32>
    %250 = arith.negf %249 : vector<16x128xf32>
    %251 = math.exp %250 : vector<16x128xf32>
    %cst_76 = arith.constant 1.000000e+00 : f32
    %252 = vector.broadcast %cst_76 : f32 to vector<16x128xf32>
    %253 = arith.addf %252, %251 : vector<16x128xf32>
    %254 = arith.divf %252, %253 : vector<16x128xf32>
    %255 = vector.extract_strided_slice %235 {offsets = [0, 256], sizes = [16, 128], strides = [1, 1]} : vector<16x384xf32> to vector<16x128xf32>
    %256 = vector.extract_strided_slice %238 {offsets = [0, 256], sizes = [16, 128], strides = [1, 1]} : vector<16x384xf32> to vector<16x128xf32>
    %257 = arith.addf %256, %14 : vector<16x128xf32>
    %258 = arith.mulf %246, %257 : vector<16x128xf32>
    %259 = arith.addf %255, %258 : vector<16x128xf32>
    %260 = math.tanh %259 : vector<16x128xf32>
    %261 = arith.subf %227, %260 : vector<16x128xf32>
    %262 = arith.mulf %254, %261 : vector<16x128xf32>
    %263 = arith.addf %260, %262 : vector<16x128xf32>
    %264 = arith.truncf %263 : vector<16x128xf32> to vector<16x128xbf16>
    %265 = arith.index_cast %c6_i32 : i32 to index
    %c0_77 = arith.constant 0 : index
    %c0_78 = arith.constant 0 : index
    %266 = vector.load %arg19[%265, %c0_77, %c0_78] : memref<8x16x128xbf16, #tpu.memory_space<vmem>>, vector<1x16x128xbf16>
    %267 = vector.shape_cast %266 : vector<1x16x128xbf16> to vector<16x128xbf16>
    %268 = vector.shape_cast %264 : vector<16x128xbf16> to vector<1x16x128xbf16>
    tpu.vector_store %arg19[%265, %c0_77, %c0_78], %268 {strides = array<i32>} : memref<8x16x128xbf16, #tpu.memory_space<vmem>>, vector<1x16x128xbf16>,
    %c7_i32 = arith.constant 7 : i32
    %269 = arith.index_cast %c7_i32 : i32 to index
    %c0_79 = arith.constant 0 : index
    %c0_80 = arith.constant 0 : index
    %270 = vector.load %arg18[%269, %c0_79, %c0_80] : memref<8x16x384xf32, #tpu.memory_space<vmem>>, vector<1x16x384xf32>
    %271 = vector.shape_cast %270 : vector<1x16x384xf32> to vector<16x384xf32>
    %272 = arith.truncf %263 : vector<16x128xf32> to vector<16x128xbf16>
    %c0_81 = arith.constant 0 : index
    %c0_82 = arith.constant 0 : index
    %273 = vector.load %arg4[%c0_81, %c0_82] : memref<128x384xbf16, #tpu.memory_space<vmem>>, vector<128x384xbf16>
    %cst_83 = arith.constant dense<0.000000e+00> : vector<16x384xf32>
    %274 = tpu.matmul %272, %273, %cst_83 {dimension_numbers = #tpu.dot_dimension_numbers<[1], [0], [0], [1], [0, 0, 1, 1], [], []>} : vector<16x128xbf16>, vector<128x384xbf16>, vector<16x384xf32> -> vector<16x384xf32>
    %275 = vector.extract_strided_slice %271 {offsets = [0, 0], sizes = [16, 128], strides = [1, 1]} : vector<16x384xf32> to vector<16x128xf32>
    %276 = vector.extract_strided_slice %274 {offsets = [0, 0], sizes = [16, 128], strides = [1, 1]} : vector<16x384xf32> to vector<16x128xf32>
    %277 = arith.addf %275, %276 : vector<16x128xf32>
    %278 = arith.negf %277 : vector<16x128xf32>
    %279 = math.exp %278 : vector<16x128xf32>
    %cst_84 = arith.constant 1.000000e+00 : f32
    %280 = vector.broadcast %cst_84 : f32 to vector<16x128xf32>
    %281 = arith.addf %280, %279 : vector<16x128xf32>
    %282 = arith.divf %280, %281 : vector<16x128xf32>
    %283 = vector.extract_strided_slice %271 {offsets = [0, 128], sizes = [16, 128], strides = [1, 1]} : vector<16x384xf32> to vector<16x128xf32>
    %284 = vector.extract_strided_slice %274 {offsets = [0, 128], sizes = [16, 128], strides = [1, 1]} : vector<16x384xf32> to vector<16x128xf32>
    %285 = arith.addf %283, %284 : vector<16x128xf32>
    %286 = arith.negf %285 : vector<16x128xf32>
    %287 = math.exp %286 : vector<16x128xf32>
    %cst_85 = arith.constant 1.000000e+00 : f32
    %288 = vector.broadcast %cst_85 : f32 to vector<16x128xf32>
    %289 = arith.addf %288, %287 : vector<16x128xf32>
    %290 = arith.divf %288, %289 : vector<16x128xf32>
    %291 = vector.extract_strided_slice %271 {offsets = [0, 256], sizes = [16, 128], strides = [1, 1]} : vector<16x384xf32> to vector<16x128xf32>
    %292 = vector.extract_strided_slice %274 {offsets = [0, 256], sizes = [16, 128], strides = [1, 1]} : vector<16x384xf32> to vector<16x128xf32>
    %293 = arith.addf %292, %14 : vector<16x128xf32>
    %294 = arith.mulf %282, %293 : vector<16x128xf32>
    %295 = arith.addf %291, %294 : vector<16x128xf32>
    %296 = math.tanh %295 : vector<16x128xf32>
    %297 = arith.subf %263, %296 : vector<16x128xf32>
    %298 = arith.mulf %290, %297 : vector<16x128xf32>
    %299 = arith.addf %296, %298 : vector<16x128xf32>
    %300 = arith.truncf %299 : vector<16x128xf32> to vector<16x128xbf16>
    %301 = arith.index_cast %c7_i32 : i32 to index
    %c0_86 = arith.constant 0 : index
    %c0_87 = arith.constant 0 : index
    %302 = vector.load %arg19[%301, %c0_86, %c0_87] : memref<8x16x128xbf16, #tpu.memory_space<vmem>>, vector<1x16x128xbf16>
    %303 = vector.shape_cast %302 : vector<1x16x128xbf16> to vector<16x128xbf16>
    %304 = vector.shape_cast %300 : vector<16x128xbf16> to vector<1x16x128xbf16>
    tpu.vector_store %arg19[%301, %c0_86, %c0_87], %304 {strides = array<i32>} : memref<8x16x128xbf16, #tpu.memory_space<vmem>>, vector<1x16x128xbf16>,
    %c8_i32 = arith.constant 8 : i32
    %c0_88 = arith.constant 0 : index
    %c0_89 = arith.constant 0 : index
    %c0_90 = arith.constant 0 : index
    %305 = vector.load %arg20[%c0_88, %c0_89, %c0_90] : memref<2x16x128xf32, #tpu.memory_space<vmem>>, vector<1x16x128xf32>
    %306 = vector.shape_cast %305 : vector<1x16x128xf32> to vector<16x128xf32>
    %307 = vector.shape_cast %299 : vector<16x128xf32> to vector<1x16x128xf32>
    tpu.vector_store %arg20[%c0_88, %c0_89, %c0_90], %307 {strides = array<i32>} : memref<2x16x128xf32, #tpu.memory_space<vmem>>, vector<1x16x128xf32>,
    %c0_91 = arith.constant 0 : index
    %c0_92 = arith.constant 0 : index
    %c0_93 = arith.constant 0 : index
    %308 = vector.load %arg19[%c0_91, %c0_92, %c0_93] : memref<8x16x128xbf16, #tpu.memory_space<vmem>>, vector<8x16x128xbf16>
    %309 = vector.shape_cast %308 : vector<8x16x128xbf16> to vector<128x128xbf16>
    %c0_94 = arith.constant 0 : index
    %c0_95 = arith.constant 0 : index
    %310 = vector.load %arg7[%c0_94, %c0_95] : memref<128x384xbf16, #tpu.memory_space<vmem>>, vector<128x384xbf16>
    %cst_96 = arith.constant dense<0.000000e+00> : vector<128x384xf32>
    %311 = tpu.matmul %309, %310, %cst_96 {dimension_numbers = #tpu.dot_dimension_numbers<[1], [0], [0], [1], [0, 0, 1, 1], [], []>} : vector<128x128xbf16>, vector<128x384xbf16>, vector<128x384xf32> -> vector<128x384xf32>
    %c0_97 = arith.constant 0 : index
    %c0_98 = arith.constant 0 : index
    %312 = vector.load %arg9[%c0_97, %c0_98] : memref<1x384xf32, #tpu.memory_space<vmem>>, vector<1x384xf32>
    %313 = vector.broadcast %312 : vector<1x384xf32> to vector<128x384xf32>
    %314 = arith.addf %311, %313 : vector<128x384xf32>
    %315 = vector.shape_cast %314 : vector<128x384xf32> to vector<8x16x384xf32>
    %c0_99 = arith.constant 0 : index
    %c0_100 = arith.constant 0 : index
    %c0_101 = arith.constant 0 : index
    %316 = vector.load %arg18[%c0_99, %c0_100, %c0_101] : memref<8x16x384xf32, #tpu.memory_space<vmem>>, vector<8x16x384xf32>
    tpu.vector_store %arg18[%c0_99, %c0_100, %c0_101], %315 {strides = array<i32>} : memref<8x16x384xf32, #tpu.memory_space<vmem>>, vector<8x16x384xf32>,
    %c0_102 = arith.constant 0 : index
    %c0_103 = arith.constant 0 : index
    %317 = vector.load %arg10[%c0_102, %c0_103] : memref<1x128xf32, #tpu.memory_space<vmem>>, vector<1x128xf32>
    %318 = vector.shape_cast %317 : vector<1x128xf32> to vector<1x128xf32>
    %319 = vector.broadcast %318 : vector<1x128xf32> to vector<16x128xf32>
    %c1 = arith.constant 1 : index
    %c0_104 = arith.constant 0 : index
    %c0_105 = arith.constant 0 : index
    %320 = vector.load %arg20[%c1, %c0_104, %c0_105] : memref<2x16x128xf32, #tpu.memory_space<vmem>>, vector<1x16x128xf32>
    %321 = vector.shape_cast %320 : vector<1x16x128xf32> to vector<16x128xf32>
    %c0_i32_106 = arith.constant 0 : i32
    %322 = arith.index_cast %c0_i32_106 : i32 to index
    %c0_107 = arith.constant 0 : index
    %c0_108 = arith.constant 0 : index
    %323 = vector.load %arg18[%322, %c0_107, %c0_108] : memref<8x16x384xf32, #tpu.memory_space<vmem>>, vector<1x16x384xf32>
    %324 = vector.shape_cast %323 : vector<1x16x384xf32> to vector<16x384xf32>
    %325 = arith.truncf %321 : vector<16x128xf32> to vector<16x128xbf16>
    %c0_109 = arith.constant 0 : index
    %c0_110 = arith.constant 0 : index
    %326 = vector.load %arg8[%c0_109, %c0_110] : memref<128x384xbf16, #tpu.memory_space<vmem>>, vector<128x384xbf16>
    %cst_111 = arith.constant dense<0.000000e+00> : vector<16x384xf32>
    %327 = tpu.matmul %325, %326, %cst_111 {dimension_numbers = #tpu.dot_dimension_numbers<[1], [0], [0], [1], [0, 0, 1, 1], [], []>} : vector<16x128xbf16>, vector<128x384xbf16>, vector<16x384xf32> -> vector<16x384xf32>
    %328 = vector.extract_strided_slice %324 {offsets = [0, 0], sizes = [16, 128], strides = [1, 1]} : vector<16x384xf32> to vector<16x128xf32>
    %329 = vector.extract_strided_slice %327 {offsets = [0, 0], sizes = [16, 128], strides = [1, 1]} : vector<16x384xf32> to vector<16x128xf32>
    %330 = arith.addf %328, %329 : vector<16x128xf32>
    %331 = arith.negf %330 : vector<16x128xf32>
    %332 = math.exp %331 : vector<16x128xf32>
    %cst_112 = arith.constant 1.000000e+00 : f32
    %333 = vector.broadcast %cst_112 : f32 to vector<16x128xf32>
    %334 = arith.addf %333, %332 : vector<16x128xf32>
    %335 = arith.divf %333, %334 : vector<16x128xf32>
    %336 = vector.extract_strided_slice %324 {offsets = [0, 128], sizes = [16, 128], strides = [1, 1]} : vector<16x384xf32> to vector<16x128xf32>
    %337 = vector.extract_strided_slice %327 {offsets = [0, 128], sizes = [16, 128], strides = [1, 1]} : vector<16x384xf32> to vector<16x128xf32>
    %338 = arith.addf %336, %337 : vector<16x128xf32>
    %339 = arith.negf %338 : vector<16x128xf32>
    %340 = math.exp %339 : vector<16x128xf32>
    %cst_113 = arith.constant 1.000000e+00 : f32
    %341 = vector.broadcast %cst_113 : f32 to vector<16x128xf32>
    %342 = arith.addf %341, %340 : vector<16x128xf32>
    %343 = arith.divf %341, %342 : vector<16x128xf32>
    %344 = vector.extract_strided_slice %324 {offsets = [0, 256], sizes = [16, 128], strides = [1, 1]} : vector<16x384xf32> to vector<16x128xf32>
    %345 = vector.extract_strided_slice %327 {offsets = [0, 256], sizes = [16, 128], strides = [1, 1]} : vector<16x384xf32> to vector<16x128xf32>
    %346 = arith.addf %345, %319 : vector<16x128xf32>
    %347 = arith.mulf %335, %346 : vector<16x128xf32>
    %348 = arith.addf %344, %347 : vector<16x128xf32>
    %349 = math.tanh %348 : vector<16x128xf32>
    %350 = arith.subf %321, %349 : vector<16x128xf32>
    %351 = arith.mulf %343, %350 : vector<16x128xf32>
    %352 = arith.addf %349, %351 : vector<16x128xf32>
    %c1_i32_114 = arith.constant 1 : i32
    %353 = arith.index_cast %c1_i32_114 : i32 to index
    %c0_115 = arith.constant 0 : index
    %c0_116 = arith.constant 0 : index
    %354 = vector.load %arg18[%353, %c0_115, %c0_116] : memref<8x16x384xf32, #tpu.memory_space<vmem>>, vector<1x16x384xf32>
    %355 = vector.shape_cast %354 : vector<1x16x384xf32> to vector<16x384xf32>
    %356 = arith.truncf %352 : vector<16x128xf32> to vector<16x128xbf16>
    %c0_117 = arith.constant 0 : index
    %c0_118 = arith.constant 0 : index
    %357 = vector.load %arg8[%c0_117, %c0_118] : memref<128x384xbf16, #tpu.memory_space<vmem>>, vector<128x384xbf16>
    %cst_119 = arith.constant dense<0.000000e+00> : vector<16x384xf32>
    %358 = tpu.matmul %356, %357, %cst_119 {dimension_numbers = #tpu.dot_dimension_numbers<[1], [0], [0], [1], [0, 0, 1, 1], [], []>} : vector<16x128xbf16>, vector<128x384xbf16>, vector<16x384xf32> -> vector<16x384xf32>
    %359 = vector.extract_strided_slice %355 {offsets = [0, 0], sizes = [16, 128], strides = [1, 1]} : vector<16x384xf32> to vector<16x128xf32>
    %360 = vector.extract_strided_slice %358 {offsets = [0, 0], sizes = [16, 128], strides = [1, 1]} : vector<16x384xf32> to vector<16x128xf32>
    %361 = arith.addf %359, %360 : vector<16x128xf32>
    %362 = arith.negf %361 : vector<16x128xf32>
    %363 = math.exp %362 : vector<16x128xf32>
    %cst_120 = arith.constant 1.000000e+00 : f32
    %364 = vector.broadcast %cst_120 : f32 to vector<16x128xf32>
    %365 = arith.addf %364, %363 : vector<16x128xf32>
    %366 = arith.divf %364, %365 : vector<16x128xf32>
    %367 = vector.extract_strided_slice %355 {offsets = [0, 128], sizes = [16, 128], strides = [1, 1]} : vector<16x384xf32> to vector<16x128xf32>
    %368 = vector.extract_strided_slice %358 {offsets = [0, 128], sizes = [16, 128], strides = [1, 1]} : vector<16x384xf32> to vector<16x128xf32>
    %369 = arith.addf %367, %368 : vector<16x128xf32>
    %370 = arith.negf %369 : vector<16x128xf32>
    %371 = math.exp %370 : vector<16x128xf32>
    %cst_121 = arith.constant 1.000000e+00 : f32
    %372 = vector.broadcast %cst_121 : f32 to vector<16x128xf32>
    %373 = arith.addf %372, %371 : vector<16x128xf32>
    %374 = arith.divf %372, %373 : vector<16x128xf32>
    %375 = vector.extract_strided_slice %355 {offsets = [0, 256], sizes = [16, 128], strides = [1, 1]} : vector<16x384xf32> to vector<16x128xf32>
    %376 = vector.extract_strided_slice %358 {offsets = [0, 256], sizes = [16, 128], strides = [1, 1]} : vector<16x384xf32> to vector<16x128xf32>
    %377 = arith.addf %376, %319 : vector<16x128xf32>
    %378 = arith.mulf %366, %377 : vector<16x128xf32>
    %379 = arith.addf %375, %378 : vector<16x128xf32>
    %380 = math.tanh %379 : vector<16x128xf32>
    %381 = arith.subf %352, %380 : vector<16x128xf32>
    %382 = arith.mulf %374, %381 : vector<16x128xf32>
    %383 = arith.addf %380, %382 : vector<16x128xf32>
    %c2_i32_122 = arith.constant 2 : i32
    %384 = arith.index_cast %c2_i32_122 : i32 to index
    %c0_123 = arith.constant 0 : index
    %c0_124 = arith.constant 0 : index
    %385 = vector.load %arg18[%384, %c0_123, %c0_124] : memref<8x16x384xf32, #tpu.memory_space<vmem>>, vector<1x16x384xf32>
    %386 = vector.shape_cast %385 : vector<1x16x384xf32> to vector<16x384xf32>
    %387 = arith.truncf %383 : vector<16x128xf32> to vector<16x128xbf16>
    %c0_125 = arith.constant 0 : index
    %c0_126 = arith.constant 0 : index
    %388 = vector.load %arg8[%c0_125, %c0_126] : memref<128x384xbf16, #tpu.memory_space<vmem>>, vector<128x384xbf16>
    %cst_127 = arith.constant dense<0.000000e+00> : vector<16x384xf32>
    %389 = tpu.matmul %387, %388, %cst_127 {dimension_numbers = #tpu.dot_dimension_numbers<[1], [0], [0], [1], [0, 0, 1, 1], [], []>} : vector<16x128xbf16>, vector<128x384xbf16>, vector<16x384xf32> -> vector<16x384xf32>
    %390 = vector.extract_strided_slice %386 {offsets = [0, 0], sizes = [16, 128], strides = [1, 1]} : vector<16x384xf32> to vector<16x128xf32>
    %391 = vector.extract_strided_slice %389 {offsets = [0, 0], sizes = [16, 128], strides = [1, 1]} : vector<16x384xf32> to vector<16x128xf32>
    %392 = arith.addf %390, %391 : vector<16x128xf32>
    %393 = arith.negf %392 : vector<16x128xf32>
    %394 = math.exp %393 : vector<16x128xf32>
    %cst_128 = arith.constant 1.000000e+00 : f32
    %395 = vector.broadcast %cst_128 : f32 to vector<16x128xf32>
    %396 = arith.addf %395, %394 : vector<16x128xf32>
    %397 = arith.divf %395, %396 : vector<16x128xf32>
    %398 = vector.extract_strided_slice %386 {offsets = [0, 128], sizes = [16, 128], strides = [1, 1]} : vector<16x384xf32> to vector<16x128xf32>
    %399 = vector.extract_strided_slice %389 {offsets = [0, 128], sizes = [16, 128], strides = [1, 1]} : vector<16x384xf32> to vector<16x128xf32>
    %400 = arith.addf %398, %399 : vector<16x128xf32>
    %401 = arith.negf %400 : vector<16x128xf32>
    %402 = math.exp %401 : vector<16x128xf32>
    %cst_129 = arith.constant 1.000000e+00 : f32
    %403 = vector.broadcast %cst_129 : f32 to vector<16x128xf32>
    %404 = arith.addf %403, %402 : vector<16x128xf32>
    %405 = arith.divf %403, %404 : vector<16x128xf32>
    %406 = vector.extract_strided_slice %386 {offsets = [0, 256], sizes = [16, 128], strides = [1, 1]} : vector<16x384xf32> to vector<16x128xf32>
    %407 = vector.extract_strided_slice %389 {offsets = [0, 256], sizes = [16, 128], strides = [1, 1]} : vector<16x384xf32> to vector<16x128xf32>
    %408 = arith.addf %407, %319 : vector<16x128xf32>
    %409 = arith.mulf %397, %408 : vector<16x128xf32>
    %410 = arith.addf %406, %409 : vector<16x128xf32>
    %411 = math.tanh %410 : vector<16x128xf32>
    %412 = arith.subf %383, %411 : vector<16x128xf32>
    %413 = arith.mulf %405, %412 : vector<16x128xf32>
    %414 = arith.addf %411, %413 : vector<16x128xf32>
    %c3_i32_130 = arith.constant 3 : i32
    %415 = arith.index_cast %c3_i32_130 : i32 to index
    %c0_131 = arith.constant 0 : index
    %c0_132 = arith.constant 0 : index
    %416 = vector.load %arg18[%415, %c0_131, %c0_132] : memref<8x16x384xf32, #tpu.memory_space<vmem>>, vector<1x16x384xf32>
    %417 = vector.shape_cast %416 : vector<1x16x384xf32> to vector<16x384xf32>
    %418 = arith.truncf %414 : vector<16x128xf32> to vector<16x128xbf16>
    %c0_133 = arith.constant 0 : index
    %c0_134 = arith.constant 0 : index
    %419 = vector.load %arg8[%c0_133, %c0_134] : memref<128x384xbf16, #tpu.memory_space<vmem>>, vector<128x384xbf16>
    %cst_135 = arith.constant dense<0.000000e+00> : vector<16x384xf32>
    %420 = tpu.matmul %418, %419, %cst_135 {dimension_numbers = #tpu.dot_dimension_numbers<[1], [0], [0], [1], [0, 0, 1, 1], [], []>} : vector<16x128xbf16>, vector<128x384xbf16>, vector<16x384xf32> -> vector<16x384xf32>
    %421 = vector.extract_strided_slice %417 {offsets = [0, 0], sizes = [16, 128], strides = [1, 1]} : vector<16x384xf32> to vector<16x128xf32>
    %422 = vector.extract_strided_slice %420 {offsets = [0, 0], sizes = [16, 128], strides = [1, 1]} : vector<16x384xf32> to vector<16x128xf32>
    %423 = arith.addf %421, %422 : vector<16x128xf32>
    %424 = arith.negf %423 : vector<16x128xf32>
    %425 = math.exp %424 : vector<16x128xf32>
    %cst_136 = arith.constant 1.000000e+00 : f32
    %426 = vector.broadcast %cst_136 : f32 to vector<16x128xf32>
    %427 = arith.addf %426, %425 : vector<16x128xf32>
    %428 = arith.divf %426, %427 : vector<16x128xf32>
    %429 = vector.extract_strided_slice %417 {offsets = [0, 128], sizes = [16, 128], strides = [1, 1]} : vector<16x384xf32> to vector<16x128xf32>
    %430 = vector.extract_strided_slice %420 {offsets = [0, 128], sizes = [16, 128], strides = [1, 1]} : vector<16x384xf32> to vector<16x128xf32>
    %431 = arith.addf %429, %430 : vector<16x128xf32>
    %432 = arith.negf %431 : vector<16x128xf32>
    %433 = math.exp %432 : vector<16x128xf32>
    %cst_137 = arith.constant 1.000000e+00 : f32
    %434 = vector.broadcast %cst_137 : f32 to vector<16x128xf32>
    %435 = arith.addf %434, %433 : vector<16x128xf32>
    %436 = arith.divf %434, %435 : vector<16x128xf32>
    %437 = vector.extract_strided_slice %417 {offsets = [0, 256], sizes = [16, 128], strides = [1, 1]} : vector<16x384xf32> to vector<16x128xf32>
    %438 = vector.extract_strided_slice %420 {offsets = [0, 256], sizes = [16, 128], strides = [1, 1]} : vector<16x384xf32> to vector<16x128xf32>
    %439 = arith.addf %438, %319 : vector<16x128xf32>
    %440 = arith.mulf %428, %439 : vector<16x128xf32>
    %441 = arith.addf %437, %440 : vector<16x128xf32>
    %442 = math.tanh %441 : vector<16x128xf32>
    %443 = arith.subf %414, %442 : vector<16x128xf32>
    %444 = arith.mulf %436, %443 : vector<16x128xf32>
    %445 = arith.addf %442, %444 : vector<16x128xf32>
    %c4_i32_138 = arith.constant 4 : i32
    %446 = arith.index_cast %c4_i32_138 : i32 to index
    %c0_139 = arith.constant 0 : index
    %c0_140 = arith.constant 0 : index
    %447 = vector.load %arg18[%446, %c0_139, %c0_140] : memref<8x16x384xf32, #tpu.memory_space<vmem>>, vector<1x16x384xf32>
    %448 = vector.shape_cast %447 : vector<1x16x384xf32> to vector<16x384xf32>
    %449 = arith.truncf %445 : vector<16x128xf32> to vector<16x128xbf16>
    %c0_141 = arith.constant 0 : index
    %c0_142 = arith.constant 0 : index
    %450 = vector.load %arg8[%c0_141, %c0_142] : memref<128x384xbf16, #tpu.memory_space<vmem>>, vector<128x384xbf16>
    %cst_143 = arith.constant dense<0.000000e+00> : vector<16x384xf32>
    %451 = tpu.matmul %449, %450, %cst_143 {dimension_numbers = #tpu.dot_dimension_numbers<[1], [0], [0], [1], [0, 0, 1, 1], [], []>} : vector<16x128xbf16>, vector<128x384xbf16>, vector<16x384xf32> -> vector<16x384xf32>
    %452 = vector.extract_strided_slice %448 {offsets = [0, 0], sizes = [16, 128], strides = [1, 1]} : vector<16x384xf32> to vector<16x128xf32>
    %453 = vector.extract_strided_slice %451 {offsets = [0, 0], sizes = [16, 128], strides = [1, 1]} : vector<16x384xf32> to vector<16x128xf32>
    %454 = arith.addf %452, %453 : vector<16x128xf32>
    %455 = arith.negf %454 : vector<16x128xf32>
    %456 = math.exp %455 : vector<16x128xf32>
    %cst_144 = arith.constant 1.000000e+00 : f32
    %457 = vector.broadcast %cst_144 : f32 to vector<16x128xf32>
    %458 = arith.addf %457, %456 : vector<16x128xf32>
    %459 = arith.divf %457, %458 : vector<16x128xf32>
    %460 = vector.extract_strided_slice %448 {offsets = [0, 128], sizes = [16, 128], strides = [1, 1]} : vector<16x384xf32> to vector<16x128xf32>
    %461 = vector.extract_strided_slice %451 {offsets = [0, 128], sizes = [16, 128], strides = [1, 1]} : vector<16x384xf32> to vector<16x128xf32>
    %462 = arith.addf %460, %461 : vector<16x128xf32>
    %463 = arith.negf %462 : vector<16x128xf32>
    %464 = math.exp %463 : vector<16x128xf32>
    %cst_145 = arith.constant 1.000000e+00 : f32
    %465 = vector.broadcast %cst_145 : f32 to vector<16x128xf32>
    %466 = arith.addf %465, %464 : vector<16x128xf32>
    %467 = arith.divf %465, %466 : vector<16x128xf32>
    %468 = vector.extract_strided_slice %448 {offsets = [0, 256], sizes = [16, 128], strides = [1, 1]} : vector<16x384xf32> to vector<16x128xf32>
    %469 = vector.extract_strided_slice %451 {offsets = [0, 256], sizes = [16, 128], strides = [1, 1]} : vector<16x384xf32> to vector<16x128xf32>
    %470 = arith.addf %469, %319 : vector<16x128xf32>
    %471 = arith.mulf %459, %470 : vector<16x128xf32>
    %472 = arith.addf %468, %471 : vector<16x128xf32>
    %473 = math.tanh %472 : vector<16x128xf32>
    %474 = arith.subf %445, %473 : vector<16x128xf32>
    %475 = arith.mulf %467, %474 : vector<16x128xf32>
    %476 = arith.addf %473, %475 : vector<16x128xf32>
    %c5_i32_146 = arith.constant 5 : i32
    %477 = arith.index_cast %c5_i32_146 : i32 to index
    %c0_147 = arith.constant 0 : index
    %c0_148 = arith.constant 0 : index
    %478 = vector.load %arg18[%477, %c0_147, %c0_148] : memref<8x16x384xf32, #tpu.memory_space<vmem>>, vector<1x16x384xf32>
    %479 = vector.shape_cast %478 : vector<1x16x384xf32> to vector<16x384xf32>
    %480 = arith.truncf %476 : vector<16x128xf32> to vector<16x128xbf16>
    %c0_149 = arith.constant 0 : index
    %c0_150 = arith.constant 0 : index
    %481 = vector.load %arg8[%c0_149, %c0_150] : memref<128x384xbf16, #tpu.memory_space<vmem>>, vector<128x384xbf16>
    %cst_151 = arith.constant dense<0.000000e+00> : vector<16x384xf32>
    %482 = tpu.matmul %480, %481, %cst_151 {dimension_numbers = #tpu.dot_dimension_numbers<[1], [0], [0], [1], [0, 0, 1, 1], [], []>} : vector<16x128xbf16>, vector<128x384xbf16>, vector<16x384xf32> -> vector<16x384xf32>
    %483 = vector.extract_strided_slice %479 {offsets = [0, 0], sizes = [16, 128], strides = [1, 1]} : vector<16x384xf32> to vector<16x128xf32>
    %484 = vector.extract_strided_slice %482 {offsets = [0, 0], sizes = [16, 128], strides = [1, 1]} : vector<16x384xf32> to vector<16x128xf32>
    %485 = arith.addf %483, %484 : vector<16x128xf32>
    %486 = arith.negf %485 : vector<16x128xf32>
    %487 = math.exp %486 : vector<16x128xf32>
    %cst_152 = arith.constant 1.000000e+00 : f32
    %488 = vector.broadcast %cst_152 : f32 to vector<16x128xf32>
    %489 = arith.addf %488, %487 : vector<16x128xf32>
    %490 = arith.divf %488, %489 : vector<16x128xf32>
    %491 = vector.extract_strided_slice %479 {offsets = [0, 128], sizes = [16, 128], strides = [1, 1]} : vector<16x384xf32> to vector<16x128xf32>
    %492 = vector.extract_strided_slice %482 {offsets = [0, 128], sizes = [16, 128], strides = [1, 1]} : vector<16x384xf32> to vector<16x128xf32>
    %493 = arith.addf %491, %492 : vector<16x128xf32>
    %494 = arith.negf %493 : vector<16x128xf32>
    %495 = math.exp %494 : vector<16x128xf32>
    %cst_153 = arith.constant 1.000000e+00 : f32
    %496 = vector.broadcast %cst_153 : f32 to vector<16x128xf32>
    %497 = arith.addf %496, %495 : vector<16x128xf32>
    %498 = arith.divf %496, %497 : vector<16x128xf32>
    %499 = vector.extract_strided_slice %479 {offsets = [0, 256], sizes = [16, 128], strides = [1, 1]} : vector<16x384xf32> to vector<16x128xf32>
    %500 = vector.extract_strided_slice %482 {offsets = [0, 256], sizes = [16, 128], strides = [1, 1]} : vector<16x384xf32> to vector<16x128xf32>
    %501 = arith.addf %500, %319 : vector<16x128xf32>
    %502 = arith.mulf %490, %501 : vector<16x128xf32>
    %503 = arith.addf %499, %502 : vector<16x128xf32>
    %504 = math.tanh %503 : vector<16x128xf32>
    %505 = arith.subf %476, %504 : vector<16x128xf32>
    %506 = arith.mulf %498, %505 : vector<16x128xf32>
    %507 = arith.addf %504, %506 : vector<16x128xf32>
    %c6_i32_154 = arith.constant 6 : i32
    %508 = arith.index_cast %c6_i32_154 : i32 to index
    %c0_155 = arith.constant 0 : index
    %c0_156 = arith.constant 0 : index
    %509 = vector.load %arg18[%508, %c0_155, %c0_156] : memref<8x16x384xf32, #tpu.memory_space<vmem>>, vector<1x16x384xf32>
    %510 = vector.shape_cast %509 : vector<1x16x384xf32> to vector<16x384xf32>
    %511 = arith.truncf %507 : vector<16x128xf32> to vector<16x128xbf16>
    %c0_157 = arith.constant 0 : index
    %c0_158 = arith.constant 0 : index
    %512 = vector.load %arg8[%c0_157, %c0_158] : memref<128x384xbf16, #tpu.memory_space<vmem>>, vector<128x384xbf16>
    %cst_159 = arith.constant dense<0.000000e+00> : vector<16x384xf32>
    %513 = tpu.matmul %511, %512, %cst_159 {dimension_numbers = #tpu.dot_dimension_numbers<[1], [0], [0], [1], [0, 0, 1, 1], [], []>} : vector<16x128xbf16>, vector<128x384xbf16>, vector<16x384xf32> -> vector<16x384xf32>
    %514 = vector.extract_strided_slice %510 {offsets = [0, 0], sizes = [16, 128], strides = [1, 1]} : vector<16x384xf32> to vector<16x128xf32>
    %515 = vector.extract_strided_slice %513 {offsets = [0, 0], sizes = [16, 128], strides = [1, 1]} : vector<16x384xf32> to vector<16x128xf32>
    %516 = arith.addf %514, %515 : vector<16x128xf32>
    %517 = arith.negf %516 : vector<16x128xf32>
    %518 = math.exp %517 : vector<16x128xf32>
    %cst_160 = arith.constant 1.000000e+00 : f32
    %519 = vector.broadcast %cst_160 : f32 to vector<16x128xf32>
    %520 = arith.addf %519, %518 : vector<16x128xf32>
    %521 = arith.divf %519, %520 : vector<16x128xf32>
    %522 = vector.extract_strided_slice %510 {offsets = [0, 128], sizes = [16, 128], strides = [1, 1]} : vector<16x384xf32> to vector<16x128xf32>
    %523 = vector.extract_strided_slice %513 {offsets = [0, 128], sizes = [16, 128], strides = [1, 1]} : vector<16x384xf32> to vector<16x128xf32>
    %524 = arith.addf %522, %523 : vector<16x128xf32>
    %525 = arith.negf %524 : vector<16x128xf32>
    %526 = math.exp %525 : vector<16x128xf32>
    %cst_161 = arith.constant 1.000000e+00 : f32
    %527 = vector.broadcast %cst_161 : f32 to vector<16x128xf32>
    %528 = arith.addf %527, %526 : vector<16x128xf32>
    %529 = arith.divf %527, %528 : vector<16x128xf32>
    %530 = vector.extract_strided_slice %510 {offsets = [0, 256], sizes = [16, 128], strides = [1, 1]} : vector<16x384xf32> to vector<16x128xf32>
    %531 = vector.extract_strided_slice %513 {offsets = [0, 256], sizes = [16, 128], strides = [1, 1]} : vector<16x384xf32> to vector<16x128xf32>
    %532 = arith.addf %531, %319 : vector<16x128xf32>
    %533 = arith.mulf %521, %532 : vector<16x128xf32>
    %534 = arith.addf %530, %533 : vector<16x128xf32>
    %535 = math.tanh %534 : vector<16x128xf32>
    %536 = arith.subf %507, %535 : vector<16x128xf32>
    %537 = arith.mulf %529, %536 : vector<16x128xf32>
    %538 = arith.addf %535, %537 : vector<16x128xf32>
    %c7_i32_162 = arith.constant 7 : i32
    %539 = arith.index_cast %c7_i32_162 : i32 to index
    %c0_163 = arith.constant 0 : index
    %c0_164 = arith.constant 0 : index
    %540 = vector.load %arg18[%539, %c0_163, %c0_164] : memref<8x16x384xf32, #tpu.memory_space<vmem>>, vector<1x16x384xf32>
    %541 = vector.shape_cast %540 : vector<1x16x384xf32> to vector<16x384xf32>
    %542 = arith.truncf %538 : vector<16x128xf32> to vector<16x128xbf16>
    %c0_165 = arith.constant 0 : index
    %c0_166 = arith.constant 0 : index
    %543 = vector.load %arg8[%c0_165, %c0_166] : memref<128x384xbf16, #tpu.memory_space<vmem>>, vector<128x384xbf16>
    %cst_167 = arith.constant dense<0.000000e+00> : vector<16x384xf32>
    %544 = tpu.matmul %542, %543, %cst_167 {dimension_numbers = #tpu.dot_dimension_numbers<[1], [0], [0], [1], [0, 0, 1, 1], [], []>} : vector<16x128xbf16>, vector<128x384xbf16>, vector<16x384xf32> -> vector<16x384xf32>
    %545 = vector.extract_strided_slice %541 {offsets = [0, 0], sizes = [16, 128], strides = [1, 1]} : vector<16x384xf32> to vector<16x128xf32>
    %546 = vector.extract_strided_slice %544 {offsets = [0, 0], sizes = [16, 128], strides = [1, 1]} : vector<16x384xf32> to vector<16x128xf32>
    %547 = arith.addf %545, %546 : vector<16x128xf32>
    %548 = arith.negf %547 : vector<16x128xf32>
    %549 = math.exp %548 : vector<16x128xf32>
    %cst_168 = arith.constant 1.000000e+00 : f32
    %550 = vector.broadcast %cst_168 : f32 to vector<16x128xf32>
    %551 = arith.addf %550, %549 : vector<16x128xf32>
    %552 = arith.divf %550, %551 : vector<16x128xf32>
    %553 = vector.extract_strided_slice %541 {offsets = [0, 128], sizes = [16, 128], strides = [1, 1]} : vector<16x384xf32> to vector<16x128xf32>
    %554 = vector.extract_strided_slice %544 {offsets = [0, 128], sizes = [16, 128], strides = [1, 1]} : vector<16x384xf32> to vector<16x128xf32>
    %555 = arith.addf %553, %554 : vector<16x128xf32>
    %556 = arith.negf %555 : vector<16x128xf32>
    %557 = math.exp %556 : vector<16x128xf32>
    %cst_169 = arith.constant 1.000000e+00 : f32
    %558 = vector.broadcast %cst_169 : f32 to vector<16x128xf32>
    %559 = arith.addf %558, %557 : vector<16x128xf32>
    %560 = arith.divf %558, %559 : vector<16x128xf32>
    %561 = vector.extract_strided_slice %541 {offsets = [0, 256], sizes = [16, 128], strides = [1, 1]} : vector<16x384xf32> to vector<16x128xf32>
    %562 = vector.extract_strided_slice %544 {offsets = [0, 256], sizes = [16, 128], strides = [1, 1]} : vector<16x384xf32> to vector<16x128xf32>
    %563 = arith.addf %562, %319 : vector<16x128xf32>
    %564 = arith.mulf %552, %563 : vector<16x128xf32>
    %565 = arith.addf %561, %564 : vector<16x128xf32>
    %566 = math.tanh %565 : vector<16x128xf32>
    %567 = arith.subf %538, %566 : vector<16x128xf32>
    %568 = arith.mulf %560, %567 : vector<16x128xf32>
    %569 = arith.addf %566, %568 : vector<16x128xf32>
    %c8_i32_170 = arith.constant 8 : i32
    %c1_171 = arith.constant 1 : index
    %c0_172 = arith.constant 0 : index
    %c0_173 = arith.constant 0 : index
    %570 = vector.load %arg20[%c1_171, %c0_172, %c0_173] : memref<2x16x128xf32, #tpu.memory_space<vmem>>, vector<1x16x128xf32>
    %571 = vector.shape_cast %570 : vector<1x16x128xf32> to vector<16x128xf32>
    %572 = vector.shape_cast %569 : vector<16x128xf32> to vector<1x16x128xf32>
    tpu.vector_store %arg20[%c1_171, %c0_172, %c0_173], %572 {strides = array<i32>} : memref<2x16x128xf32, #tpu.memory_space<vmem>>, vector<1x16x128xf32>,
    %c0_i32_174 = arith.constant 0 : i32
    %573 = arith.cmpi eq, %arg1, %c0_i32_174 : i32
    %574 = arith.extui %573 : i1 to i32
    %c0_i32_175 = arith.constant 0 : i32
    %575 = arith.cmpi ne, %574, %c0_i32_175 : i32
    scf.if %575 {
      %c1_176 = arith.constant 1 : index
      %c0_177 = arith.constant 0 : index
      %c0_178 = arith.constant 0 : index
      %576 = vector.load %arg20[%c1_176, %c0_177, %c0_178] : memref<2x16x128xf32, #tpu.memory_space<vmem>>, vector<1x16x128xf32>
      %577 = vector.shape_cast %576 : vector<1x16x128xf32> to vector<16x128xf32>
      %578 = arith.truncf %577 : vector<16x128xf32> to vector<16x128xbf16>
      %c0_179 = arith.constant 0 : index
      %c0_180 = arith.constant 0 : index
      %579 = vector.load %arg11[%c0_179, %c0_180] : memref<128x128xbf16, #tpu.memory_space<vmem>>, vector<128x128xbf16>
      %cst_181 = arith.constant dense<0.000000e+00> : vector<16x128xf32>
      %580 = tpu.matmul %578, %579, %cst_181 {dimension_numbers = #tpu.dot_dimension_numbers<[1], [0], [0], [1], [0, 0, 1, 1], [], []>} : vector<16x128xbf16>, vector<128x128xbf16>, vector<16x128xf32> -> vector<16x128xf32>
      %c0_182 = arith.constant 0 : index
      %c0_183 = arith.constant 0 : index
      %581 = vector.load %arg12[%c0_182, %c0_183] : memref<1x128xf32, #tpu.memory_space<vmem>>, vector<1x128xf32>
      %582 = vector.broadcast %581 : vector<1x128xf32> to vector<16x128xf32>
      %583 = arith.addf %580, %582 : vector<16x128xf32>
      %cst_184 = arith.constant 0.000000e+00 : f32
      %584 = vector.broadcast %cst_184 : f32 to vector<16x128xf32>
      %585 = arith.maximumf %583, %584 : vector<16x128xf32>
      %586 = arith.truncf %585 : vector<16x128xf32> to vector<16x128xbf16>
      %c0_185 = arith.constant 0 : index
      %c0_186 = arith.constant 0 : index
      %587 = vector.load %arg13[%c0_185, %c0_186] : memref<128x128xbf16, #tpu.memory_space<vmem>>, vector<128x128xbf16>
      %cst_187 = arith.constant dense<0.000000e+00> : vector<16x128xf32>
      %588 = tpu.matmul %586, %587, %cst_187 {dimension_numbers = #tpu.dot_dimension_numbers<[1], [0], [0], [1], [0, 0, 1, 1], [], []>} : vector<16x128xbf16>, vector<128x128xbf16>, vector<16x128xf32> -> vector<16x128xf32>
      %c0_188 = arith.constant 0 : index
      %c0_189 = arith.constant 0 : index
      %589 = vector.load %arg14[%c0_188, %c0_189] : memref<1x128xf32, #tpu.memory_space<vmem>>, vector<1x128xf32>
      %590 = vector.broadcast %589 : vector<1x128xf32> to vector<16x128xf32>
      %591 = arith.addf %588, %590 : vector<16x128xf32>
      %cst_190 = arith.constant 0.000000e+00 : f32
      %592 = vector.broadcast %cst_190 : f32 to vector<16x128xf32>
      %593 = arith.maximumf %591, %592 : vector<16x128xf32>
      %594 = arith.truncf %593 : vector<16x128xf32> to vector<16x128xbf16>
      %c0_191 = arith.constant 0 : index
      %c0_192 = arith.constant 0 : index
      %595 = vector.load %arg15[%c0_191, %c0_192] : memref<128x128xbf16, #tpu.memory_space<vmem>>, vector<128x128xbf16>
      %cst_193 = arith.constant dense<0.000000e+00> : vector<16x128xf32>
      %596 = tpu.matmul %594, %595, %cst_193 {dimension_numbers = #tpu.dot_dimension_numbers<[1], [0], [0], [1], [0, 0, 1, 1], [], []>} : vector<16x128xbf16>, vector<128x128xbf16>, vector<16x128xf32> -> vector<16x128xf32>
      %c0_194 = arith.constant 0 : index
      %c0_195 = arith.constant 0 : index
      %597 = vector.load %arg16[%c0_194, %c0_195] : memref<1x128xf32, #tpu.memory_space<vmem>>, vector<1x128xf32>
      %598 = vector.broadcast %597 : vector<1x128xf32> to vector<16x128xf32>
      %599 = arith.addf %596, %598 : vector<16x128xf32>
      %c0_196 = arith.constant 0 : index
      %c0_197 = arith.constant 0 : index
      %600 = vector.load %arg17[%c0_196, %c0_197] : memref<16x128xf32, #tpu.memory_space<vmem>>, vector<16x128xf32>
      tpu.vector_store %arg17[%c0_196, %c0_197], %599 {strides = array<i32>} : memref<16x128xf32, #tpu.memory_space<vmem>>, vector<16x128xf32>,
    } else {
    }
    return
  }
  func.func @transform_0(%arg0: i32, %arg1: i32) -> (i32, i32, i32) {
    %c0_i32 = arith.constant 0 : i32
    %c0_i32_0 = arith.constant 0 : i32
    return %arg1, %arg0, %c0_i32 : i32, i32, i32
  }
  func.func @transform_1(%arg0: i32, %arg1: i32) -> (i32, i32) {
    %c0_i32 = arith.constant 0 : i32
    %c0_i32_0 = arith.constant 0 : i32
    %c0_i32_1 = arith.constant 0 : i32
    return %c0_i32, %c0_i32_0 : i32, i32
  }
  func.func @transform_2(%arg0: i32, %arg1: i32) -> (i32, i32) {
    %c0_i32 = arith.constant 0 : i32
    %c0_i32_0 = arith.constant 0 : i32
    %c0_i32_1 = arith.constant 0 : i32
    return %c0_i32, %c0_i32_0 : i32, i32
  }
  func.func @transform_3(%arg0: i32, %arg1: i32) -> (i32, i32) {
    %c0_i32 = arith.constant 0 : i32
    %c0_i32_0 = arith.constant 0 : i32
    %c0_i32_1 = arith.constant 0 : i32
    return %c0_i32, %c0_i32_0 : i32, i32
  }
  func.func @transform_4(%arg0: i32, %arg1: i32) -> (i32, i32) {
    %c0_i32 = arith.constant 0 : i32
    %c0_i32_0 = arith.constant 0 : i32
    %c0_i32_1 = arith.constant 0 : i32
    return %c0_i32, %c0_i32_0 : i32, i32
  }
  func.func @transform_5(%arg0: i32, %arg1: i32) -> (i32, i32) {
    %c0_i32 = arith.constant 0 : i32
    %c0_i32_0 = arith.constant 0 : i32
    %c0_i32_1 = arith.constant 0 : i32
    return %c0_i32, %c0_i32_0 : i32, i32
  }
  func.func @transform_6(%arg0: i32, %arg1: i32) -> (i32, i32) {
    %c0_i32 = arith.constant 0 : i32
    %c0_i32_0 = arith.constant 0 : i32
    %c0_i32_1 = arith.constant 0 : i32
    return %c0_i32, %c0_i32_0 : i32, i32
  }
  func.func @transform_7(%arg0: i32, %arg1: i32) -> (i32, i32) {
    %c0_i32 = arith.constant 0 : i32
    %c0_i32_0 = arith.constant 0 : i32
    %c0_i32_1 = arith.constant 0 : i32
    return %c0_i32, %c0_i32_0 : i32, i32
  }
  func.func @transform_8(%arg0: i32, %arg1: i32) -> (i32, i32) {
    %c0_i32 = arith.constant 0 : i32
    %c0_i32_0 = arith.constant 0 : i32
    %c0_i32_1 = arith.constant 0 : i32
    return %c0_i32, %c0_i32_0 : i32, i32
  }
  func.func @transform_9(%arg0: i32, %arg1: i32) -> (i32, i32) {
    %c0_i32 = arith.constant 0 : i32
    %c0_i32_0 = arith.constant 0 : i32
    %c0_i32_1 = arith.constant 0 : i32
    return %c0_i32, %c0_i32_0 : i32, i32
  }
  func.func @transform_10(%arg0: i32, %arg1: i32) -> (i32, i32) {
    %c0_i32 = arith.constant 0 : i32
    %c0_i32_0 = arith.constant 0 : i32
    %c0_i32_1 = arith.constant 0 : i32
    return %c0_i32, %c0_i32_0 : i32, i32
  }
  func.func @transform_11(%arg0: i32, %arg1: i32) -> (i32, i32) {
    %c0_i32 = arith.constant 0 : i32
    %c0_i32_0 = arith.constant 0 : i32
    %c0_i32_1 = arith.constant 0 : i32
    return %c0_i32, %c0_i32_0 : i32, i32
  }
  func.func @transform_12(%arg0: i32, %arg1: i32) -> (i32, i32) {
    %c0_i32 = arith.constant 0 : i32
    %c0_i32_0 = arith.constant 0 : i32
    %c0_i32_1 = arith.constant 0 : i32
    return %c0_i32, %c0_i32_0 : i32, i32
  }
  func.func @transform_13(%arg0: i32, %arg1: i32) -> (i32, i32) {
    %c0_i32 = arith.constant 0 : i32
    %c0_i32_0 = arith.constant 0 : i32
    %c0_i32_1 = arith.constant 0 : i32
    return %c0_i32, %c0_i32_0 : i32, i32
  }
  func.func @transform_14(%arg0: i32, %arg1: i32) -> (i32, i32) {
    %c0_i32 = arith.constant 0 : i32
    %c0_i32_0 = arith.constant 0 : i32
    %c0_i32_1 = arith.constant 0 : i32
    return %c0_i32, %c0_i32_0 : i32, i32
  }
  func.func @transform_15(%arg0: i32, %arg1: i32) -> (i32, i32) {
    %c0_i32 = arith.constant 0 : i32
    %c0_i32_0 = arith.constant 0 : i32
    return %arg0, %c0_i32 : i32, i32
  }
}

</mosaic_0001>

<llo_original>
// kernel: tpu_custom_call.1
$region0: #{tpu_custom_call.1}
  #allocation0 [shape = 'u32[]', space=smem, size = 0x4, offset = 0x4, fixed_abs, tag = 'smem constant byte address 0x4 - core index']
  #allocation1 [shape = 'u32[144,128]{1,0:T(1,128)}', space=vmem, size = 0x12000, scoped, tag = 'internal scratch']
  #allocation2 [shape = 'f32[8,16,384]{2,1,0:T(8,128)}', space=vmem, size = 0x30000, scoped, tag = 'scratch operand']
  #allocation3 [shape = 'bf16[8,16,128]{2,1,0:T(16,128)(2,1)}', space=vmem, size = 0x8000, scoped, tag = 'scratch operand']
  #allocation4 [shape = 'f32[2,16,128]{2,1,0:T(8,128)}', space=vmem, size = 0x4000, scoped, tag = 'scratch operand']
  %s0 = inlined_call_operand.hbm [shape: bf16[8,16,128], index: 0, kind: input, shape index: {}]
  %s1 = inlined_call_operand.hbm [shape: bf16[128,384], index: 1, kind: input, shape index: {}]
  %s2 = inlined_call_operand.hbm [shape: bf16[128,384], index: 2, kind: input, shape index: {}]
  %s3 = inlined_call_operand.vmem [shape: f32[1,384], index: 3, kind: input, shape index: {}]
  %s4 = inlined_call_operand.vmem [shape: f32[1,128], index: 4, kind: input, shape index: {}]
  %s5 = inlined_call_operand.hbm [shape: bf16[128,384], index: 5, kind: input, shape index: {}]
  %s6 = inlined_call_operand.hbm [shape: bf16[128,384], index: 6, kind: input, shape index: {}]
  %s7 = inlined_call_operand.vmem [shape: f32[1,384], index: 7, kind: input, shape index: {}]
  %s8 = inlined_call_operand.vmem [shape: f32[1,128], index: 8, kind: input, shape index: {}]
  %s9 = inlined_call_operand.hbm [shape: bf16[128,128], index: 9, kind: input, shape index: {}]
  %s10 = inlined_call_operand.vmem [shape: f32[1,128], index: 10, kind: input, shape index: {}]
  %s11 = inlined_call_operand.hbm [shape: bf16[128,128], index: 11, kind: input, shape index: {}]
  %s12 = inlined_call_operand.vmem [shape: f32[1,128], index: 12, kind: input, shape index: {}]
  %s13 = inlined_call_operand.hbm [shape: bf16[128,128], index: 13, kind: input, shape index: {}]
  %s14 = inlined_call_operand.vmem [shape: f32[1,128], index: 14, kind: input, shape index: {}]
  %s15 = inlined_call_operand.hbm [shape: f32[16,128], index: 15, kind: output, shape index: {}]
  %s16 = sld [smem:[#allocation0]]
  $region110: #{tpu_custom_call.1} parent=0
    _
  %s18 = ssub.s32 1, %s16
  %s19 = scalar_select 0, %s18, %s16
  $region1: #{tpu_custom_call.1} parent=0
    #allocation5 [shape = 'u8[32768]{0}', space=vmem, size = 0x8000, scoped, tag = 'input window, operand 0, single buffered']
    #allocation6 [shape = 's32[1]{0}', space=sflag, size = 0x4, scoped, tag = 'scoped memory for tpu_custom_call.1']
    #allocation7 [shape = 's32[1]{0}', space=sflag, size = 0x4, scoped, tag = 'scoped memory for tpu_custom_call.1']
    #allocation8 [shape = 'u8[98304]{0}', space=vmem, size = 0x18000, scoped, tag = 'input window, operand 1, single buffered']
    #allocation9 [shape = 's32[1]{0}', space=sflag, size = 0x4, scoped, tag = 'scoped memory for tpu_custom_call.1']
    #allocation10 [shape = 'u8[98304]{0}', space=vmem, size = 0x18000, scoped, tag = 'input window, operand 2, single buffered']
    #allocation11 [shape = 'u8[98304]{0}', space=vmem, size = 0x18000, scoped, tag = 'input window, operand 5, single buffered']
    #allocation12 [shape = 's32[1]{0}', space=sflag, size = 0x4, scoped, tag = 'scoped memory for tpu_custom_call.1']
    #allocation13 [shape = 'u8[98304]{0}', space=vmem, size = 0x18000, scoped, tag = 'input window, operand 6, single buffered']
    #allocation14 [shape = 'u8[32768]{0}', space=vmem, size = 0x8000, scoped, tag = 'input window, operand 9, single buffered']
    #allocation15 [shape = 's32[1]{0}', space=sflag, size = 0x4, scoped, tag = 'scoped memory for tpu_custom_call.1']
    #allocation16 [shape = 'u8[32768]{0}', space=vmem, size = 0x8000, scoped, tag = 'input window, operand 11, single buffered']
    #allocation17 [shape = 'u8[32768]{0}', space=vmem, size = 0x8000, scoped, tag = 'input window, operand 13, single buffered']
    #allocation18 [shape = 's32[1]{0}', space=sflag, size = 0x4, scoped, tag = 'scoped memory for tpu_custom_call.1']
    #allocation19 [shape = 'u8[8192]{0}', space=vmem, size = 0x2000, scoped, tag = 'output window, operand 0, single buffered']
    %20 = vsyncpa [#allocation6], 0
    %21 = vsyncpa [#allocation9], 0
    %22 = vsyncpa [#allocation12], 0
    %23 = vsyncpa [#allocation15], 0
    %24 = vsyncpa [#allocation18], 0
    %25 = vsyncpa [#allocation7], 0
    // Predicated region
    $region2: #{tpu_custom_call.1} parent=1 // pred_check
      _
    $region3: #{tpu_custom_call.1} parent=1 // pred_check_branch
      %27 = sbr.rel (0) target = $region5
    $region4: #{tpu_custom_call.1} parent=1 // pred_region
      %s29 = ssub.s32 1024, 1024
      %30 = vsyncadd [#allocation6], %s29
      %s31 = sshll.u32 [#allocation5], 4
      %s32 = int_to_ptr.vmem [resolvable:$true] %s31
      %37 = dma.hbm_to_vmem [thread:$0]  %s0, 1024, %s32, [#allocation6], 64, 64, 4
    $region5: #{tpu_custom_call.1} parent=1 // pred_fallthru
      _
    // Predicated region
    $region6: #{tpu_custom_call.1} parent=1 // pred_check
      _
    $region7: #{tpu_custom_call.1} parent=1 // pred_check_branch
      %39 = sbr.rel (0) target = $region9
    $region8: #{tpu_custom_call.1} parent=1 // pred_region
      %s41 = ssub.s32 3072, 3072
      %42 = vsyncadd [#allocation9], %s41
      %s43 = sshll.u32 [#allocation8], 4
      %s44 = int_to_ptr.vmem [resolvable:$true] %s43
      %49 = dma.hbm_to_vmem [thread:$0]  %s1, 3072, %s44, [#allocation9], 192, 192, 12
    $region9: #{tpu_custom_call.1} parent=1 // pred_fallthru
      _
    // Predicated region
    $region10: #{tpu_custom_call.1} parent=1 // pred_check
      _
    $region11: #{tpu_custom_call.1} parent=1 // pred_check_branch
      %51 = sbr.rel (0) target = $region13
    $region12: #{tpu_custom_call.1} parent=1 // pred_region
      %s53 = ssub.s32 3072, 3072
      %54 = vsyncadd [#allocation9], %s53
      %s55 = sshll.u32 [#allocation10], 4
      %s56 = int_to_ptr.vmem [resolvable:$true] %s55
      %61 = dma.hbm_to_vmem [thread:$0]  %s2, 3072, %s56, [#allocation9], 192, 192, 12
    $region13: #{tpu_custom_call.1} parent=1 // pred_fallthru
      _
    // Predicated region
    $region14: #{tpu_custom_call.1} parent=1 // pred_check
      _
    $region15: #{tpu_custom_call.1} parent=1 // pred_check_branch
      %63 = sbr.rel (0) target = $region17
    $region16: #{tpu_custom_call.1} parent=1 // pred_region
      _
    $region17: #{tpu_custom_call.1} parent=1 // pred_fallthru
      _
    // Predicated region
    $region18: #{tpu_custom_call.1} parent=1 // pred_check
      _
    $region19: #{tpu_custom_call.1} parent=1 // pred_check_branch
      %65 = sbr.rel (0) target = $region21
    $region20: #{tpu_custom_call.1} parent=1 // pred_region
      _
    $region21: #{tpu_custom_call.1} parent=1 // pred_fallthru
      _
    // Predicated region
    $region22: #{tpu_custom_call.1} parent=1 // pred_check
      _
    $region23: #{tpu_custom_call.1} parent=1 // pred_check_branch
      %67 = sbr.rel (0) target = $region25
    $region24: #{tpu_custom_call.1} parent=1 // pred_region
      %s69 = ssub.s32 3072, 3072
      %70 = vsyncadd [#allocation12], %s69
      %s71 = sshll.u32 [#allocation11], 4
      %s72 = int_to_ptr.vmem [resolvable:$true] %s71
      %77 = dma.hbm_to_vmem [thread:$0]  %s5, 3072, %s72, [#allocation12], 192, 192, 12
    $region25: #{tpu_custom_call.1} parent=1 // pred_fallthru
      _
    // Predicated region
    $region26: #{tpu_custom_call.1} parent=1 // pred_check
      _
    $region27: #{tpu_custom_call.1} parent=1 // pred_check_branch
      %79 = sbr.rel (0) target = $region29
    $region28: #{tpu_custom_call.1} parent=1 // pred_region
      %s81 = ssub.s32 3072, 3072
      %82 = vsyncadd [#allocation12], %s81
      %s83 = sshll.u32 [#allocation13], 4
      %s84 = int_to_ptr.vmem [resolvable:$true] %s83
      %89 = dma.hbm_to_vmem [thread:$0]  %s6, 3072, %s84, [#allocation12], 192, 192, 12
    $region29: #{tpu_custom_call.1} parent=1 // pred_fallthru
      _
    // Predicated region
    $region30: #{tpu_custom_call.1} parent=1 // pred_check
      _
    $region31: #{tpu_custom_call.1} parent=1 // pred_check_branch
      %91 = sbr.rel (0) target = $region33
    $region32: #{tpu_custom_call.1} parent=1 // pred_region
      _
    $region33: #{tpu_custom_call.1} parent=1 // pred_fallthru
      _
    // Predicated region
    $region34: #{tpu_custom_call.1} parent=1 // pred_check
      _
    $region35: #{tpu_custom_call.1} parent=1 // pred_check_branch
      %93 = sbr.rel (0) target = $region37
    $region36: #{tpu_custom_call.1} parent=1 // pred_region
      _
    $region37: #{tpu_custom_call.1} parent=1 // pred_fallthru
      _
    // Predicated region
    $region38: #{tpu_custom_call.1} parent=1 // pred_check
      _
    $region39: #{tpu_custom_call.1} parent=1 // pred_check_branch
      %95 = sbr.rel (0) target = $region41
    $region40: #{tpu_custom_call.1} parent=1 // pred_region
      %s97 = ssub.s32 1024, 1024
      %98 = vsyncadd [#allocation15], %s97
      %s99 = sshll.u32 [#allocation14], 4
      %s100 = int_to_ptr.vmem [resolvable:$true] %s99
      %105 = dma.hbm_to_vmem [thread:$0]  %s9, 1024, %s100, [#allocation15], 64, 64, 4
    $region41: #{tpu_custom_call.1} parent=1 // pred_fallthru
      _
    // Predicated region
    $region42: #{tpu_custom_call.1} parent=1 // pred_check
      _
    $region43: #{tpu_custom_call.1} parent=1 // pred_check_branch
      %107 = sbr.rel (0) target = $region45
    $region44: #{tpu_custom_call.1} parent=1 // pred_region
      _
    $region45: #{tpu_custom_call.1} parent=1 // pred_fallthru
      _
    // Predicated region
    $region46: #{tpu_custom_call.1} parent=1 // pred_check
      _
    $region47: #{tpu_custom_call.1} parent=1 // pred_check_branch
      %109 = sbr.rel (0) target = $region49
    $region48: #{tpu_custom_call.1} parent=1 // pred_region
      %s111 = ssub.s32 1024, 1024
      %112 = vsyncadd [#allocation15], %s111
      %s113 = sshll.u32 [#allocation16], 4
      %s114 = int_to_ptr.vmem [resolvable:$true] %s113
      %119 = dma.hbm_to_vmem [thread:$0]  %s11, 1024, %s114, [#allocation15], 64, 64, 4
    $region49: #{tpu_custom_call.1} parent=1 // pred_fallthru
      _
    // Predicated region
    $region50: #{tpu_custom_call.1} parent=1 // pred_check
      _
    $region51: #{tpu_custom_call.1} parent=1 // pred_check_branch
      %121 = sbr.rel (0) target = $region53
    $region52: #{tpu_custom_call.1} parent=1 // pred_region
      _
    $region53: #{tpu_custom_call.1} parent=1 // pred_fallthru
      _
    // Predicated region
    $region54: #{tpu_custom_call.1} parent=1 // pred_check
      _
    $region55: #{tpu_custom_call.1} parent=1 // pred_check_branch
      %123 = sbr.rel (0) target = $region57
    $region56: #{tpu_custom_call.1} parent=1 // pred_region
      %s125 = ssub.s32 1024, 1024
      %126 = vsyncadd [#allocation18], %s125
      %s127 = sshll.u32 [#allocation17], 4
      %s128 = int_to_ptr.vmem [resolvable:$true] %s127
      %133 = dma.hbm_to_vmem [thread:$0]  %s13, 1024, %s128, [#allocation18], 64, 64, 4
    $region57: #{tpu_custom_call.1} parent=1 // pred_fallthru
      _
    // Predicated region
    $region58: #{tpu_custom_call.1} parent=1 // pred_check
      _
    $region59: #{tpu_custom_call.1} parent=1 // pred_check_branch
      %135 = sbr.rel (0) target = $region61
    $region60: #{tpu_custom_call.1} parent=1 // pred_region
      _
    $region61: #{tpu_custom_call.1} parent=1 // pred_fallthru
      _
    // Predicated region
    $region62: #{tpu_custom_call.1} parent=1 // pred_check
      _
    $region63: #{tpu_custom_call.1} parent=1 // pred_check_branch
      %137 = sbr.rel (0) target = $region65
    $region64: #{tpu_custom_call.1} parent=1 // pred_region
      %138 = dma.done [#allocation6], 1024
    $region65: #{tpu_custom_call.1} parent=1 // pred_fallthru
      _
    // Predicated region
    $region66: #{tpu_custom_call.1} parent=1 // pred_check
      _
    $region67: #{tpu_custom_call.1} parent=1 // pred_check_branch
      %140 = sbr.rel (0) target = $region69
    $region68: #{tpu_custom_call.1} parent=1 // pred_region
      %141 = dma.done [#allocation9], 3072
    $region69: #{tpu_custom_call.1} parent=1 // pred_fallthru
      _
    // Predicated region
    $region70: #{tpu_custom_call.1} parent=1 // pred_check
      _
    $region71: #{tpu_custom_call.1} parent=1 // pred_check_branch
      %143 = sbr.rel (0) target = $region73
    $region72: #{tpu_custom_call.1} parent=1 // pred_region
      %144 = dma.done [#allocation9], 3072
    $region73: #{tpu_custom_call.1} parent=1 // pred_fallthru
      _
    // Predicated region
    $region74: #{tpu_custom_call.1} parent=1 // pred_check
      _
    $region75: #{tpu_custom_call.1} parent=1 // pred_check_branch
      %146 = sbr.rel (0) target = $region77
    $region76: #{tpu_custom_call.1} parent=1 // pred_region
      %147 = dma.done [#allocation12], 3072
    $region77: #{tpu_custom_call.1} parent=1 // pred_fallthru
      _
    // Predicated region
    $region78: #{tpu_custom_call.1} parent=1 // pred_check
      _
    $region79: #{tpu_custom_call.1} parent=1 // pred_check_branch
      %149 = sbr.rel (0) target = $region81
    $region80: #{tpu_custom_call.1} parent=1 // pred_region
      %150 = dma.done [#allocation12], 3072
    $region81: #{tpu_custom_call.1} parent=1 // pred_fallthru
      _
    // Predicated region
    $region82: #{tpu_custom_call.1} parent=1 // pred_check
      _
    $region83: #{tpu_custom_call.1} parent=1 // pred_check_branch
      %152 = sbr.rel (0) target = $region85
    $region84: #{tpu_custom_call.1} parent=1 // pred_region
      %153 = dma.done [#allocation15], 1024
    $region85: #{tpu_custom_call.1} parent=1 // pred_fallthru
      _
    // Predicated region
    $region86: #{tpu_custom_call.1} parent=1 // pred_check
      _
    $region87: #{tpu_custom_call.1} parent=1 // pred_check_branch
      %155 = sbr.rel (0) target = $region89
    $region88: #{tpu_custom_call.1} parent=1 // pred_region
      %156 = dma.done [#allocation15], 1024
    $region89: #{tpu_custom_call.1} parent=1 // pred_fallthru
      _
    // Predicated region
    $region90: #{tpu_custom_call.1} parent=1 // pred_check
      _
    $region91: #{tpu_custom_call.1} parent=1 // pred_check_branch
      %158 = sbr.rel (0) target = $region93
    $region92: #{tpu_custom_call.1} parent=1 // pred_region
      %159 = dma.done [#allocation18], 1024
    $region93: #{tpu_custom_call.1} parent=1 // pred_fallthru
      _
    %p161 = scmp.eq.s32.totalorder 0, 0
    // Predicated region
    $region94: #{tpu_custom_call.1} parent=1 // pred_check
      %p162 = pneg %p161
    $region95: #{tpu_custom_call.1} parent=1 // pred_check_branch
      %164 = sbr.rel (%p162) target = $region97
    $region96: #{tpu_custom_call.1} parent=1 // pred_region
      %165 = vst [vmem:[#allocation4] sm:$0xff] 0.0
      %166 = vst [vmem:[#allocation4 + $0x8] sm:$0xff] 0.0
      %167 = vst [vmem:[#allocation4 + $0x10] sm:$0xff] 0.0
      %168 = vst [vmem:[#allocation4 + $0x18] sm:$0xff] 0.0
    $region97: #{tpu_custom_call.1} parent=1 // pred_fallthru
      _
    %v169 = vld [vmem:[#allocation5] sm:$0xf]
    %v170 = vld [vmem:[#allocation5 + $0x4] sm:$0xf]
    %v171 = vld [vmem:[#allocation5 + $0x8] sm:$0xf]
    %v172 = vld [vmem:[#allocation5 + $0xc] sm:$0xf]
    %v173 = vld [vmem:[#allocation5 + $0x10] sm:$0xf]
    %v174 = vld [vmem:[#allocation5 + $0x14] sm:$0xf]
    %v175 = vld [vmem:[#allocation5 + $0x18] sm:$0xf]
    %v176 = vld [vmem:[#allocation5 + $0x1c] sm:$0xf]
    %v177 = vld [vmem:[#allocation5 + $0x20] sm:$0xf]
    %v178 = vld [vmem:[#allocation5 + $0x24] sm:$0xf]
    %v179 = vld [vmem:[#allocation5 + $0x28] sm:$0xf]
    %v180 = vld [vmem:[#allocation5 + $0x2c] sm:$0xf]
    %v181 = vld [vmem:[#allocation5 + $0x30] sm:$0xf]
    %v182 = vld [vmem:[#allocation5 + $0x34] sm:$0xf]
    %v183 = vld [vmem:[#allocation5 + $0x38] sm:$0xf]
    %v184 = vld [vmem:[#allocation5 + $0x3c] sm:$0xf]
    %v185 = vld [vmem:[#allocation8] sm:$0xff]
    %v186 = vld [vmem:[#allocation8 + $0x8] sm:$0xf]
    %v187 = vld [vmem:[#allocation8 + $0xc] sm:$0xff]
    %v188 = vld [vmem:[#allocation8 + $0x14] sm:$0xf]
    %v189 = vld [vmem:[#allocation8 + $0x18] sm:$0xff]
    %v190 = vld [vmem:[#allocation8 + $0x20] sm:$0xf]
    %v191 = vld [vmem:[#allocation8 + $0x24] sm:$0xff]
    %v192 = vld [vmem:[#allocation8 + $0x2c] sm:$0xf]
    %v193 = vld [vmem:[#allocation8 + $0x30] sm:$0xff]
    %v194 = vld [vmem:[#allocation8 + $0x38] sm:$0xf]
    %v195 = vld [vmem:[#allocation8 + $0x3c] sm:$0xff]
    %v196 = vld [vmem:[#allocation8 + $0x44] sm:$0xf]
    %v197 = vld [vmem:[#allocation8 + $0x48] sm:$0xff]
    %v198 = vld [vmem:[#allocation8 + $0x50] sm:$0xf]
    %v199 = vld [vmem:[#allocation8 + $0x54] sm:$0xff]
    %v200 = vld [vmem:[#allocation8 + $0x5c] sm:$0xf]
    %v201 = vld [vmem:[#allocation8 + $0x60] sm:$0xff]
    %v202 = vld [vmem:[#allocation8 + $0x68] sm:$0xf]
    %v203 = vld [vmem:[#allocation8 + $0x6c] sm:$0xff]
    %v204 = vld [vmem:[#allocation8 + $0x74] sm:$0xf]
    %v205 = vld [vmem:[#allocation8 + $0x78] sm:$0xff]
    %v206 = vld [vmem:[#allocation8 + $0x80] sm:$0xf]
    %v207 = vld [vmem:[#allocation8 + $0x84] sm:$0xff]
    %v208 = vld [vmem:[#allocation8 + $0x8c] sm:$0xf]
    %v209 = vld [vmem:[#allocation8 + $0x90] sm:$0xff]
    %v210 = vld [vmem:[#allocation8 + $0x98] sm:$0xf]
    %v211 = vld [vmem:[#allocation8 + $0x9c] sm:$0xff]
    %v212 = vld [vmem:[#allocation8 + $0xa4] sm:$0xf]
    %v213 = vld [vmem:[#allocation8 + $0xa8] sm:$0xff]
    %v214 = vld [vmem:[#allocation8 + $0xb0] sm:$0xf]
    %v215 = vld [vmem:[#allocation8 + $0xb4] sm:$0xff]
    %v216 = vld [vmem:[#allocation8 + $0xbc] sm:$0xf]
    %v217 = vld [vmem:[%s3] sm:$0x7]
    %v219 = vlaneseq
    %v220 = vshrl.u32 %v219, 7
    %v221 = vsub.s32 0, %v220
    %v222 = vrot.slane %v217, %v221
    %v223 = vlaneseq
    %v224 = vshrl.u32 %v223, 7
    %v225 = vsub.s32 1, %v224
    %v226 = vrot.slane %v217, %v225
    %v227 = vlaneseq
    %v228 = vshrl.u32 %v227, 7
    %v229 = vsub.s32 2, %v228
    %v230 = vrot.slane %v217, %v229
    %v250 = vunpack.c.l.b16 %v169
    %v251 = vunpack.c.l.b16 %v170
    %v252 = vunpack.c.l.b16 %v171
    %v253 = vunpack.c.l.b16 %v172
    %v254 = vunpack.c.l.b16 %v173
    %v255 = vunpack.c.l.b16 %v174
    %v256 = vunpack.c.l.b16 %v175
    %v257 = vunpack.c.l.b16 %v176
    %v258 = vunpack.c.l.b16 %v177
    %v259 = vunpack.c.l.b16 %v178
    %v260 = vunpack.c.l.b16 %v179
    %v261 = vunpack.c.l.b16 %v180
    %v262 = vunpack.c.l.b16 %v181
    %v263 = vunpack.c.l.b16 %v182
    %v264 = vunpack.c.l.b16 %v183
    %v265 = vunpack.c.l.b16 %v184
    %v266 = vpack.c.b16 %v251, %v250
    %v267 = vpack.c.b16 %v253, %v252
    %v268 = vpack.c.b16 %v255, %v254
    %v269 = vpack.c.b16 %v257, %v256
    %v270 = vpack.c.b16 %v259, %v258
    %v271 = vpack.c.b16 %v261, %v260
    %v272 = vpack.c.b16 %v263, %v262
    %v273 = vpack.c.b16 %v265, %v264
    %v314 = vunpack.c.l.b16 %v185
    %v315 = vunpack.c.h.b16 %v185
    %v316 = vunpack.c.l.b16 %v186
    %v317 = vunpack.c.l.b16 %v187
    %v318 = vunpack.c.h.b16 %v187
    %v319 = vunpack.c.l.b16 %v188
    %v320 = vunpack.c.l.b16 %v189
    %v321 = vunpack.c.h.b16 %v189
    %v322 = vunpack.c.l.b16 %v190
    %v323 = vunpack.c.l.b16 %v191
    %v324 = vunpack.c.h.b16 %v191
    %v325 = vunpack.c.l.b16 %v192
    %v326 = vunpack.c.l.b16 %v193
    %v327 = vunpack.c.h.b16 %v193
    %v328 = vunpack.c.l.b16 %v194
    %v329 = vunpack.c.l.b16 %v195
    %v330 = vunpack.c.h.b16 %v195
    %v331 = vunpack.c.l.b16 %v196
    %v332 = vunpack.c.l.b16 %v197
    %v333 = vunpack.c.h.b16 %v197
    %v334 = vunpack.c.l.b16 %v198
    %v335 = vunpack.c.l.b16 %v199
    %v336 = vunpack.c.h.b16 %v199
    %v337 = vunpack.c.l.b16 %v200
    %v338 = vunpack.c.l.b16 %v201
    %v339 = vunpack.c.h.b16 %v201
    %v340 = vunpack.c.l.b16 %v202
    %v341 = vunpack.c.l.b16 %v203
    %v342 = vunpack.c.h.b16 %v203
    %v343 = vunpack.c.l.b16 %v204
    %v344 = vunpack.c.l.b16 %v205
    %v345 = vunpack.c.h.b16 %v205
    %v346 = vunpack.c.l.b16 %v206
    %v347 = vunpack.c.l.b16 %v207
    %v348 = vunpack.c.h.b16 %v207
    %v349 = vunpack.c.l.b16 %v208
    %v350 = vunpack.c.l.b16 %v209
    %v351 = vunpack.c.h.b16 %v209
    %v352 = vunpack.c.l.b16 %v210
    %v353 = vunpack.c.l.b16 %v211
    %v354 = vunpack.c.h.b16 %v211
    %v355 = vunpack.c.l.b16 %v212
    %v356 = vunpack.c.l.b16 %v213
    %v357 = vunpack.c.h.b16 %v213
    %v358 = vunpack.c.l.b16 %v214
    %v359 = vunpack.c.l.b16 %v215
    %v360 = vunpack.c.h.b16 %v215
    %v361 = vunpack.c.l.b16 %v216
    %v362 = vpack.c.b16 %v317, %v314
    %v363 = vpack.c.b16 %v318, %v315
    %v364 = vpack.c.b16 %v319, %v316
    %v365 = vpack.c.b16 %v323, %v320
    %v366 = vpack.c.b16 %v324, %v321
    %v367 = vpack.c.b16 %v325, %v322
    %v368 = vpack.c.b16 %v329, %v326
    %v369 = vpack.c.b16 %v330, %v327
    %v370 = vpack.c.b16 %v331, %v328
    %v371 = vpack.c.b16 %v335, %v332
    %v372 = vpack.c.b16 %v336, %v333
    %v373 = vpack.c.b16 %v337, %v334
    %v374 = vpack.c.b16 %v341, %v338
    %v375 = vpack.c.b16 %v342, %v339
    %v376 = vpack.c.b16 %v343, %v340
    %v377 = vpack.c.b16 %v347, %v344
    %v378 = vpack.c.b16 %v348, %v345
    %v379 = vpack.c.b16 %v349, %v346
    %v380 = vpack.c.b16 %v353, %v350
    %v381 = vpack.c.b16 %v354, %v351
    %v382 = vpack.c.b16 %v355, %v352
    %v383 = vpack.c.b16 %v359, %v356
    %v384 = vpack.c.b16 %v360, %v357
    %v385 = vpack.c.b16 %v361, %v358
    %410 = vmatprep.subr.bf16.mxu0 %v363
    %411 = vmatpush1.bf16.msra.mxu0 %v362
    %412 = vmatprep.subr.bf16.mxu0 %v366
    %413 = vmatpush1.bf16.msra.mxu0 %v365
    %414 = vmatprep.subr.bf16.mxu0 %v369
    %415 = vmatpush1.bf16.msra.mxu0 %v368
    %416 = vmatprep.subr.bf16.mxu0 %v372
    %417 = vmatpush1.bf16.msra.mxu0 %v371
    %418 = vmatprep.subr.bf16.mxu0 %v375
    %419 = vmatpush1.bf16.msra.mxu0 %v374
    %420 = vmatprep.subr.bf16.mxu0 %v378
    %421 = vmatpush1.bf16.msra.mxu0 %v377
    %422 = vmatprep.subr.bf16.mxu0 %v381
    %423 = vmatpush1.bf16.msra.mxu0 %v380
    %424 = vmatprep.subr.bf16.mxu0 %v384
    %425 = vmatpush1.bf16.msra.mxu0 %v383
    %426 = vmatprep.subr.bf16.mxu0 0
    %427 = vmatpush1.bf16.msra.mxu0 0
    %428 = vmatprep.subr.bf16.mxu0 0
    %429 = vmatpush1.bf16.msra.mxu0 0
    %430 = vmatprep.subr.bf16.mxu0 0
    %431 = vmatpush1.bf16.msra.mxu0 0
    %432 = vmatprep.subr.bf16.mxu0 0
    %433 = vmatpush1.bf16.msra.mxu0 0
    %434 = vmatprep.subr.bf16.mxu0 0
    %435 = vmatpush1.bf16.msra.mxu0 0
    %436 = vmatprep.subr.bf16.mxu0 0
    %437 = vmatpush1.bf16.msra.mxu0 0
    %438 = vmatprep.subr.bf16.mxu0 0
    %439 = vmatpush1.bf16.msra.mxu0 0
    %440 = vmatprep.subr.bf16.mxu0 0
    %441 = vmatpush1.bf16.msra.mxu0 0
    %442 = vmatprep.mubr.bf16.mxu0 0
    %443 = vmatmul.mubr.bf16.gmra.mrb[0].mxu0 %v266
    %v444 = vpop.f32.mrb[0].mxu0
    %v445 = vadd.f32 %v222, %v444
    %v446 = vpop.f32.mrb[0].mxu0
    %v447 = vadd.f32 %v226, %v446
    %v448 = vpop.f32.mrb[0].mxu0
    %v449 = vadd.f32 %v222, %v448
    %v450 = vpop.f32.mrb[0].mxu0
    %v451 = vadd.f32 %v226, %v450
    %452 = vmatprep.mubr.bf16.mxu0 0
    %453 = vmatmul.mubr.bf16.gmra.mrb[0].mxu0 %v267
    %v454 = vpop.f32.mrb[0].mxu0
    %v455 = vadd.f32 %v222, %v454
    %v456 = vpop.f32.mrb[0].mxu0
    %v457 = vadd.f32 %v226, %v456
    %v458 = vpop.f32.mrb[0].mxu0
    %v459 = vadd.f32 %v222, %v458
    %v460 = vpop.f32.mrb[0].mxu0
    %v461 = vadd.f32 %v226, %v460
    %462 = vmatprep.mubr.bf16.mxu0 0
    %463 = vmatmul.mubr.bf16.gmra.mrb[0].mxu0 %v268
    %v464 = vpop.f32.mrb[0].mxu0
    %v465 = vadd.f32 %v222, %v464
    %v466 = vpop.f32.mrb[0].mxu0
    %v467 = vadd.f32 %v226, %v466
    %v468 = vpop.f32.mrb[0].mxu0
    %v469 = vadd.f32 %v222, %v468
    %v470 = vpop.f32.mrb[0].mxu0
    %v471 = vadd.f32 %v226, %v470
    %472 = vmatprep.mubr.bf16.mxu0 0
    %473 = vmatmul.mubr.bf16.gmra.mrb[0].mxu0 %v269
    %v474 = vpop.f32.mrb[0].mxu0
    %v475 = vadd.f32 %v222, %v474
    %v476 = vpop.f32.mrb[0].mxu0
    %v477 = vadd.f32 %v226, %v476
    %v478 = vpop.f32.mrb[0].mxu0
    %v479 = vadd.f32 %v222, %v478
    %v480 = vpop.f32.mrb[0].mxu0
    %v481 = vadd.f32 %v226, %v480
    %482 = vmatprep.mubr.bf16.mxu0 0
    %483 = vmatmul.mubr.bf16.gmra.mrb[0].mxu0 %v270
    %v484 = vpop.f32.mrb[0].mxu0
    %v485 = vadd.f32 %v222, %v484
    %v486 = vpop.f32.mrb[0].mxu0
    %v487 = vadd.f32 %v226, %v486
    %v488 = vpop.f32.mrb[0].mxu0
    %v489 = vadd.f32 %v222, %v488
    %v490 = vpop.f32.mrb[0].mxu0
    %v491 = vadd.f32 %v226, %v490
    %492 = vmatprep.mubr.bf16.mxu0 0
    %493 = vmatmul.mubr.bf16.gmra.mrb[0].mxu0 %v271
    %v494 = vpop.f32.mrb[0].mxu0
    %v495 = vadd.f32 %v222, %v494
    %v496 = vpop.f32.mrb[0].mxu0
    %v497 = vadd.f32 %v226, %v496
    %v498 = vpop.f32.mrb[0].mxu0
    %v499 = vadd.f32 %v222, %v498
    %v500 = vpop.f32.mrb[0].mxu0
    %v501 = vadd.f32 %v226, %v500
    %502 = vmatprep.mubr.bf16.mxu0 0
    %503 = vmatmul.mubr.bf16.gmra.mrb[0].mxu0 %v272
    %v504 = vpop.f32.mrb[0].mxu0
    %v505 = vadd.f32 %v222, %v504
    %v506 = vpop.f32.mrb[0].mxu0
    %v507 = vadd.f32 %v226, %v506
    %v508 = vpop.f32.mrb[0].mxu0
    %v509 = vadd.f32 %v222, %v508
    %v510 = vpop.f32.mrb[0].mxu0
    %v511 = vadd.f32 %v226, %v510
    %512 = vmatprep.mubr.bf16.mxu0 0
    %513 = vmatmul.mubr.bf16.gmra.mrb[0].mxu0 %v273
    %v514 = vpop.f32.mrb[0].mxu0
    %v515 = vadd.f32 %v222, %v514
    %v516 = vpop.f32.mrb[0].mxu0
    %v517 = vadd.f32 %v226, %v516
    %v518 = vpop.f32.mrb[0].mxu0
    %v519 = vadd.f32 %v222, %v518
    %v520 = vpop.f32.mrb[0].mxu0
    %v521 = vadd.f32 %v226, %v520
    %522 = vdwg.mxu0
    %523 = vmatprep.subr.bf16.mxu0 0
    %524 = vmatpush1.bf16.msra.mxu0 %v364
    %525 = vmatprep.subr.bf16.mxu0 0
    %526 = vmatpush1.bf16.msra.mxu0 %v367
    %527 = vmatprep.subr.bf16.mxu0 0
    %528 = vmatpush1.bf16.msra.mxu0 %v370
    %529 = vmatprep.subr.bf16.mxu0 0
    %530 = vmatpush1.bf16.msra.mxu0 %v373
    %531 = vmatprep.subr.bf16.mxu0 0
    %532 = vmatpush1.bf16.msra.mxu0 %v376
    %533 = vmatprep.subr.bf16.mxu0 0
    %534 = vmatpush1.bf16.msra.mxu0 %v379
    %535 = vmatprep.subr.bf16.mxu0 0
    %536 = vmatpush1.bf16.msra.mxu0 %v382
    %537 = vmatprep.subr.bf16.mxu0 0
    %538 = vmatpush1.bf16.msra.mxu0 %v385
    %539 = vmatprep.subr.bf16.mxu0 0
    %540 = vmatpush1.bf16.msra.mxu0 0
    %541 = vmatprep.subr.bf16.mxu0 0
    %542 = vmatpush1.bf16.msra.mxu0 0
    %543 = vmatprep.subr.bf16.mxu0 0
    %544 = vmatpush1.bf16.msra.mxu0 0
    %545 = vmatprep.subr.bf16.mxu0 0
    %546 = vmatpush1.bf16.msra.mxu0 0
    %547 = vmatprep.subr.bf16.mxu0 0
    %548 = vmatpush1.bf16.msra.mxu0 0
    %549 = vmatprep.subr.bf16.mxu0 0
    %550 = vmatpush1.bf16.msra.mxu0 0
    %551 = vmatprep.subr.bf16.mxu0 0
    %552 = vmatpush1.bf16.msra.mxu0 0
    %553 = vmatprep.subr.bf16.mxu0 0
    %554 = vmatpush1.bf16.msra.mxu0 0
    %555 = vmatprep.mubr.bf16.mxu0 0
    %556 = vmatmul.mubr.bf16.gmra.mrb[0].mxu0 %v266
    %v557 = vpop.f32.mrb[0].mxu0
    %v558 = vadd.f32 %v230, %v557
    %v559 = vpop.f32.mrb[0].mxu0
    %v560 = vpop.f32.mrb[0].mxu0
    %v561 = vadd.f32 %v230, %v560
    %v562 = vpop.f32.mrb[0].mxu0
    %563 = vmatprep.mubr.bf16.mxu0 0
    %564 = vmatmul.mubr.bf16.gmra.mrb[0].mxu0 %v267
    %v565 = vpop.f32.mrb[0].mxu0
    %v566 = vadd.f32 %v230, %v565
    %v567 = vpop.f32.mrb[0].mxu0
    %v568 = vpop.f32.mrb[0].mxu0
    %v569 = vadd.f32 %v230, %v568
    %v570 = vpop.f32.mrb[0].mxu0
    %571 = vmatprep.mubr.bf16.mxu0 0
    %572 = vmatmul.mubr.bf16.gmra.mrb[0].mxu0 %v268
    %v573 = vpop.f32.mrb[0].mxu0
    %v574 = vadd.f32 %v230, %v573
    %v575 = vpop.f32.mrb[0].mxu0
    %v576 = vpop.f32.mrb[0].mxu0
    %v577 = vadd.f32 %v230, %v576
    %v578 = vpop.f32.mrb[0].mxu0
    %579 = vmatprep.mubr.bf16.mxu0 0
    %580 = vmatmul.mubr.bf16.gmra.mrb[0].mxu0 %v269
    %v581 = vpop.f32.mrb[0].mxu0
    %v582 = vadd.f32 %v230, %v581
    %v583 = vpop.f32.mrb[0].mxu0
    %v584 = vpop.f32.mrb[0].mxu0
    %v585 = vadd.f32 %v230, %v584
    %v586 = vpop.f32.mrb[0].mxu0
    %587 = vmatprep.mubr.bf16.mxu0 0
    %588 = vmatmul.mubr.bf16.gmra.mrb[0].mxu0 %v270
    %v589 = vpop.f32.mrb[0].mxu0
    %v590 = vadd.f32 %v230, %v589
    %v591 = vpop.f32.mrb[0].mxu0
    %v592 = vpop.f32.mrb[0].mxu0
    %v593 = vadd.f32 %v230, %v592
    %v594 = vpop.f32.mrb[0].mxu0
    %595 = vmatprep.mubr.bf16.mxu0 0
    %596 = vmatmul.mubr.bf16.gmra.mrb[0].mxu0 %v271
    %v597 = vpop.f32.mrb[0].mxu0
    %v598 = vadd.f32 %v230, %v597
    %v599 = vpop.f32.mrb[0].mxu0
    %v600 = vpop.f32.mrb[0].mxu0
    %v601 = vadd.f32 %v230, %v600
    %v602 = vpop.f32.mrb[0].mxu0
    %603 = vmatprep.mubr.bf16.mxu0 0
    %604 = vmatmul.mubr.bf16.gmra.mrb[0].mxu0 %v272
    %v605 = vpop.f32.mrb[0].mxu0
    %v606 = vadd.f32 %v230, %v605
    %v607 = vpop.f32.mrb[0].mxu0
    %v608 = vpop.f32.mrb[0].mxu0
    %v609 = vadd.f32 %v230, %v608
    %v610 = vpop.f32.mrb[0].mxu0
    %611 = vmatprep.mubr.bf16.mxu0 0
    %612 = vmatmul.mubr.bf16.gmra.mrb[0].mxu0 %v273
    %v613 = vpop.f32.mrb[0].mxu0
    %v614 = vadd.f32 %v230, %v613
    %v615 = vpop.f32.mrb[0].mxu0
    %v616 = vpop.f32.mrb[0].mxu0
    %v617 = vadd.f32 %v230, %v616
    %v618 = vpop.f32.mrb[0].mxu0
    %619 = vdwg.mxu0
    %620 = vst [vmem:[#allocation2] sm:$0xff] %v445
    %621 = vst [vmem:[#allocation2 + $0x8] sm:$0xff] %v447
    %622 = vst [vmem:[#allocation2 + $0x10] sm:$0xff] %v558
    %623 = vst [vmem:[#allocation2 + $0x18] sm:$0xff] %v449
    %624 = vst [vmem:[#allocation2 + $0x20] sm:$0xff] %v451
    %625 = vst [vmem:[#allocation2 + $0x28] sm:$0xff] %v561
    %626 = vst [vmem:[#allocation2 + $0x30] sm:$0xff] %v455
    %627 = vst [vmem:[#allocation2 + $0x38] sm:$0xff] %v457
    %628 = vst [vmem:[#allocation2 + $0x40] sm:$0xff] %v566
    %629 = vst [vmem:[#allocation2 + $0x48] sm:$0xff] %v459
    %630 = vst [vmem:[#allocation2 + $0x50] sm:$0xff] %v461
    %631 = vst [vmem:[#allocation2 + $0x58] sm:$0xff] %v569
    %632 = vst [vmem:[#allocation2 + $0x60] sm:$0xff] %v465
    %633 = vst [vmem:[#allocation2 + $0x68] sm:$0xff] %v467
    %634 = vst [vmem:[#allocation2 + $0x70] sm:$0xff] %v574
    %635 = vst [vmem:[#allocation2 + $0x78] sm:$0xff] %v469
    %636 = vst [vmem:[#allocation2 + $0x80] sm:$0xff] %v471
    %637 = vst [vmem:[#allocation2 + $0x88] sm:$0xff] %v577
    %638 = vst [vmem:[#allocation2 + $0x90] sm:$0xff] %v475
    %639 = vst [vmem:[#allocation2 + $0x98] sm:$0xff] %v477
    %640 = vst [vmem:[#allocation2 + $0xa0] sm:$0xff] %v582
    %641 = vst [vmem:[#allocation2 + $0xa8] sm:$0xff] %v479
    %642 = vst [vmem:[#allocation2 + $0xb0] sm:$0xff] %v481
    %643 = vst [vmem:[#allocation2 + $0xb8] sm:$0xff] %v585
    %644 = vst [vmem:[#allocation2 + $0xc0] sm:$0xff] %v485
    %645 = vst [vmem:[#allocation2 + $0xc8] sm:$0xff] %v487
    %646 = vst [vmem:[#allocation2 + $0xd0] sm:$0xff] %v590
    %647 = vst [vmem:[#allocation2 + $0xd8] sm:$0xff] %v489
    %648 = vst [vmem:[#allocation2 + $0xe0] sm:$0xff] %v491
    %649 = vst [vmem:[#allocation2 + $0xe8] sm:$0xff] %v593
    %650 = vst [vmem:[#allocation2 + $0xf0] sm:$0xff] %v495
    %651 = vst [vmem:[#allocation2 + $0xf8] sm:$0xff] %v497
    %652 = vst [vmem:[#allocation2 + $0x100] sm:$0xff] %v598
    %653 = vst [vmem:[#allocation2 + $0x108] sm:$0xff] %v499
    %654 = vst [vmem:[#allocation2 + $0x110] sm:$0xff] %v501
    %655 = vst [vmem:[#allocation2 + $0x118] sm:$0xff] %v601
    %656 = vst [vmem:[#allocation2 + $0x120] sm:$0xff] %v505
    %657 = vst [vmem:[#allocation2 + $0x128] sm:$0xff] %v507
    %658 = vst [vmem:[#allocation2 + $0x130] sm:$0xff] %v606
    %659 = vst [vmem:[#allocation2 + $0x138] sm:$0xff] %v509
    %660 = vst [vmem:[#allocation2 + $0x140] sm:$0xff] %v511
    %661 = vst [vmem:[#allocation2 + $0x148] sm:$0xff] %v609
    %662 = vst [vmem:[#allocation2 + $0x150] sm:$0xff] %v515
    %663 = vst [vmem:[#allocation2 + $0x158] sm:$0xff] %v517
    %664 = vst [vmem:[#allocation2 + $0x160] sm:$0xff] %v614
    %665 = vst [vmem:[#allocation2 + $0x168] sm:$0xff] %v519
    %666 = vst [vmem:[#allocation2 + $0x170] sm:$0xff] %v521
    %667 = vst [vmem:[#allocation2 + $0x178] sm:$0xff] %v617
    %v668 = vld [vmem:[%s4] sm:$0x1]
    %v670 = vlaneseq
    %v671 = vshrl.u32 %v670, 7
    %v672 = vsub.s32 0, %v671
    %v673 = vrot.slane %v668, %v672
    %v675 = vld [vmem:[#allocation4] sm:$0xff]
    %v676 = vld [vmem:[#allocation4 + $0x8] sm:$0xff]
    %v677 = vld [vmem:[#allocation2] sm:$0xff]
    %v678 = vld [vmem:[#allocation2 + $0x8] sm:$0xff]
    %v679 = vld [vmem:[#allocation2 + $0x10] sm:$0xff]
    %v680 = vld [vmem:[#allocation2 + $0x18] sm:$0xff]
    %v681 = vld [vmem:[#allocation2 + $0x20] sm:$0xff]
    %v682 = vld [vmem:[#allocation2 + $0x28] sm:$0xff]
    %v683 = vpack.c.bf16 %v676, %v675
    %v684 = vld [vmem:[#allocation10] sm:$0xff]
    %v685 = vld [vmem:[#allocation10 + $0x8] sm:$0xf]
    %v686 = vld [vmem:[#allocation10 + $0xc] sm:$0xff]
    %v687 = vld [vmem:[#allocation10 + $0x14] sm:$0xf]
    %v688 = vld [vmem:[#allocation10 + $0x18] sm:$0xff]
    %v689 = vld [vmem:[#allocation10 + $0x20] sm:$0xf]
    %v690 = vld [vmem:[#allocation10 + $0x24] sm:$0xff]
    %v691 = vld [vmem:[#allocation10 + $0x2c] sm:$0xf]
    %v692 = vld [vmem:[#allocation10 + $0x30] sm:$0xff]
    %v693 = vld [vmem:[#allocation10 + $0x38] sm:$0xf]
    %v694 = vld [vmem:[#allocation10 + $0x3c] sm:$0xff]
    %v695 = vld [vmem:[#allocation10 + $0x44] sm:$0xf]
    %v696 = vld [vmem:[#allocation10 + $0x48] sm:$0xff]
    %v697 = vld [vmem:[#allocation10 + $0x50] sm:$0xf]
    %v698 = vld [vmem:[#allocation10 + $0x54] sm:$0xff]
    %v699 = vld [vmem:[#allocation10 + $0x5c] sm:$0xf]
    %v700 = vld [vmem:[#allocation10 + $0x60] sm:$0xff]
    %v701 = vld [vmem:[#allocation10 + $0x68] sm:$0xf]
    %v702 = vld [vmem:[#allocation10 + $0x6c] sm:$0xff]
    %v703 = vld [vmem:[#allocation10 + $0x74] sm:$0xf]
    %v704 = vld [vmem:[#allocation10 + $0x78] sm:$0xff]
    %v705 = vld [vmem:[#allocation10 + $0x80] sm:$0xf]
    %v706 = vld [vmem:[#allocation10 + $0x84] sm:$0xff]
    %v707 = vld [vmem:[#allocation10 + $0x8c] sm:$0xf]
    %v708 = vld [vmem:[#allocation10 + $0x90] sm:$0xff]
    %v709 = vld [vmem:[#allocation10 + $0x98] sm:$0xf]
    %v710 = vld [vmem:[#allocation10 + $0x9c] sm:$0xff]
    %v711 = vld [vmem:[#allocation10 + $0xa4] sm:$0xf]
    %v712 = vld [vmem:[#allocation10 + $0xa8] sm:$0xff]
    %v713 = vld [vmem:[#allocation10 + $0xb0] sm:$0xf]
    %v714 = vld [vmem:[#allocation10 + $0xb4] sm:$0xff]
    %v715 = vld [vmem:[#allocation10 + $0xbc] sm:$0xf]
    %v748 = vunpack.c.l.b16 %v684
    %v749 = vunpack.c.h.b16 %v684
    %v750 = vunpack.c.l.b16 %v685
    %v751 = vunpack.c.l.b16 %v686
    %v752 = vunpack.c.h.b16 %v686
    %v753 = vunpack.c.l.b16 %v687
    %v754 = vunpack.c.l.b16 %v688
    %v755 = vunpack.c.h.b16 %v688
    %v756 = vunpack.c.l.b16 %v689
    %v757 = vunpack.c.l.b16 %v690
    %v758 = vunpack.c.h.b16 %v690
    %v759 = vunpack.c.l.b16 %v691
    %v760 = vunpack.c.l.b16 %v692
    %v761 = vunpack.c.h.b16 %v692
    %v762 = vunpack.c.l.b16 %v693
    %v763 = vunpack.c.l.b16 %v694
    %v764 = vunpack.c.h.b16 %v694
    %v765 = vunpack.c.l.b16 %v695
    %v766 = vunpack.c.l.b16 %v696
    %v767 = vunpack.c.h.b16 %v696
    %v768 = vunpack.c.l.b16 %v697
    %v769 = vunpack.c.l.b16 %v698
    %v770 = vunpack.c.h.b16 %v698
    %v771 = vunpack.c.l.b16 %v699
    %v772 = vunpack.c.l.b16 %v700
    %v773 = vunpack.c.h.b16 %v700
    %v774 = vunpack.c.l.b16 %v701
    %v775 = vunpack.c.l.b16 %v702
    %v776 = vunpack.c.h.b16 %v702
    %v777 = vunpack.c.l.b16 %v703
    %v778 = vunpack.c.l.b16 %v704
    %v779 = vunpack.c.h.b16 %v704
    %v780 = vunpack.c.l.b16 %v705
    %v781 = vunpack.c.l.b16 %v706
    %v782 = vunpack.c.h.b16 %v706
    %v783 = vunpack.c.l.b16 %v707
    %v784 = vunpack.c.l.b16 %v708
    %v785 = vunpack.c.h.b16 %v708
    %v786 = vunpack.c.l.b16 %v709
    %v787 = vunpack.c.l.b16 %v710
    %v788 = vunpack.c.h.b16 %v710
    %v789 = vunpack.c.l.b16 %v711
    %v790 = vunpack.c.l.b16 %v712
    %v791 = vunpack.c.h.b16 %v712
    %v792 = vunpack.c.l.b16 %v713
    %v793 = vunpack.c.l.b16 %v714
    %v794 = vunpack.c.h.b16 %v714
    %v795 = vunpack.c.l.b16 %v715
    %v796 = vpack.c.b16 %v751, %v748
    %v797 = vpack.c.b16 %v752, %v749
    %v798 = vpack.c.b16 %v753, %v750
    %v799 = vpack.c.b16 %v757, %v754
    %v800 = vpack.c.b16 %v758, %v755
    %v801 = vpack.c.b16 %v759, %v756
    %v802 = vpack.c.b16 %v763, %v760
    %v803 = vpack.c.b16 %v764, %v761
    %v804 = vpack.c.b16 %v765, %v762
    %v805 = vpack.c.b16 %v769, %v766
    %v806 = vpack.c.b16 %v770, %v767
    %v807 = vpack.c.b16 %v771, %v768
    %v808 = vpack.c.b16 %v775, %v772
    %v809 = vpack.c.b16 %v776, %v773
    %v810 = vpack.c.b16 %v777, %v774
    %v811 = vpack.c.b16 %v781, %v778
    %v812 = vpack.c.b16 %v782, %v779
    %v813 = vpack.c.b16 %v783, %v780
    %v814 = vpack.c.b16 %v787, %v784
    %v815 = vpack.c.b16 %v788, %v785
    %v816 = vpack.c.b16 %v789, %v786
    %v817 = vpack.c.b16 %v793, %v790
    %v818 = vpack.c.b16 %v794, %v791
    %v819 = vpack.c.b16 %v795, %v792
    %844 = vmatprep.subr.bf16.mxu0 %v797
    %845 = vmatpush1.bf16.msra.mxu0 %v796
    %846 = vmatprep.subr.bf16.mxu0 %v800
    %847 = vmatpush1.bf16.msra.mxu0 %v799
    %848 = vmatprep.subr.bf16.mxu0 %v803
    %849 = vmatpush1.bf16.msra.mxu0 %v802
    %850 = vmatprep.subr.bf16.mxu0 %v806
    %851 = vmatpush1.bf16.msra.mxu0 %v805
    %852 = vmatprep.subr.bf16.mxu0 %v809
    %853 = vmatpush1.bf16.msra.mxu0 %v808
    %854 = vmatprep.subr.bf16.mxu0 %v812
    %855 = vmatpush1.bf16.msra.mxu0 %v811
    %856 = vmatprep.subr.bf16.mxu0 %v815
    %857 = vmatpush1.bf16.msra.mxu0 %v814
    %858 = vmatprep.subr.bf16.mxu0 %v818
    %859 = vmatpush1.bf16.msra.mxu0 %v817
    %860 = vmatprep.subr.bf16.mxu0 0
    %861 = vmatpush1.bf16.msra.mxu0 0
    %862 = vmatprep.subr.bf16.mxu0 0
    %863 = vmatpush1.bf16.msra.mxu0 0
    %864 = vmatprep.subr.bf16.mxu0 0
    %865 = vmatpush1.bf16.msra.mxu0 0
    %866 = vmatprep.subr.bf16.mxu0 0
    %867 = vmatpush1.bf16.msra.mxu0 0
    %868 = vmatprep.subr.bf16.mxu0 0
    %869 = vmatpush1.bf16.msra.mxu0 0
    %870 = vmatprep.subr.bf16.mxu0 0
    %871 = vmatpush1.bf16.msra.mxu0 0
    %872 = vmatprep.subr.bf16.mxu0 0
    %873 = vmatpush1.bf16.msra.mxu0 0
    %874 = vmatprep.subr.bf16.mxu0 0
    %875 = vmatpush1.bf16.msra.mxu0 0
    %876 = vmatprep.mubr.bf16.mxu0 0
    %877 = vmatmul.mubr.bf16.gmra.mrb[0].mxu0 %v683
    %v878 = vpop.f32.mrb[0].mxu0
    %v879 = vadd.f32 0.0, %v878
    %v880 = vpop.f32.mrb[0].mxu0
    %v881 = vadd.f32 0.0, %v880
    %v882 = vpop.f32.mrb[0].mxu0
    %v883 = vadd.f32 0.0, %v882
    %v884 = vpop.f32.mrb[0].mxu0
    %v885 = vadd.f32 0.0, %v884
    %886 = vdwg.mxu0
    %887 = vmatprep.subr.bf16.mxu0 0
    %888 = vmatpush1.bf16.msra.mxu0 %v798
    %889 = vmatprep.subr.bf16.mxu0 0
    %890 = vmatpush1.bf16.msra.mxu0 %v801
    %891 = vmatprep.subr.bf16.mxu0 0
    %892 = vmatpush1.bf16.msra.mxu0 %v804
    %893 = vmatprep.subr.bf16.mxu0 0
    %894 = vmatpush1.bf16.msra.mxu0 %v807
    %895 = vmatprep.subr.bf16.mxu0 0
    %896 = vmatpush1.bf16.msra.mxu0 %v810
    %897 = vmatprep.subr.bf16.mxu0 0
    %898 = vmatpush1.bf16.msra.mxu0 %v813
    %899 = vmatprep.subr.bf16.mxu0 0
    %900 = vmatpush1.bf16.msra.mxu0 %v816
    %901 = vmatprep.subr.bf16.mxu0 0
    %902 = vmatpush1.bf16.msra.mxu0 %v819
    %903 = vmatprep.subr.bf16.mxu0 0
    %904 = vmatpush1.bf16.msra.mxu0 0
    %905 = vmatprep.subr.bf16.mxu0 0
    %906 = vmatpush1.bf16.msra.mxu0 0
    %907 = vmatprep.subr.bf16.mxu0 0
    %908 = vmatpush1.bf16.msra.mxu0 0
    %909 = vmatprep.subr.bf16.mxu0 0
    %910 = vmatpush1.bf16.msra.mxu0 0
    %911 = vmatprep.subr.bf16.mxu0 0
    %912 = vmatpush1.bf16.msra.mxu0 0
    %913 = vmatprep.subr.bf16.mxu0 0
    %914 = vmatpush1.bf16.msra.mxu0 0
    %915 = vmatprep.subr.bf16.mxu0 0
    %916 = vmatpush1.bf16.msra.mxu0 0
    %917 = vmatprep.subr.bf16.mxu0 0
    %918 = vmatpush1.bf16.msra.mxu0 0
    %919 = vmatprep.mubr.bf16.mxu0 0
    %920 = vmatmul.mubr.bf16.gmra.mrb[0].mxu0 %v683
    %v921 = vpop.f32.mrb[0].mxu0
    %v922 = vadd.f32 0.0, %v921
    %v923 = vpop.f32.mrb[0].mxu0
    %v924 = vpop.f32.mrb[0].mxu0
    %v925 = vadd.f32 0.0, %v924
    %v926 = vpop.f32.mrb[0].mxu0
    %927 = vdwg.mxu0
    %v928 = vadd.f32 %v677, %v879
    %v929 = vadd.f32 %v680, %v883
    %v930 = vxor.u32 %v928, 2147483648
    %v931 = vxor.u32 %v929, 2147483648
    %v932 = vmul.f32 %v930, 1.442695
    %v933 = vpow.pop %v932
    %v934 = vmul.f32 %v931, 1.442695
    %v935 = vpow.pop %v934
    %v936 = vadd.f32 %v933, 1.0
    %v937 = vadd.f32 %v935, 1.0
    %v938 = vrcp.pop %v936
    %v939 = vmul.f32 1.0, %v938
    %v940 = vrcp.pop %v937
    %v941 = vmul.f32 1.0, %v940
    %v942 = vadd.f32 %v678, %v881
    %v943 = vadd.f32 %v681, %v885
    %v944 = vxor.u32 %v942, 2147483648
    %v945 = vxor.u32 %v943, 2147483648
    %v946 = vmul.f32 %v944, 1.442695
    %v947 = vpow.pop %v946
    %v948 = vmul.f32 %v945, 1.442695
    %v949 = vpow.pop %v948
    %v950 = vadd.f32 %v947, 1.0
    %v951 = vadd.f32 %v949, 1.0
    %v952 = vrcp.pop %v950
    %v953 = vmul.f32 1.0, %v952
    %v954 = vrcp.pop %v951
    %v955 = vmul.f32 1.0, %v954
    %v956 = vadd.f32 %v922, %v673
    %v957 = vadd.f32 %v925, %v673
    %v958 = vmul.f32 %v939, %v956
    %v959 = vmul.f32 %v941, %v957
    %v960 = vadd.f32 %v679, %v958
    %v961 = vadd.f32 %v682, %v959
    %v962 = vtanh.pop %v960
    %v963 = vtanh.pop %v961
    %v964 = vsub.f32 %v675, %v962
    %v965 = vsub.f32 %v676, %v963
    %v966 = vmul.f32 %v953, %v964
    %v967 = vmul.f32 %v955, %v965
    %v968 = vadd.f32 %v962, %v966
    %v969 = vadd.f32 %v963, %v967
    %v970 = vpack.c.bf16 %v969, %v968
    %971 = vst [vmem:[#allocation3] sm:$0xff] %v970
    %s972 = scalar_lea.vmem [#allocation2], 48
    %v973 = vld [vmem:[%s972] sm:$0xff]
    %v974 = vld [vmem:[%s972 + $0x8] sm:$0xff]
    %v975 = vld [vmem:[%s972 + $0x10] sm:$0xff]
    %v976 = vld [vmem:[%s972 + $0x18] sm:$0xff]
    %v977 = vld [vmem:[%s972 + $0x20] sm:$0xff]
    %v978 = vld [vmem:[%s972 + $0x28] sm:$0xff]
    %v979 = vld [vmem:[#allocation10] sm:$0xff]
    %v980 = vld [vmem:[#allocation10 + $0x8] sm:$0xf]
    %v981 = vld [vmem:[#allocation10 + $0xc] sm:$0xff]
    %v982 = vld [vmem:[#allocation10 + $0x14] sm:$0xf]
    %v983 = vld [vmem:[#allocation10 + $0x18] sm:$0xff]
    %v984 = vld [vmem:[#allocation10 + $0x20] sm:$0xf]
    %v985 = vld [vmem:[#allocation10 + $0x24] sm:$0xff]
    %v986 = vld [vmem:[#allocation10 + $0x2c] sm:$0xf]
    %v987 = vld [vmem:[#allocation10 + $0x30] sm:$0xff]
    %v988 = vld [vmem:[#allocation10 + $0x38] sm:$0xf]
    %v989 = vld [vmem:[#allocation10 + $0x3c] sm:$0xff]
    %v990 = vld [vmem:[#allocation10 + $0x44] sm:$0xf]
    %v991 = vld [vmem:[#allocation10 + $0x48] sm:$0xff]
    %v992 = vld [vmem:[#allocation10 + $0x50] sm:$0xf]
    %v993 = vld [vmem:[#allocation10 + $0x54] sm:$0xff]
    %v994 = vld [vmem:[#allocation10 + $0x5c] sm:$0xf]
    %v995 = vld [vmem:[#allocation10 + $0x60] sm:$0xff]
    %v996 = vld [vmem:[#allocation10 + $0x68] sm:$0xf]
    %v997 = vld [vmem:[#allocation10 + $0x6c] sm:$0xff]
    %v998 = vld [vmem:[#allocation10 + $0x74] sm:$0xf]
    %v999 = vld [vmem:[#allocation10 + $0x78] sm:$0xff]
    %v1000 = vld [vmem:[#allocation10 + $0x80] sm:$0xf]
    %v1001 = vld [vmem:[#allocation10 + $0x84] sm:$0xff]
    %v1002 = vld [vmem:[#allocation10 + $0x8c] sm:$0xf]
    %v1003 = vld [vmem:[#allocation10 + $0x90] sm:$0xff]
    %v1004 = vld [vmem:[#allocation10 + $0x98] sm:$0xf]
    %v1005 = vld [vmem:[#allocation10 + $0x9c] sm:$0xff]
    %v1006 = vld [vmem:[#allocation10 + $0xa4] sm:$0xf]
    %v1007 = vld [vmem:[#allocation10 + $0xa8] sm:$0xff]
    %v1008 = vld [vmem:[#allocation10 + $0xb0] sm:$0xf]
    %v1009 = vld [vmem:[#allocation10 + $0xb4] sm:$0xff]
    %v1010 = vld [vmem:[#allocation10 + $0xbc] sm:$0xf]
    %v1043 = vunpack.c.l.b16 %v979
    %v1044 = vunpack.c.h.b16 %v979
    %v1045 = vunpack.c.l.b16 %v980
    %v1046 = vunpack.c.l.b16 %v981
    %v1047 = vunpack.c.h.b16 %v981
    %v1048 = vunpack.c.l.b16 %v982
    %v1049 = vunpack.c.l.b16 %v983
    %v1050 = vunpack.c.h.b16 %v983
    %v1051 = vunpack.c.l.b16 %v984
    %v1052 = vunpack.c.l.b16 %v985
    %v1053 = vunpack.c.h.b16 %v985
    %v1054 = vunpack.c.l.b16 %v986
    %v1055 = vunpack.c.l.b16 %v987
    %v1056 = vunpack.c.h.b16 %v987
    %v1057 = vunpack.c.l.b16 %v988
    %v1058 = vunpack.c.l.b16 %v989
    %v1059 = vunpack.c.h.b16 %v989
    %v1060 = vunpack.c.l.b16 %v990
    %v1061 = vunpack.c.l.b16 %v991
    %v1062 = vunpack.c.h.b16 %v991
    %v1063 = vunpack.c.l.b16 %v992
    %v1064 = vunpack.c.l.b16 %v993
    %v1065 = vunpack.c.h.b16 %v993
    %v1066 = vunpack.c.l.b16 %v994
    %v1067 = vunpack.c.l.b16 %v995
    %v1068 = vunpack.c.h.b16 %v995
    %v1069 = vunpack.c.l.b16 %v996
    %v1070 = vunpack.c.l.b16 %v997
    %v1071 = vunpack.c.h.b16 %v997
    %v1072 = vunpack.c.l.b16 %v998
    %v1073 = vunpack.c.l.b16 %v999
    %v1074 = vunpack.c.h.b16 %v999
    %v1075 = vunpack.c.l.b16 %v1000
    %v1076 = vunpack.c.l.b16 %v1001
    %v1077 = vunpack.c.h.b16 %v1001
    %v1078 = vunpack.c.l.b16 %v1002
    %v1079 = vunpack.c.l.b16 %v1003
    %v1080 = vunpack.c.h.b16 %v1003
    %v1081 = vunpack.c.l.b16 %v1004
    %v1082 = vunpack.c.l.b16 %v1005
    %v1083 = vunpack.c.h.b16 %v1005
    %v1084 = vunpack.c.l.b16 %v1006
    %v1085 = vunpack.c.l.b16 %v1007
    %v1086 = vunpack.c.h.b16 %v1007
    %v1087 = vunpack.c.l.b16 %v1008
    %v1088 = vunpack.c.l.b16 %v1009
    %v1089 = vunpack.c.h.b16 %v1009
    %v1090 = vunpack.c.l.b16 %v1010
    %v1091 = vpack.c.b16 %v1046, %v1043
    %v1092 = vpack.c.b16 %v1047, %v1044
    %v1093 = vpack.c.b16 %v1048, %v1045
    %v1094 = vpack.c.b16 %v1052, %v1049
    %v1095 = vpack.c.b16 %v1053, %v1050
    %v1096 = vpack.c.b16 %v1054, %v1051
    %v1097 = vpack.c.b16 %v1058, %v1055
    %v1098 = vpack.c.b16 %v1059, %v1056
    %v1099 = vpack.c.b16 %v1060, %v1057
    %v1100 = vpack.c.b16 %v1064, %v1061
    %v1101 = vpack.c.b16 %v1065, %v1062
    %v1102 = vpack.c.b16 %v1066, %v1063
    %v1103 = vpack.c.b16 %v1070, %v1067
    %v1104 = vpack.c.b16 %v1071, %v1068
    %v1105 = vpack.c.b16 %v1072, %v1069
    %v1106 = vpack.c.b16 %v1076, %v1073
    %v1107 = vpack.c.b16 %v1077, %v1074
    %v1108 = vpack.c.b16 %v1078, %v1075
    %v1109 = vpack.c.b16 %v1082, %v1079
    %v1110 = vpack.c.b16 %v1083, %v1080
    %v1111 = vpack.c.b16 %v1084, %v1081
    %v1112 = vpack.c.b16 %v1088, %v1085
    %v1113 = vpack.c.b16 %v1089, %v1086
    %v1114 = vpack.c.b16 %v1090, %v1087
    %1139 = vmatprep.subr.bf16.mxu0 %v1092
    %1140 = vmatpush1.bf16.msra.mxu0 %v1091
    %1141 = vmatprep.subr.bf16.mxu0 %v1095
    %1142 = vmatpush1.bf16.msra.mxu0 %v1094
    %1143 = vmatprep.subr.bf16.mxu0 %v1098
    %1144 = vmatpush1.bf16.msra.mxu0 %v1097
    %1145 = vmatprep.subr.bf16.mxu0 %v1101
    %1146 = vmatpush1.bf16.msra.mxu0 %v1100
    %1147 = vmatprep.subr.bf16.mxu0 %v1104
    %1148 = vmatpush1.bf16.msra.mxu0 %v1103
    %1149 = vmatprep.subr.bf16.mxu0 %v1107
    %1150 = vmatpush1.bf16.msra.mxu0 %v1106
    %1151 = vmatprep.subr.bf16.mxu0 %v1110
    %1152 = vmatpush1.bf16.msra.mxu0 %v1109
    %1153 = vmatprep.subr.bf16.mxu0 %v1113
    %1154 = vmatpush1.bf16.msra.mxu0 %v1112
    %1155 = vmatprep.subr.bf16.mxu0 0
    %1156 = vmatpush1.bf16.msra.mxu0 0
    %1157 = vmatprep.subr.bf16.mxu0 0
    %1158 = vmatpush1.bf16.msra.mxu0 0
    %1159 = vmatprep.subr.bf16.mxu0 0
    %1160 = vmatpush1.bf16.msra.mxu0 0
    %1161 = vmatprep.subr.bf16.mxu0 0
    %1162 = vmatpush1.bf16.msra.mxu0 0
    %1163 = vmatprep.subr.bf16.mxu0 0
    %1164 = vmatpush1.bf16.msra.mxu0 0
    %1165 = vmatprep.subr.bf16.mxu0 0
    %1166 = vmatpush1.bf16.msra.mxu0 0
    %1167 = vmatprep.subr.bf16.mxu0 0
    %1168 = vmatpush1.bf16.msra.mxu0 0
    %1169 = vmatprep.subr.bf16.mxu0 0
    %1170 = vmatpush1.bf16.msra.mxu0 0
    %1171 = vmatprep.mubr.bf16.mxu0 0
    %1172 = vmatmul.mubr.bf16.gmra.mrb[0].mxu0 %v970
    %v1173 = vpop.f32.mrb[0].mxu0
    %v1174 = vadd.f32 0.0, %v1173
    %v1175 = vpop.f32.mrb[0].mxu0
    %v1176 = vadd.f32 0.0, %v1175
    %v1177 = vpop.f32.mrb[0].mxu0
    %v1178 = vadd.f32 0.0, %v1177
    %v1179 = vpop.f32.mrb[0].mxu0
    %v1180 = vadd.f32 0.0, %v1179
    %1181 = vdwg.mxu0
    %1182 = vmatprep.subr.bf16.mxu0 0
    %1183 = vmatpush1.bf16.msra.mxu0 %v1093
    %1184 = vmatprep.subr.bf16.mxu0 0
    %1185 = vmatpush1.bf16.msra.mxu0 %v1096
    %1186 = vmatprep.subr.bf16.mxu0 0
    %1187 = vmatpush1.bf16.msra.mxu0 %v1099
    %1188 = vmatprep.subr.bf16.mxu0 0
    %1189 = vmatpush1.bf16.msra.mxu0 %v1102
    %1190 = vmatprep.subr.bf16.mxu0 0
    %1191 = vmatpush1.bf16.msra.mxu0 %v1105
    %1192 = vmatprep.subr.bf16.mxu0 0
    %1193 = vmatpush1.bf16.msra.mxu0 %v1108
    %1194 = vmatprep.subr.bf16.mxu0 0
    %1195 = vmatpush1.bf16.msra.mxu0 %v1111
    %1196 = vmatprep.subr.bf16.mxu0 0
    %1197 = vmatpush1.bf16.msra.mxu0 %v1114
    %1198 = vmatprep.subr.bf16.mxu0 0
    %1199 = vmatpush1.bf16.msra.mxu0 0
    %1200 = vmatprep.subr.bf16.mxu0 0
    %1201 = vmatpush1.bf16.msra.mxu0 0
    %1202 = vmatprep.subr.bf16.mxu0 0
    %1203 = vmatpush1.bf16.msra.mxu0 0
    %1204 = vmatprep.subr.bf16.mxu0 0
    %1205 = vmatpush1.bf16.msra.mxu0 0
    %1206 = vmatprep.subr.bf16.mxu0 0
    %1207 = vmatpush1.bf16.msra.mxu0 0
    %1208 = vmatprep.subr.bf16.mxu0 0
    %1209 = vmatpush1.bf16.msra.mxu0 0
    %1210 = vmatprep.subr.bf16.mxu0 0
    %1211 = vmatpush1.bf16.msra.mxu0 0
    %1212 = vmatprep.subr.bf16.mxu0 0
    %1213 = vmatpush1.bf16.msra.mxu0 0
    %1214 = vmatprep.mubr.bf16.mxu0 0
    %1215 = vmatmul.mubr.bf16.gmra.mrb[0].mxu0 %v970
    %v1216 = vpop.f32.mrb[0].mxu0
    %v1217 = vadd.f32 0.0, %v1216
    %v1218 = vpop.f32.mrb[0].mxu0
    %v1219 = vpop.f32.mrb[0].mxu0
    %v1220 = vadd.f32 0.0, %v1219
    %v1221 = vpop.f32.mrb[0].mxu0
    %1222 = vdwg.mxu0
    %v1223 = vadd.f32 %v973, %v1174
    %v1224 = vadd.f32 %v976, %v1178
    %v1225 = vxor.u32 %v1223, 2147483648
    %v1226 = vxor.u32 %v1224, 2147483648
    %v1227 = vmul.f32 %v1225, 1.442695
    %v1228 = vpow.pop %v1227
    %v1229 = vmul.f32 %v1226, 1.442695
    %v1230 = vpow.pop %v1229
    %v1231 = vadd.f32 %v1228, 1.0
    %v1232 = vadd.f32 %v1230, 1.0
    %v1233 = vrcp.pop %v1231
    %v1234 = vmul.f32 1.0, %v1233
    %v1235 = vrcp.pop %v1232
    %v1236 = vmul.f32 1.0, %v1235
    %v1237 = vadd.f32 %v974, %v1176
    %v1238 = vadd.f32 %v977, %v1180
    %v1239 = vxor.u32 %v1237, 2147483648
    %v1240 = vxor.u32 %v1238, 2147483648
    %v1241 = vmul.f32 %v1239, 1.442695
    %v1242 = vpow.pop %v1241
    %v1243 = vmul.f32 %v1240, 1.442695
    %v1244 = vpow.pop %v1243
    %v1245 = vadd.f32 %v1242, 1.0
    %v1246 = vadd.f32 %v1244, 1.0
    %v1247 = vrcp.pop %v1245
    %v1248 = vmul.f32 1.0, %v1247
    %v1249 = vrcp.pop %v1246
    %v1250 = vmul.f32 1.0, %v1249
    %v1251 = vadd.f32 %v1217, %v673
    %v1252 = vadd.f32 %v1220, %v673
    %v1253 = vmul.f32 %v1234, %v1251
    %v1254 = vmul.f32 %v1236, %v1252
    %v1255 = vadd.f32 %v975, %v1253
    %v1256 = vadd.f32 %v978, %v1254
    %v1257 = vtanh.pop %v1255
    %v1258 = vtanh.pop %v1256
    %v1259 = vsub.f32 %v968, %v1257
    %v1260 = vsub.f32 %v969, %v1258
    %v1261 = vmul.f32 %v1248, %v1259
    %v1262 = vmul.f32 %v1250, %v1260
    %v1263 = vadd.f32 %v1257, %v1261
    %v1264 = vadd.f32 %v1258, %v1262
    %v1265 = vpack.c.bf16 %v1264, %v1263
    %s1266 = scalar_lea.vmem [#allocation3], 8
    %1267 = vst [vmem:[%s1266] sm:$0xff] %v1265
    %s1268 = scalar_lea.vmem [#allocation2], 96
    %v1269 = vld [vmem:[%s1268] sm:$0xff]
    %v1270 = vld [vmem:[%s1268 + $0x8] sm:$0xff]
    %v1271 = vld [vmem:[%s1268 + $0x10] sm:$0xff]
    %v1272 = vld [vmem:[%s1268 + $0x18] sm:$0xff]
    %v1273 = vld [vmem:[%s1268 + $0x20] sm:$0xff]
    %v1274 = vld [vmem:[%s1268 + $0x28] sm:$0xff]
    %v1275 = vld [vmem:[#allocation10] sm:$0xff]
    %v1276 = vld [vmem:[#allocation10 + $0x8] sm:$0xf]
    %v1277 = vld [vmem:[#allocation10 + $0xc] sm:$0xff]
    %v1278 = vld [vmem:[#allocation10 + $0x14] sm:$0xf]
    %v1279 = vld [vmem:[#allocation10 + $0x18] sm:$0xff]
    %v1280 = vld [vmem:[#allocation10 + $0x20] sm:$0xf]
    %v1281 = vld [vmem:[#allocation10 + $0x24] sm:$0xff]
    %v1282 = vld [vmem:[#allocation10 + $0x2c] sm:$0xf]
    %v1283 = vld [vmem:[#allocation10 + $0x30] sm:$0xff]
    %v1284 = vld [vmem:[#allocation10 + $0x38] sm:$0xf]
    %v1285 = vld [vmem:[#allocation10 + $0x3c] sm:$0xff]
    %v1286 = vld [vmem:[#allocation10 + $0x44] sm:$0xf]
    %v1287 = vld [vmem:[#allocation10 + $0x48] sm:$0xff]
    %v1288 = vld [vmem:[#allocation10 + $0x50] sm:$0xf]
    %v1289 = vld [vmem:[#allocation10 + $0x54] sm:$0xff]
    %v1290 = vld [vmem:[#allocation10 + $0x5c] sm:$0xf]
    %v1291 = vld [vmem:[#allocation10 + $0x60] sm:$0xff]
    %v1292 = vld [vmem:[#allocation10 + $0x68] sm:$0xf]
    %v1293 = vld [vmem:[#allocation10 + $0x6c] sm:$0xff]
    %v1294 = vld [vmem:[#allocation10 + $0x74] sm:$0xf]
    %v1295 = vld [vmem:[#allocation10 + $0x78] sm:$0xff]
    %v1296 = vld [vmem:[#allocation10 + $0x80] sm:$0xf]
    %v1297 = vld [vmem:[#allocation10 + $0x84] sm:$0xff]
    %v1298 = vld [vmem:[#allocation10 + $0x8c] sm:$0xf]
    %v1299 = vld [vmem:[#allocation10 + $0x90] sm:$0xff]
    %v1300 = vld [vmem:[#allocation10 + $0x98] sm:$0xf]
    %v1301 = vld [vmem:[#allocation10 + $0x9c] sm:$0xff]
    %v1302 = vld [vmem:[#allocation10 + $0xa4] sm:$0xf]
    %v1303 = vld [vmem:[#allocation10 + $0xa8] sm:$0xff]
    %v1304 = vld [vmem:[#allocation10 + $0xb0] sm:$0xf]
    %v1305 = vld [vmem:[#allocation10 + $0xb4] sm:$0xff]
    %v1306 = vld [vmem:[#allocation10 + $0xbc] sm:$0xf]
    %v1339 = vunpack.c.l.b16 %v1275
    %v1340 = vunpack.c.h.b16 %v1275
    %v1341 = vunpack.c.l.b16 %v1276
    %v1342 = vunpack.c.l.b16 %v1277
    %v1343 = vunpack.c.h.b16 %v1277
    %v1344 = vunpack.c.l.b16 %v1278
    %v1345 = vunpack.c.l.b16 %v1279
    %v1346 = vunpack.c.h.b16 %v1279
    %v1347 = vunpack.c.l.b16 %v1280
    %v1348 = vunpack.c.l.b16 %v1281
    %v1349 = vunpack.c.h.b16 %v1281
    %v1350 = vunpack.c.l.b16 %v1282
    %v1351 = vunpack.c.l.b16 %v1283
    %v1352 = vunpack.c.h.b16 %v1283
    %v1353 = vunpack.c.l.b16 %v1284
    %v1354 = vunpack.c.l.b16 %v1285
    %v1355 = vunpack.c.h.b16 %v1285
    %v1356 = vunpack.c.l.b16 %v1286
    %v1357 = vunpack.c.l.b16 %v1287
    %v1358 = vunpack.c.h.b16 %v1287
    %v1359 = vunpack.c.l.b16 %v1288
    %v1360 = vunpack.c.l.b16 %v1289
    %v1361 = vunpack.c.h.b16 %v1289
    %v1362 = vunpack.c.l.b16 %v1290
    %v1363 = vunpack.c.l.b16 %v1291
    %v1364 = vunpack.c.h.b16 %v1291
    %v1365 = vunpack.c.l.b16 %v1292
    %v1366 = vunpack.c.l.b16 %v1293
    %v1367 = vunpack.c.h.b16 %v1293
    %v1368 = vunpack.c.l.b16 %v1294
    %v1369 = vunpack.c.l.b16 %v1295
    %v1370 = vunpack.c.h.b16 %v1295
    %v1371 = vunpack.c.l.b16 %v1296
    %v1372 = vunpack.c.l.b16 %v1297
    %v1373 = vunpack.c.h.b16 %v1297
    %v1374 = vunpack.c.l.b16 %v1298
    %v1375 = vunpack.c.l.b16 %v1299
    %v1376 = vunpack.c.h.b16 %v1299
    %v1377 = vunpack.c.l.b16 %v1300
    %v1378 = vunpack.c.l.b16 %v1301
    %v1379 = vunpack.c.h.b16 %v1301
    %v1380 = vunpack.c.l.b16 %v1302
    %v1381 = vunpack.c.l.b16 %v1303
    %v1382 = vunpack.c.h.b16 %v1303
    %v1383 = vunpack.c.l.b16 %v1304
    %v1384 = vunpack.c.l.b16 %v1305
    %v1385 = vunpack.c.h.b16 %v1305
    %v1386 = vunpack.c.l.b16 %v1306
    %v1387 = vpack.c.b16 %v1342, %v1339
    %v1388 = vpack.c.b16 %v1343, %v1340
    %v1389 = vpack.c.b16 %v1344, %v1341
    %v1390 = vpack.c.b16 %v1348, %v1345
    %v1391 = vpack.c.b16 %v1349, %v1346
    %v1392 = vpack.c.b16 %v1350, %v1347
    %v1393 = vpack.c.b16 %v1354, %v1351
    %v1394 = vpack.c.b16 %v1355, %v1352
    %v1395 = vpack.c.b16 %v1356, %v1353
    %v1396 = vpack.c.b16 %v1360, %v1357
    %v1397 = vpack.c.b16 %v1361, %v1358
    %v1398 = vpack.c.b16 %v1362, %v1359
    %v1399 = vpack.c.b16 %v1366, %v1363
    %v1400 = vpack.c.b16 %v1367, %v1364
    %v1401 = vpack.c.b16 %v1368, %v1365
    %v1402 = vpack.c.b16 %v1372, %v1369
    %v1403 = vpack.c.b16 %v1373, %v1370
    %v1404 = vpack.c.b16 %v1374, %v1371
    %v1405 = vpack.c.b16 %v1378, %v1375
    %v1406 = vpack.c.b16 %v1379, %v1376
    %v1407 = vpack.c.b16 %v1380, %v1377
    %v1408 = vpack.c.b16 %v1384, %v1381
    %v1409 = vpack.c.b16 %v1385, %v1382
    %v1410 = vpack.c.b16 %v1386, %v1383
    %1435 = vmatprep.subr.bf16.mxu0 %v1388
    %1436 = vmatpush1.bf16.msra.mxu0 %v1387
    %1437 = vmatprep.subr.bf16.mxu0 %v1391
    %1438 = vmatpush1.bf16.msra.mxu0 %v1390
    %1439 = vmatprep.subr.bf16.mxu0 %v1394
    %1440 = vmatpush1.bf16.msra.mxu0 %v1393
    %1441 = vmatprep.subr.bf16.mxu0 %v1397
    %1442 = vmatpush1.bf16.msra.mxu0 %v1396
    %1443 = vmatprep.subr.bf16.mxu0 %v1400
    %1444 = vmatpush1.bf16.msra.mxu0 %v1399
    %1445 = vmatprep.subr.bf16.mxu0 %v1403
    %1446 = vmatpush1.bf16.msra.mxu0 %v1402
    %1447 = vmatprep.subr.bf16.mxu0 %v1406
    %1448 = vmatpush1.bf16.msra.mxu0 %v1405
    %1449 = vmatprep.subr.bf16.mxu0 %v1409
    %1450 = vmatpush1.bf16.msra.mxu0 %v1408
    %1451 = vmatprep.subr.bf16.mxu0 0
    %1452 = vmatpush1.bf16.msra.mxu0 0
    %1453 = vmatprep.subr.bf16.mxu0 0
    %1454 = vmatpush1.bf16.msra.mxu0 0
    %1455 = vmatprep.subr.bf16.mxu0 0
    %1456 = vmatpush1.bf16.msra.mxu0 0
    %1457 = vmatprep.subr.bf16.mxu0 0
    %1458 = vmatpush1.bf16.msra.mxu0 0
    %1459 = vmatprep.subr.bf16.mxu0 0
    %1460 = vmatpush1.bf16.msra.mxu0 0
    %1461 = vmatprep.subr.bf16.mxu0 0
    %1462 = vmatpush1.bf16.msra.mxu0 0
    %1463 = vmatprep.subr.bf16.mxu0 0
    %1464 = vmatpush1.bf16.msra.mxu0 0
    %1465 = vmatprep.subr.bf16.mxu0 0
    %1466 = vmatpush1.bf16.msra.mxu0 0
    %1467 = vmatprep.mubr.bf16.mxu0 0
    %1468 = vmatmul.mubr.bf16.gmra.mrb[0].mxu0 %v1265
    %v1469 = vpop.f32.mrb[0].mxu0
    %v1470 = vadd.f32 0.0, %v1469
    %v1471 = vpop.f32.mrb[0].mxu0
    %v1472 = vadd.f32 0.0, %v1471
    %v1473 = vpop.f32.mrb[0].mxu0
    %v1474 = vadd.f32 0.0, %v1473
    %v1475 = vpop.f32.mrb[0].mxu0
    %v1476 = vadd.f32 0.0, %v1475
    %1477 = vdwg.mxu0
    %1478 = vmatprep.subr.bf16.mxu0 0
    %1479 = vmatpush1.bf16.msra.mxu0 %v1389
    %1480 = vmatprep.subr.bf16.mxu0 0
    %1481 = vmatpush1.bf16.msra.mxu0 %v1392
    %1482 = vmatprep.subr.bf16.mxu0 0
    %1483 = vmatpush1.bf16.msra.mxu0 %v1395
    %1484 = vmatprep.subr.bf16.mxu0 0
    %1485 = vmatpush1.bf16.msra.mxu0 %v1398
    %1486 = vmatprep.subr.bf16.mxu0 0
    %1487 = vmatpush1.bf16.msra.mxu0 %v1401
    %1488 = vmatprep.subr.bf16.mxu0 0
    %1489 = vmatpush1.bf16.msra.mxu0 %v1404
    %1490 = vmatprep.subr.bf16.mxu0 0
    %1491 = vmatpush1.bf16.msra.mxu0 %v1407
    %1492 = vmatprep.subr.bf16.mxu0 0
    %1493 = vmatpush1.bf16.msra.mxu0 %v1410
    %1494 = vmatprep.subr.bf16.mxu0 0
    %1495 = vmatpush1.bf16.msra.mxu0 0
    %1496 = vmatprep.subr.bf16.mxu0 0
    %1497 = vmatpush1.bf16.msra.mxu0 0
    %1498 = vmatprep.subr.bf16.mxu0 0
    %1499 = vmatpush1.bf16.msra.mxu0 0
    %1500 = vmatprep.subr.bf16.mxu0 0
    %1501 = vmatpush1.bf16.msra.mxu0 0
    %1502 = vmatprep.subr.bf16.mxu0 0
    %1503 = vmatpush1.bf16.msra.mxu0 0
    %1504 = vmatprep.subr.bf16.mxu0 0
    %1505 = vmatpush1.bf16.msra.mxu0 0
    %1506 = vmatprep.subr.bf16.mxu0 0
    %1507 = vmatpush1.bf16.msra.mxu0 0
    %1508 = vmatprep.subr.bf16.mxu0 0
    %1509 = vmatpush1.bf16.msra.mxu0 0
    %1510 = vmatprep.mubr.bf16.mxu0 0
    %1511 = vmatmul.mubr.bf16.gmra.mrb[0].mxu0 %v1265
    %v1512 = vpop.f32.mrb[0].mxu0
    %v1513 = vadd.f32 0.0, %v1512
    %v1514 = vpop.f32.mrb[0].mxu0
    %v1515 = vpop.f32.mrb[0].mxu0
    %v1516 = vadd.f32 0.0, %v1515
    %v1517 = vpop.f32.mrb[0].mxu0
    %1518 = vdwg.mxu0
    %v1519 = vadd.f32 %v1269, %v1470
    %v1520 = vadd.f32 %v1272, %v1474
    %v1521 = vxor.u32 %v1519, 2147483648
    %v1522 = vxor.u32 %v1520, 2147483648
    %v1523 = vmul.f32 %v1521, 1.442695
    %v1524 = vpow.pop %v1523
    %v1525 = vmul.f32 %v1522, 1.442695
    %v1526 = vpow.pop %v1525
    %v1527 = vadd.f32 %v1524, 1.0
    %v1528 = vadd.f32 %v1526, 1.0
    %v1529 = vrcp.pop %v1527
    %v1530 = vmul.f32 1.0, %v1529
    %v1531 = vrcp.pop %v1528
    %v1532 = vmul.f32 1.0, %v1531
    %v1533 = vadd.f32 %v1270, %v1472
    %v1534 = vadd.f32 %v1273, %v1476
    %v1535 = vxor.u32 %v1533, 2147483648
    %v1536 = vxor.u32 %v1534, 2147483648
    %v1537 = vmul.f32 %v1535, 1.442695
    %v1538 = vpow.pop %v1537
    %v1539 = vmul.f32 %v1536, 1.442695
    %v1540 = vpow.pop %v1539
    %v1541 = vadd.f32 %v1538, 1.0
    %v1542 = vadd.f32 %v1540, 1.0
    %v1543 = vrcp.pop %v1541
    %v1544 = vmul.f32 1.0, %v1543
    %v1545 = vrcp.pop %v1542
    %v1546 = vmul.f32 1.0, %v1545
    %v1547 = vadd.f32 %v1513, %v673
    %v1548 = vadd.f32 %v1516, %v673
    %v1549 = vmul.f32 %v1530, %v1547
    %v1550 = vmul.f32 %v1532, %v1548
    %v1551 = vadd.f32 %v1271, %v1549
    %v1552 = vadd.f32 %v1274, %v1550
    %v1553 = vtanh.pop %v1551
    %v1554 = vtanh.pop %v1552
    %v1555 = vsub.f32 %v1263, %v1553
    %v1556 = vsub.f32 %v1264, %v1554
    %v1557 = vmul.f32 %v1544, %v1555
    %v1558 = vmul.f32 %v1546, %v1556
    %v1559 = vadd.f32 %v1553, %v1557
    %v1560 = vadd.f32 %v1554, %v1558
    %v1561 = vpack.c.bf16 %v1560, %v1559
    %s1562 = scalar_lea.vmem [#allocation3], 16
    %1563 = vst [vmem:[%s1562] sm:$0xff] %v1561
    %s1564 = scalar_lea.vmem [#allocation2], 144
    %v1565 = vld [vmem:[%s1564] sm:$0xff]
    %v1566 = vld [vmem:[%s1564 + $0x8] sm:$0xff]
    %v1567 = vld [vmem:[%s1564 + $0x10] sm:$0xff]
    %v1568 = vld [vmem:[%s1564 + $0x18] sm:$0xff]
    %v1569 = vld [vmem:[%s1564 + $0x20] sm:$0xff]
    %v1570 = vld [vmem:[%s1564 + $0x28] sm:$0xff]
    %v1571 = vld [vmem:[#allocation10] sm:$0xff]
    %v1572 = vld [vmem:[#allocation10 + $0x8] sm:$0xf]
    %v1573 = vld [vmem:[#allocation10 + $0xc] sm:$0xff]
    %v1574 = vld [vmem:[#allocation10 + $0x14] sm:$0xf]
    %v1575 = vld [vmem:[#allocation10 + $0x18] sm:$0xff]
    %v1576 = vld [vmem:[#allocation10 + $0x20] sm:$0xf]
    %v1577 = vld [vmem:[#allocation10 + $0x24] sm:$0xff]
    %v1578 = vld [vmem:[#allocation10 + $0x2c] sm:$0xf]
    %v1579 = vld [vmem:[#allocation10 + $0x30] sm:$0xff]
    %v1580 = vld [vmem:[#allocation10 + $0x38] sm:$0xf]
    %v1581 = vld [vmem:[#allocation10 + $0x3c] sm:$0xff]
    %v1582 = vld [vmem:[#allocation10 + $0x44] sm:$0xf]
    %v1583 = vld [vmem:[#allocation10 + $0x48] sm:$0xff]
    %v1584 = vld [vmem:[#allocation10 + $0x50] sm:$0xf]
    %v1585 = vld [vmem:[#allocation10 + $0x54] sm:$0xff]
    %v1586 = vld [vmem:[#allocation10 + $0x5c] sm:$0xf]
    %v1587 = vld [vmem:[#allocation10 + $0x60] sm:$0xff]
    %v1588 = vld [vmem:[#allocation10 + $0x68] sm:$0xf]
    %v1589 = vld [vmem:[#allocation10 + $0x6c] sm:$0xff]
    %v1590 = vld [vmem:[#allocation10 + $0x74] sm:$0xf]
    %v1591 = vld [vmem:[#allocation10 + $0x78] sm:$0xff]
    %v1592 = vld [vmem:[#allocation10 + $0x80] sm:$0xf]
    %v1593 = vld [vmem:[#allocation10 + $0x84] sm:$0xff]
    %v1594 = vld [vmem:[#allocation10 + $0x8c] sm:$0xf]
    %v1595 = vld [vmem:[#allocation10 + $0x90] sm:$0xff]
    %v1596 = vld [vmem:[#allocation10 + $0x98] sm:$0xf]
    %v1597 = vld [vmem:[#allocation10 + $0x9c] sm:$0xff]
    %v1598 = vld [vmem:[#allocation10 + $0xa4] sm:$0xf]
    %v1599 = vld [vmem:[#allocation10 + $0xa8] sm:$0xff]
    %v1600 = vld [vmem:[#allocation10 + $0xb0] sm:$0xf]
    %v1601 = vld [vmem:[#allocation10 + $0xb4] sm:$0xff]
    %v1602 = vld [vmem:[#allocation10 + $0xbc] sm:$0xf]
    %v1635 = vunpack.c.l.b16 %v1571
    %v1636 = vunpack.c.h.b16 %v1571
    %v1637 = vunpack.c.l.b16 %v1572
    %v1638 = vunpack.c.l.b16 %v1573
    %v1639 = vunpack.c.h.b16 %v1573
    %v1640 = vunpack.c.l.b16 %v1574
    %v1641 = vunpack.c.l.b16 %v1575
    %v1642 = vunpack.c.h.b16 %v1575
    %v1643 = vunpack.c.l.b16 %v1576
    %v1644 = vunpack.c.l.b16 %v1577
    %v1645 = vunpack.c.h.b16 %v1577
    %v1646 = vunpack.c.l.b16 %v1578
    %v1647 = vunpack.c.l.b16 %v1579
    %v1648 = vunpack.c.h.b16 %v1579
    %v1649 = vunpack.c.l.b16 %v1580
    %v1650 = vunpack.c.l.b16 %v1581
    %v1651 = vunpack.c.h.b16 %v1581
    %v1652 = vunpack.c.l.b16 %v1582
    %v1653 = vunpack.c.l.b16 %v1583
    %v1654 = vunpack.c.h.b16 %v1583
    %v1655 = vunpack.c.l.b16 %v1584
    %v1656 = vunpack.c.l.b16 %v1585
    %v1657 = vunpack.c.h.b16 %v1585
    %v1658 = vunpack.c.l.b16 %v1586
    %v1659 = vunpack.c.l.b16 %v1587
    %v1660 = vunpack.c.h.b16 %v1587
    %v1661 = vunpack.c.l.b16 %v1588
    %v1662 = vunpack.c.l.b16 %v1589
    %v1663 = vunpack.c.h.b16 %v1589
    %v1664 = vunpack.c.l.b16 %v1590
    %v1665 = vunpack.c.l.b16 %v1591
    %v1666 = vunpack.c.h.b16 %v1591
    %v1667 = vunpack.c.l.b16 %v1592
    %v1668 = vunpack.c.l.b16 %v1593
    %v1669 = vunpack.c.h.b16 %v1593
    %v1670 = vunpack.c.l.b16 %v1594
    %v1671 = vunpack.c.l.b16 %v1595
    %v1672 = vunpack.c.h.b16 %v1595
    %v1673 = vunpack.c.l.b16 %v1596
    %v1674 = vunpack.c.l.b16 %v1597
    %v1675 = vunpack.c.h.b16 %v1597
    %v1676 = vunpack.c.l.b16 %v1598
    %v1677 = vunpack.c.l.b16 %v1599
    %v1678 = vunpack.c.h.b16 %v1599
    %v1679 = vunpack.c.l.b16 %v1600
    %v1680 = vunpack.c.l.b16 %v1601
    %v1681 = vunpack.c.h.b16 %v1601
    %v1682 = vunpack.c.l.b16 %v1602
    %v1683 = vpack.c.b16 %v1638, %v1635
    %v1684 = vpack.c.b16 %v1639, %v1636
    %v1685 = vpack.c.b16 %v1640, %v1637
    %v1686 = vpack.c.b16 %v1644, %v1641
    %v1687 = vpack.c.b16 %v1645, %v1642
    %v1688 = vpack.c.b16 %v1646, %v1643
    %v1689 = vpack.c.b16 %v1650, %v1647
    %v1690 = vpack.c.b16 %v1651, %v1648
    %v1691 = vpack.c.b16 %v1652, %v1649
    %v1692 = vpack.c.b16 %v1656, %v1653
    %v1693 = vpack.c.b16 %v1657, %v1654
    %v1694 = vpack.c.b16 %v1658, %v1655
    %v1695 = vpack.c.b16 %v1662, %v1659
    %v1696 = vpack.c.b16 %v1663, %v1660
    %v1697 = vpack.c.b16 %v1664, %v1661
    %v1698 = vpack.c.b16 %v1668, %v1665
    %v1699 = vpack.c.b16 %v1669, %v1666
    %v1700 = vpack.c.b16 %v1670, %v1667
    %v1701 = vpack.c.b16 %v1674, %v1671
    %v1702 = vpack.c.b16 %v1675, %v1672
    %v1703 = vpack.c.b16 %v1676, %v1673
    %v1704 = vpack.c.b16 %v1680, %v1677
    %v1705 = vpack.c.b16 %v1681, %v1678
    %v1706 = vpack.c.b16 %v1682, %v1679
    %1731 = vmatprep.subr.bf16.mxu0 %v1684
    %1732 = vmatpush1.bf16.msra.mxu0 %v1683
    %1733 = vmatprep.subr.bf16.mxu0 %v1687
    %1734 = vmatpush1.bf16.msra.mxu0 %v1686
    %1735 = vmatprep.subr.bf16.mxu0 %v1690
    %1736 = vmatpush1.bf16.msra.mxu0 %v1689
    %1737 = vmatprep.subr.bf16.mxu0 %v1693
    %1738 = vmatpush1.bf16.msra.mxu0 %v1692
    %1739 = vmatprep.subr.bf16.mxu0 %v1696
    %1740 = vmatpush1.bf16.msra.mxu0 %v1695
    %1741 = vmatprep.subr.bf16.mxu0 %v1699
    %1742 = vmatpush1.bf16.msra.mxu0 %v1698
    %1743 = vmatprep.subr.bf16.mxu0 %v1702
    %1744 = vmatpush1.bf16.msra.mxu0 %v1701
    %1745 = vmatprep.subr.bf16.mxu0 %v1705
    %1746 = vmatpush1.bf16.msra.mxu0 %v1704
    %1747 = vmatprep.subr.bf16.mxu0 0
    %1748 = vmatpush1.bf16.msra.mxu0 0
    %1749 = vmatprep.subr.bf16.mxu0 0
    %1750 = vmatpush1.bf16.msra.mxu0 0
    %1751 = vmatprep.subr.bf16.mxu0 0
    %1752 = vmatpush1.bf16.msra.mxu0 0
    %1753 = vmatprep.subr.bf16.mxu0 0
    %1754 = vmatpush1.bf16.msra.mxu0 0
    %1755 = vmatprep.subr.bf16.mxu0 0
    %1756 = vmatpush1.bf16.msra.mxu0 0
    %1757 = vmatprep.subr.bf16.mxu0 0
    %1758 = vmatpush1.bf16.msra.mxu0 0
    %1759 = vmatprep.subr.bf16.mxu0 0
    %1760 = vmatpush1.bf16.msra.mxu0 0
    %1761 = vmatprep.subr.bf16.mxu0 0
    %1762 = vmatpush1.bf16.msra.mxu0 0
    %1763 = vmatprep.mubr.bf16.mxu0 0
    %1764 = vmatmul.mubr.bf16.gmra.mrb[0].mxu0 %v1561
    %v1765 = vpop.f32.mrb[0].mxu0
    %v1766 = vadd.f32 0.0, %v1765
    %v1767 = vpop.f32.mrb[0].mxu0
    %v1768 = vadd.f32 0.0, %v1767
    %v1769 = vpop.f32.mrb[0].mxu0
    %v1770 = vadd.f32 0.0, %v1769
    %v1771 = vpop.f32.mrb[0].mxu0
    %v1772 = vadd.f32 0.0, %v1771
    %1773 = vdwg.mxu0
    %1774 = vmatprep.subr.bf16.mxu0 0
    %1775 = vmatpush1.bf16.msra.mxu0 %v1685
    %1776 = vmatprep.subr.bf16.mxu0 0
    %1777 = vmatpush1.bf16.msra.mxu0 %v1688
    %1778 = vmatprep.subr.bf16.mxu0 0
    %1779 = vmatpush1.bf16.msra.mxu0 %v1691
    %1780 = vmatprep.subr.bf16.mxu0 0
    %1781 = vmatpush1.bf16.msra.mxu0 %v1694
    %1782 = vmatprep.subr.bf16.mxu0 0
    %1783 = vmatpush1.bf16.msra.mxu0 %v1697
    %1784 = vmatprep.subr.bf16.mxu0 0
    %1785 = vmatpush1.bf16.msra.mxu0 %v1700
    %1786 = vmatprep.subr.bf16.mxu0 0
    %1787 = vmatpush1.bf16.msra.mxu0 %v1703
    %1788 = vmatprep.subr.bf16.mxu0 0
    %1789 = vmatpush1.bf16.msra.mxu0 %v1706
    %1790 = vmatprep.subr.bf16.mxu0 0
    %1791 = vmatpush1.bf16.msra.mxu0 0
    %1792 = vmatprep.subr.bf16.mxu0 0
    %1793 = vmatpush1.bf16.msra.mxu0 0
    %1794 = vmatprep.subr.bf16.mxu0 0
    %1795 = vmatpush1.bf16.msra.mxu0 0
    %1796 = vmatprep.subr.bf16.mxu0 0
    %1797 = vmatpush1.bf16.msra.mxu0 0
    %1798 = vmatprep.subr.bf16.mxu0 0
    %1799 = vmatpush1.bf16.msra.mxu0 0
    %1800 = vmatprep.subr.bf16.mxu0 0
    %1801 = vmatpush1.bf16.msra.mxu0 0
    %1802 = vmatprep.subr.bf16.mxu0 0
    %1803 = vmatpush1.bf16.msra.mxu0 0
    %1804 = vmatprep.subr.bf16.mxu0 0
    %1805 = vmatpush1.bf16.msra.mxu0 0
    %1806 = vmatprep.mubr.bf16.mxu0 0
    %1807 = vmatmul.mubr.bf16.gmra.mrb[0].mxu0 %v1561
    %v1808 = vpop.f32.mrb[0].mxu0
    %v1809 = vadd.f32 0.0, %v1808
    %v1810 = vpop.f32.mrb[0].mxu0
    %v1811 = vpop.f32.mrb[0].mxu0
    %v1812 = vadd.f32 0.0, %v1811
    %v1813 = vpop.f32.mrb[0].mxu0
    %1814 = vdwg.mxu0
    %v1815 = vadd.f32 %v1565, %v1766
    %v1816 = vadd.f32 %v1568, %v1770
    %v1817 = vxor.u32 %v1815, 2147483648
    %v1818 = vxor.u32 %v1816, 2147483648
    %v1819 = vmul.f32 %v1817, 1.442695
    %v1820 = vpow.pop %v1819
    %v1821 = vmul.f32 %v1818, 1.442695
    %v1822 = vpow.pop %v1821
    %v1823 = vadd.f32 %v1820, 1.0
    %v1824 = vadd.f32 %v1822, 1.0
    %v1825 = vrcp.pop %v1823
    %v1826 = vmul.f32 1.0, %v1825
    %v1827 = vrcp.pop %v1824
    %v1828 = vmul.f32 1.0, %v1827
    %v1829 = vadd.f32 %v1566, %v1768
    %v1830 = vadd.f32 %v1569, %v1772
    %v1831 = vxor.u32 %v1829, 2147483648
    %v1832 = vxor.u32 %v1830, 2147483648
    %v1833 = vmul.f32 %v1831, 1.442695
    %v1834 = vpow.pop %v1833
    %v1835 = vmul.f32 %v1832, 1.442695
    %v1836 = vpow.pop %v1835
    %v1837 = vadd.f32 %v1834, 1.0
    %v1838 = vadd.f32 %v1836, 1.0
    %v1839 = vrcp.pop %v1837
    %v1840 = vmul.f32 1.0, %v1839
    %v1841 = vrcp.pop %v1838
    %v1842 = vmul.f32 1.0, %v1841
    %v1843 = vadd.f32 %v1809, %v673
    %v1844 = vadd.f32 %v1812, %v673
    %v1845 = vmul.f32 %v1826, %v1843
    %v1846 = vmul.f32 %v1828, %v1844
    %v1847 = vadd.f32 %v1567, %v1845
    %v1848 = vadd.f32 %v1570, %v1846
    %v1849 = vtanh.pop %v1847
    %v1850 = vtanh.pop %v1848
    %v1851 = vsub.f32 %v1559, %v1849
    %v1852 = vsub.f32 %v1560, %v1850
    %v1853 = vmul.f32 %v1840, %v1851
    %v1854 = vmul.f32 %v1842, %v1852
    %v1855 = vadd.f32 %v1849, %v1853
    %v1856 = vadd.f32 %v1850, %v1854
    %v1857 = vpack.c.bf16 %v1856, %v1855
    %s1858 = scalar_lea.vmem [#allocation3], 24
    %1859 = vst [vmem:[%s1858] sm:$0xff] %v1857
    %s1860 = scalar_lea.vmem [#allocation2], 192
    %v1861 = vld [vmem:[%s1860] sm:$0xff]
    %v1862 = vld [vmem:[%s1860 + $0x8] sm:$0xff]
    %v1863 = vld [vmem:[%s1860 + $0x10] sm:$0xff]
    %v1864 = vld [vmem:[%s1860 + $0x18] sm:$0xff]
    %v1865 = vld [vmem:[%s1860 + $0x20] sm:$0xff]
    %v1866 = vld [vmem:[%s1860 + $0x28] sm:$0xff]
    %v1867 = vld [vmem:[#allocation10] sm:$0xff]
    %v1868 = vld [vmem:[#allocation10 + $0x8] sm:$0xf]
    %v1869 = vld [vmem:[#allocation10 + $0xc] sm:$0xff]
    %v1870 = vld [vmem:[#allocation10 + $0x14] sm:$0xf]
    %v1871 = vld [vmem:[#allocation10 + $0x18] sm:$0xff]
    %v1872 = vld [vmem:[#allocation10 + $0x20] sm:$0xf]
    %v1873 = vld [vmem:[#allocation10 + $0x24] sm:$0xff]
    %v1874 = vld [vmem:[#allocation10 + $0x2c] sm:$0xf]
    %v1875 = vld [vmem:[#allocation10 + $0x30] sm:$0xff]
    %v1876 = vld [vmem:[#allocation10 + $0x38] sm:$0xf]
    %v1877 = vld [vmem:[#allocation10 + $0x3c] sm:$0xff]
    %v1878 = vld [vmem:[#allocation10 + $0x44] sm:$0xf]
    %v1879 = vld [vmem:[#allocation10 + $0x48] sm:$0xff]
    %v1880 = vld [vmem:[#allocation10 + $0x50] sm:$0xf]
    %v1881 = vld [vmem:[#allocation10 + $0x54] sm:$0xff]
    %v1882 = vld [vmem:[#allocation10 + $0x5c] sm:$0xf]
    %v1883 = vld [vmem:[#allocation10 + $0x60] sm:$0xff]
    %v1884 = vld [vmem:[#allocation10 + $0x68] sm:$0xf]
    %v1885 = vld [vmem:[#allocation10 + $0x6c] sm:$0xff]
    %v1886 = vld [vmem:[#allocation10 + $0x74] sm:$0xf]
    %v1887 = vld [vmem:[#allocation10 + $0x78] sm:$0xff]
    %v1888 = vld [vmem:[#allocation10 + $0x80] sm:$0xf]
    %v1889 = vld [vmem:[#allocation10 + $0x84] sm:$0xff]
    %v1890 = vld [vmem:[#allocation10 + $0x8c] sm:$0xf]
    %v1891 = vld [vmem:[#allocation10 + $0x90] sm:$0xff]
    %v1892 = vld [vmem:[#allocation10 + $0x98] sm:$0xf]
    %v1893 = vld [vmem:[#allocation10 + $0x9c] sm:$0xff]
    %v1894 = vld [vmem:[#allocation10 + $0xa4] sm:$0xf]
    %v1895 = vld [vmem:[#allocation10 + $0xa8] sm:$0xff]
    %v1896 = vld [vmem:[#allocation10 + $0xb0] sm:$0xf]
    %v1897 = vld [vmem:[#allocation10 + $0xb4] sm:$0xff]
    %v1898 = vld [vmem:[#allocation10 + $0xbc] sm:$0xf]
    %v1931 = vunpack.c.l.b16 %v1867
    %v1932 = vunpack.c.h.b16 %v1867
    %v1933 = vunpack.c.l.b16 %v1868
    %v1934 = vunpack.c.l.b16 %v1869
    %v1935 = vunpack.c.h.b16 %v1869
    %v1936 = vunpack.c.l.b16 %v1870
    %v1937 = vunpack.c.l.b16 %v1871
    %v1938 = vunpack.c.h.b16 %v1871
    %v1939 = vunpack.c.l.b16 %v1872
    %v1940 = vunpack.c.l.b16 %v1873
    %v1941 = vunpack.c.h.b16 %v1873
    %v1942 = vunpack.c.l.b16 %v1874
    %v1943 = vunpack.c.l.b16 %v1875
    %v1944 = vunpack.c.h.b16 %v1875
    %v1945 = vunpack.c.l.b16 %v1876
    %v1946 = vunpack.c.l.b16 %v1877
    %v1947 = vunpack.c.h.b16 %v1877
    %v1948 = vunpack.c.l.b16 %v1878
    %v1949 = vunpack.c.l.b16 %v1879
    %v1950 = vunpack.c.h.b16 %v1879
    %v1951 = vunpack.c.l.b16 %v1880
    %v1952 = vunpack.c.l.b16 %v1881
    %v1953 = vunpack.c.h.b16 %v1881
    %v1954 = vunpack.c.l.b16 %v1882
    %v1955 = vunpack.c.l.b16 %v1883
    %v1956 = vunpack.c.h.b16 %v1883
    %v1957 = vunpack.c.l.b16 %v1884
    %v1958 = vunpack.c.l.b16 %v1885
    %v1959 = vunpack.c.h.b16 %v1885
    %v1960 = vunpack.c.l.b16 %v1886
    %v1961 = vunpack.c.l.b16 %v1887
    %v1962 = vunpack.c.h.b16 %v1887
    %v1963 = vunpack.c.l.b16 %v1888
    %v1964 = vunpack.c.l.b16 %v1889
    %v1965 = vunpack.c.h.b16 %v1889
    %v1966 = vunpack.c.l.b16 %v1890
    %v1967 = vunpack.c.l.b16 %v1891
    %v1968 = vunpack.c.h.b16 %v1891
    %v1969 = vunpack.c.l.b16 %v1892
    %v1970 = vunpack.c.l.b16 %v1893
    %v1971 = vunpack.c.h.b16 %v1893
    %v1972 = vunpack.c.l.b16 %v1894
    %v1973 = vunpack.c.l.b16 %v1895
    %v1974 = vunpack.c.h.b16 %v1895
    %v1975 = vunpack.c.l.b16 %v1896
    %v1976 = vunpack.c.l.b16 %v1897
    %v1977 = vunpack.c.h.b16 %v1897
    %v1978 = vunpack.c.l.b16 %v1898
    %v1979 = vpack.c.b16 %v1934, %v1931
    %v1980 = vpack.c.b16 %v1935, %v1932
    %v1981 = vpack.c.b16 %v1936, %v1933
    %v1982 = vpack.c.b16 %v1940, %v1937
    %v1983 = vpack.c.b16 %v1941, %v1938
    %v1984 = vpack.c.b16 %v1942, %v1939
    %v1985 = vpack.c.b16 %v1946, %v1943
    %v1986 = vpack.c.b16 %v1947, %v1944
    %v1987 = vpack.c.b16 %v1948, %v1945
    %v1988 = vpack.c.b16 %v1952, %v1949
    %v1989 = vpack.c.b16 %v1953, %v1950
    %v1990 = vpack.c.b16 %v1954, %v1951
    %v1991 = vpack.c.b16 %v1958, %v1955
    %v1992 = vpack.c.b16 %v1959, %v1956
    %v1993 = vpack.c.b16 %v1960, %v1957
    %v1994 = vpack.c.b16 %v1964, %v1961
    %v1995 = vpack.c.b16 %v1965, %v1962
    %v1996 = vpack.c.b16 %v1966, %v1963
    %v1997 = vpack.c.b16 %v1970, %v1967
    %v1998 = vpack.c.b16 %v1971, %v1968
    %v1999 = vpack.c.b16 %v1972, %v1969
    %v2000 = vpack.c.b16 %v1976, %v1973
    %v2001 = vpack.c.b16 %v1977, %v1974
    %v2002 = vpack.c.b16 %v1978, %v1975
    %2027 = vmatprep.subr.bf16.mxu0 %v1980
    %2028 = vmatpush1.bf16.msra.mxu0 %v1979
    %2029 = vmatprep.subr.bf16.mxu0 %v1983
    %2030 = vmatpush1.bf16.msra.mxu0 %v1982
    %2031 = vmatprep.subr.bf16.mxu0 %v1986
    %2032 = vmatpush1.bf16.msra.mxu0 %v1985
    %2033 = vmatprep.subr.bf16.mxu0 %v1989
    %2034 = vmatpush1.bf16.msra.mxu0 %v1988
    %2035 = vmatprep.subr.bf16.mxu0 %v1992
    %2036 = vmatpush1.bf16.msra.mxu0 %v1991
    %2037 = vmatprep.subr.bf16.mxu0 %v1995
    %2038 = vmatpush1.bf16.msra.mxu0 %v1994
    %2039 = vmatprep.subr.bf16.mxu0 %v1998
    %2040 = vmatpush1.bf16.msra.mxu0 %v1997
    %2041 = vmatprep.subr.bf16.mxu0 %v2001
    %2042 = vmatpush1.bf16.msra.mxu0 %v2000
    %2043 = vmatprep.subr.bf16.mxu0 0
    %2044 = vmatpush1.bf16.msra.mxu0 0
    %2045 = vmatprep.subr.bf16.mxu0 0
    %2046 = vmatpush1.bf16.msra.mxu0 0
    %2047 = vmatprep.subr.bf16.mxu0 0
    %2048 = vmatpush1.bf16.msra.mxu0 0
    %2049 = vmatprep.subr.bf16.mxu0 0
    %2050 = vmatpush1.bf16.msra.mxu0 0
    %2051 = vmatprep.subr.bf16.mxu0 0
    %2052 = vmatpush1.bf16.msra.mxu0 0
    %2053 = vmatprep.subr.bf16.mxu0 0
    %2054 = vmatpush1.bf16.msra.mxu0 0
    %2055 = vmatprep.subr.bf16.mxu0 0
    %2056 = vmatpush1.bf16.msra.mxu0 0
    %2057 = vmatprep.subr.bf16.mxu0 0
    %2058 = vmatpush1.bf16.msra.mxu0 0
    %2059 = vmatprep.mubr.bf16.mxu0 0
    %2060 = vmatmul.mubr.bf16.gmra.mrb[0].mxu0 %v1857
    %v2061 = vpop.f32.mrb[0].mxu0
    %v2062 = vadd.f32 0.0, %v2061
    %v2063 = vpop.f32.mrb[0].mxu0
    %v2064 = vadd.f32 0.0, %v2063
    %v2065 = vpop.f32.mrb[0].mxu0
    %v2066 = vadd.f32 0.0, %v2065
    %v2067 = vpop.f32.mrb[0].mxu0
    %v2068 = vadd.f32 0.0, %v2067
    %2069 = vdwg.mxu0
    %2070 = vmatprep.subr.bf16.mxu0 0
    %2071 = vmatpush1.bf16.msra.mxu0 %v1981
    %2072 = vmatprep.subr.bf16.mxu0 0
    %2073 = vmatpush1.bf16.msra.mxu0 %v1984
    %2074 = vmatprep.subr.bf16.mxu0 0
    %2075 = vmatpush1.bf16.msra.mxu0 %v1987
    %2076 = vmatprep.subr.bf16.mxu0 0
    %2077 = vmatpush1.bf16.msra.mxu0 %v1990
    %2078 = vmatprep.subr.bf16.mxu0 0
    %2079 = vmatpush1.bf16.msra.mxu0 %v1993
    %2080 = vmatprep.subr.bf16.mxu0 0
    %2081 = vmatpush1.bf16.msra.mxu0 %v1996
    %2082 = vmatprep.subr.bf16.mxu0 0
    %2083 = vmatpush1.bf16.msra.mxu0 %v1999
    %2084 = vmatprep.subr.bf16.mxu0 0
    %2085 = vmatpush1.bf16.msra.mxu0 %v2002
    %2086 = vmatprep.subr.bf16.mxu0 0
    %2087 = vmatpush1.bf16.msra.mxu0 0
    %2088 = vmatprep.subr.bf16.mxu0 0
    %2089 = vmatpush1.bf16.msra.mxu0 0
    %2090 = vmatprep.subr.bf16.mxu0 0
    %2091 = vmatpush1.bf16.msra.mxu0 0
    %2092 = vmatprep.subr.bf16.mxu0 0
    %2093 = vmatpush1.bf16.msra.mxu0 0
    %2094 = vmatprep.subr.bf16.mxu0 0
    %2095 = vmatpush1.bf16.msra.mxu0 0
    %2096 = vmatprep.subr.bf16.mxu0 0
    %2097 = vmatpush1.bf16.msra.mxu0 0
    %2098 = vmatprep.subr.bf16.mxu0 0
    %2099 = vmatpush1.bf16.msra.mxu0 0
    %2100 = vmatprep.subr.bf16.mxu0 0
    %2101 = vmatpush1.bf16.msra.mxu0 0
    %2102 = vmatprep.mubr.bf16.mxu0 0
    %2103 = vmatmul.mubr.bf16.gmra.mrb[0].mxu0 %v1857
    %v2104 = vpop.f32.mrb[0].mxu0
    %v2105 = vadd.f32 0.0, %v2104
    %v2106 = vpop.f32.mrb[0].mxu0
    %v2107 = vpop.f32.mrb[0].mxu0
    %v2108 = vadd.f32 0.0, %v2107
    %v2109 = vpop.f32.mrb[0].mxu0
    %2110 = vdwg.mxu0
    %v2111 = vadd.f32 %v1861, %v2062
    %v2112 = vadd.f32 %v1864, %v2066
    %v2113 = vxor.u32 %v2111, 2147483648
    %v2114 = vxor.u32 %v2112, 2147483648
    %v2115 = vmul.f32 %v2113, 1.442695
    %v2116 = vpow.pop %v2115
    %v2117 = vmul.f32 %v2114, 1.442695
    %v2118 = vpow.pop %v2117
    %v2119 = vadd.f32 %v2116, 1.0
    %v2120 = vadd.f32 %v2118, 1.0
    %v2121 = vrcp.pop %v2119
    %v2122 = vmul.f32 1.0, %v2121
    %v2123 = vrcp.pop %v2120
    %v2124 = vmul.f32 1.0, %v2123
    %v2125 = vadd.f32 %v1862, %v2064
    %v2126 = vadd.f32 %v1865, %v2068
    %v2127 = vxor.u32 %v2125, 2147483648
    %v2128 = vxor.u32 %v2126, 2147483648
    %v2129 = vmul.f32 %v2127, 1.442695
    %v2130 = vpow.pop %v2129
    %v2131 = vmul.f32 %v2128, 1.442695
    %v2132 = vpow.pop %v2131
    %v2133 = vadd.f32 %v2130, 1.0
    %v2134 = vadd.f32 %v2132, 1.0
    %v2135 = vrcp.pop %v2133
    %v2136 = vmul.f32 1.0, %v2135
    %v2137 = vrcp.pop %v2134
    %v2138 = vmul.f32 1.0, %v2137
    %v2139 = vadd.f32 %v2105, %v673
    %v2140 = vadd.f32 %v2108, %v673
    %v2141 = vmul.f32 %v2122, %v2139
    %v2142 = vmul.f32 %v2124, %v2140
    %v2143 = vadd.f32 %v1863, %v2141
    %v2144 = vadd.f32 %v1866, %v2142
    %v2145 = vtanh.pop %v2143
    %v2146 = vtanh.pop %v2144
    %v2147 = vsub.f32 %v1855, %v2145
    %v2148 = vsub.f32 %v1856, %v2146
    %v2149 = vmul.f32 %v2136, %v2147
    %v2150 = vmul.f32 %v2138, %v2148
    %v2151 = vadd.f32 %v2145, %v2149
    %v2152 = vadd.f32 %v2146, %v2150
    %v2153 = vpack.c.bf16 %v2152, %v2151
    %s2154 = scalar_lea.vmem [#allocation3], 32
    %2155 = vst [vmem:[%s2154] sm:$0xff] %v2153
    %s2156 = scalar_lea.vmem [#allocation2], 240
    %v2157 = vld [vmem:[%s2156] sm:$0xff]
    %v2158 = vld [vmem:[%s2156 + $0x8] sm:$0xff]
    %v2159 = vld [vmem:[%s2156 + $0x10] sm:$0xff]
    %v2160 = vld [vmem:[%s2156 + $0x18] sm:$0xff]
    %v2161 = vld [vmem:[%s2156 + $0x20] sm:$0xff]
    %v2162 = vld [vmem:[%s2156 + $0x28] sm:$0xff]
    %v2163 = vld [vmem:[#allocation10] sm:$0xff]
    %v2164 = vld [vmem:[#allocation10 + $0x8] sm:$0xf]
    %v2165 = vld [vmem:[#allocation10 + $0xc] sm:$0xff]
    %v2166 = vld [vmem:[#allocation10 + $0x14] sm:$0xf]
    %v2167 = vld [vmem:[#allocation10 + $0x18] sm:$0xff]
    %v2168 = vld [vmem:[#allocation10 + $0x20] sm:$0xf]
    %v2169 = vld [vmem:[#allocation10 + $0x24] sm:$0xff]
    %v2170 = vld [vmem:[#allocation10 + $0x2c] sm:$0xf]
    %v2171 = vld [vmem:[#allocation10 + $0x30] sm:$0xff]
    %v2172 = vld [vmem:[#allocation10 + $0x38] sm:$0xf]
    %v2173 = vld [vmem:[#allocation10 + $0x3c] sm:$0xff]
    %v2174 = vld [vmem:[#allocation10 + $0x44] sm:$0xf]
    %v2175 = vld [vmem:[#allocation10 + $0x48] sm:$0xff]
    %v2176 = vld [vmem:[#allocation10 + $0x50] sm:$0xf]
    %v2177 = vld [vmem:[#allocation10 + $0x54] sm:$0xff]
    %v2178 = vld [vmem:[#allocation10 + $0x5c] sm:$0xf]
    %v2179 = vld [vmem:[#allocation10 + $0x60] sm:$0xff]
    %v2180 = vld [vmem:[#allocation10 + $0x68] sm:$0xf]
    %v2181 = vld [vmem:[#allocation10 + $0x6c] sm:$0xff]
    %v2182 = vld [vmem:[#allocation10 + $0x74] sm:$0xf]
    %v2183 = vld [vmem:[#allocation10 + $0x78] sm:$0xff]
    %v2184 = vld [vmem:[#allocation10 + $0x80] sm:$0xf]
    %v2185 = vld [vmem:[#allocation10 + $0x84] sm:$0xff]
    %v2186 = vld [vmem:[#allocation10 + $0x8c] sm:$0xf]
    %v2187 = vld [vmem:[#allocation10 + $0x90] sm:$0xff]
    %v2188 = vld [vmem:[#allocation10 + $0x98] sm:$0xf]
    %v2189 = vld [vmem:[#allocation10 + $0x9c] sm:$0xff]
    %v2190 = vld [vmem:[#allocation10 + $0xa4] sm:$0xf]
    %v2191 = vld [vmem:[#allocation10 + $0xa8] sm:$0xff]
    %v2192 = vld [vmem:[#allocation10 + $0xb0] sm:$0xf]
    %v2193 = vld [vmem:[#allocation10 + $0xb4] sm:$0xff]
    %v2194 = vld [vmem:[#allocation10 + $0xbc] sm:$0xf]
    %v2227 = vunpack.c.l.b16 %v2163
    %v2228 = vunpack.c.h.b16 %v2163
    %v2229 = vunpack.c.l.b16 %v2164
    %v2230 = vunpack.c.l.b16 %v2165
    %v2231 = vunpack.c.h.b16 %v2165
    %v2232 = vunpack.c.l.b16 %v2166
    %v2233 = vunpack.c.l.b16 %v2167
    %v2234 = vunpack.c.h.b16 %v2167
    %v2235 = vunpack.c.l.b16 %v2168
    %v2236 = vunpack.c.l.b16 %v2169
    %v2237 = vunpack.c.h.b16 %v2169
    %v2238 = vunpack.c.l.b16 %v2170
    %v2239 = vunpack.c.l.b16 %v2171
    %v2240 = vunpack.c.h.b16 %v2171
    %v2241 = vunpack.c.l.b16 %v2172
    %v2242 = vunpack.c.l.b16 %v2173
    %v2243 = vunpack.c.h.b16 %v2173
    %v2244 = vunpack.c.l.b16 %v2174
    %v2245 = vunpack.c.l.b16 %v2175
    %v2246 = vunpack.c.h.b16 %v2175
    %v2247 = vunpack.c.l.b16 %v2176
    %v2248 = vunpack.c.l.b16 %v2177
    %v2249 = vunpack.c.h.b16 %v2177
    %v2250 = vunpack.c.l.b16 %v2178
    %v2251 = vunpack.c.l.b16 %v2179
    %v2252 = vunpack.c.h.b16 %v2179
    %v2253 = vunpack.c.l.b16 %v2180
    %v2254 = vunpack.c.l.b16 %v2181
    %v2255 = vunpack.c.h.b16 %v2181
    %v2256 = vunpack.c.l.b16 %v2182
    %v2257 = vunpack.c.l.b16 %v2183
    %v2258 = vunpack.c.h.b16 %v2183
    %v2259 = vunpack.c.l.b16 %v2184
    %v2260 = vunpack.c.l.b16 %v2185
    %v2261 = vunpack.c.h.b16 %v2185
    %v2262 = vunpack.c.l.b16 %v2186
    %v2263 = vunpack.c.l.b16 %v2187
    %v2264 = vunpack.c.h.b16 %v2187
    %v2265 = vunpack.c.l.b16 %v2188
    %v2266 = vunpack.c.l.b16 %v2189
    %v2267 = vunpack.c.h.b16 %v2189
    %v2268 = vunpack.c.l.b16 %v2190
    %v2269 = vunpack.c.l.b16 %v2191
    %v2270 = vunpack.c.h.b16 %v2191
    %v2271 = vunpack.c.l.b16 %v2192
    %v2272 = vunpack.c.l.b16 %v2193
    %v2273 = vunpack.c.h.b16 %v2193
    %v2274 = vunpack.c.l.b16 %v2194
    %v2275 = vpack.c.b16 %v2230, %v2227
    %v2276 = vpack.c.b16 %v2231, %v2228
    %v2277 = vpack.c.b16 %v2232, %v2229
    %v2278 = vpack.c.b16 %v2236, %v2233
    %v2279 = vpack.c.b16 %v2237, %v2234
    %v2280 = vpack.c.b16 %v2238, %v2235
    %v2281 = vpack.c.b16 %v2242, %v2239
    %v2282 = vpack.c.b16 %v2243, %v2240
    %v2283 = vpack.c.b16 %v2244, %v2241
    %v2284 = vpack.c.b16 %v2248, %v2245
    %v2285 = vpack.c.b16 %v2249, %v2246
    %v2286 = vpack.c.b16 %v2250, %v2247
    %v2287 = vpack.c.b16 %v2254, %v2251
    %v2288 = vpack.c.b16 %v2255, %v2252
    %v2289 = vpack.c.b16 %v2256, %v2253
    %v2290 = vpack.c.b16 %v2260, %v2257
    %v2291 = vpack.c.b16 %v2261, %v2258
    %v2292 = vpack.c.b16 %v2262, %v2259
    %v2293 = vpack.c.b16 %v2266, %v2263
    %v2294 = vpack.c.b16 %v2267, %v2264
    %v2295 = vpack.c.b16 %v2268, %v2265
    %v2296 = vpack.c.b16 %v2272, %v2269
    %v2297 = vpack.c.b16 %v2273, %v2270
    %v2298 = vpack.c.b16 %v2274, %v2271
    %2323 = vmatprep.subr.bf16.mxu0 %v2276
    %2324 = vmatpush1.bf16.msra.mxu0 %v2275
    %2325 = vmatprep.subr.bf16.mxu0 %v2279
    %2326 = vmatpush1.bf16.msra.mxu0 %v2278
    %2327 = vmatprep.subr.bf16.mxu0 %v2282
    %2328 = vmatpush1.bf16.msra.mxu0 %v2281
    %2329 = vmatprep.subr.bf16.mxu0 %v2285
    %2330 = vmatpush1.bf16.msra.mxu0 %v2284
    %2331 = vmatprep.subr.bf16.mxu0 %v2288
    %2332 = vmatpush1.bf16.msra.mxu0 %v2287
    %2333 = vmatprep.subr.bf16.mxu0 %v2291
    %2334 = vmatpush1.bf16.msra.mxu0 %v2290
    %2335 = vmatprep.subr.bf16.mxu0 %v2294
    %2336 = vmatpush1.bf16.msra.mxu0 %v2293
    %2337 = vmatprep.subr.bf16.mxu0 %v2297
    %2338 = vmatpush1.bf16.msra.mxu0 %v2296
    %2339 = vmatprep.subr.bf16.mxu0 0
    %2340 = vmatpush1.bf16.msra.mxu0 0
    %2341 = vmatprep.subr.bf16.mxu0 0
    %2342 = vmatpush1.bf16.msra.mxu0 0
    %2343 = vmatprep.subr.bf16.mxu0 0
    %2344 = vmatpush1.bf16.msra.mxu0 0
    %2345 = vmatprep.subr.bf16.mxu0 0
    %2346 = vmatpush1.bf16.msra.mxu0 0
    %2347 = vmatprep.subr.bf16.mxu0 0
    %2348 = vmatpush1.bf16.msra.mxu0 0
    %2349 = vmatprep.subr.bf16.mxu0 0
    %2350 = vmatpush1.bf16.msra.mxu0 0
    %2351 = vmatprep.subr.bf16.mxu0 0
    %2352 = vmatpush1.bf16.msra.mxu0 0
    %2353 = vmatprep.subr.bf16.mxu0 0
    %2354 = vmatpush1.bf16.msra.mxu0 0
    %2355 = vmatprep.mubr.bf16.mxu0 0
    %2356 = vmatmul.mubr.bf16.gmra.mrb[0].mxu0 %v2153
    %v2357 = vpop.f32.mrb[0].mxu0
    %v2358 = vadd.f32 0.0, %v2357
    %v2359 = vpop.f32.mrb[0].mxu0
    %v2360 = vadd.f32 0.0, %v2359
    %v2361 = vpop.f32.mrb[0].mxu0
    %v2362 = vadd.f32 0.0, %v2361
    %v2363 = vpop.f32.mrb[0].mxu0
    %v2364 = vadd.f32 0.0, %v2363
    %2365 = vdwg.mxu0
    %2366 = vmatprep.subr.bf16.mxu0 0
    %2367 = vmatpush1.bf16.msra.mxu0 %v2277
    %2368 = vmatprep.subr.bf16.mxu0 0
    %2369 = vmatpush1.bf16.msra.mxu0 %v2280
    %2370 = vmatprep.subr.bf16.mxu0 0
    %2371 = vmatpush1.bf16.msra.mxu0 %v2283
    %2372 = vmatprep.subr.bf16.mxu0 0
    %2373 = vmatpush1.bf16.msra.mxu0 %v2286
    %2374 = vmatprep.subr.bf16.mxu0 0
    %2375 = vmatpush1.bf16.msra.mxu0 %v2289
    %2376 = vmatprep.subr.bf16.mxu0 0
    %2377 = vmatpush1.bf16.msra.mxu0 %v2292
    %2378 = vmatprep.subr.bf16.mxu0 0
    %2379 = vmatpush1.bf16.msra.mxu0 %v2295
    %2380 = vmatprep.subr.bf16.mxu0 0
    %2381 = vmatpush1.bf16.msra.mxu0 %v2298
    %2382 = vmatprep.subr.bf16.mxu0 0
    %2383 = vmatpush1.bf16.msra.mxu0 0
    %2384 = vmatprep.subr.bf16.mxu0 0
    %2385 = vmatpush1.bf16.msra.mxu0 0
    %2386 = vmatprep.subr.bf16.mxu0 0
    %2387 = vmatpush1.bf16.msra.mxu0 0
    %2388 = vmatprep.subr.bf16.mxu0 0
    %2389 = vmatpush1.bf16.msra.mxu0 0
    %2390 = vmatprep.subr.bf16.mxu0 0
    %2391 = vmatpush1.bf16.msra.mxu0 0
    %2392 = vmatprep.subr.bf16.mxu0 0
    %2393 = vmatpush1.bf16.msra.mxu0 0
    %2394 = vmatprep.subr.bf16.mxu0 0
    %2395 = vmatpush1.bf16.msra.mxu0 0
    %2396 = vmatprep.subr.bf16.mxu0 0
    %2397 = vmatpush1.bf16.msra.mxu0 0
    %2398 = vmatprep.mubr.bf16.mxu0 0
    %2399 = vmatmul.mubr.bf16.gmra.mrb[0].mxu0 %v2153
    %v2400 = vpop.f32.mrb[0].mxu0
    %v2401 = vadd.f32 0.0, %v2400
    %v2402 = vpop.f32.mrb[0].mxu0
    %v2403 = vpop.f32.mrb[0].mxu0
    %v2404 = vadd.f32 0.0, %v2403
    %v2405 = vpop.f32.mrb[0].mxu0
    %2406 = vdwg.mxu0
    %v2407 = vadd.f32 %v2157, %v2358
    %v2408 = vadd.f32 %v2160, %v2362
    %v2409 = vxor.u32 %v2407, 2147483648
    %v2410 = vxor.u32 %v2408, 2147483648
    %v2411 = vmul.f32 %v2409, 1.442695
    %v2412 = vpow.pop %v2411
    %v2413 = vmul.f32 %v2410, 1.442695
    %v2414 = vpow.pop %v2413
    %v2415 = vadd.f32 %v2412, 1.0
    %v2416 = vadd.f32 %v2414, 1.0
    %v2417 = vrcp.pop %v2415
    %v2418 = vmul.f32 1.0, %v2417
    %v2419 = vrcp.pop %v2416
    %v2420 = vmul.f32 1.0, %v2419
    %v2421 = vadd.f32 %v2158, %v2360
    %v2422 = vadd.f32 %v2161, %v2364
    %v2423 = vxor.u32 %v2421, 2147483648
    %v2424 = vxor.u32 %v2422, 2147483648
    %v2425 = vmul.f32 %v2423, 1.442695
    %v2426 = vpow.pop %v2425
    %v2427 = vmul.f32 %v2424, 1.442695
    %v2428 = vpow.pop %v2427
    %v2429 = vadd.f32 %v2426, 1.0
    %v2430 = vadd.f32 %v2428, 1.0
    %v2431 = vrcp.pop %v2429
    %v2432 = vmul.f32 1.0, %v2431
    %v2433 = vrcp.pop %v2430
    %v2434 = vmul.f32 1.0, %v2433
    %v2435 = vadd.f32 %v2401, %v673
    %v2436 = vadd.f32 %v2404, %v673
    %v2437 = vmul.f32 %v2418, %v2435
    %v2438 = vmul.f32 %v2420, %v2436
    %v2439 = vadd.f32 %v2159, %v2437
    %v2440 = vadd.f32 %v2162, %v2438
    %v2441 = vtanh.pop %v2439
    %v2442 = vtanh.pop %v2440
    %v2443 = vsub.f32 %v2151, %v2441
    %v2444 = vsub.f32 %v2152, %v2442
    %v2445 = vmul.f32 %v2432, %v2443
    %v2446 = vmul.f32 %v2434, %v2444
    %v2447 = vadd.f32 %v2441, %v2445
    %v2448 = vadd.f32 %v2442, %v2446
    %v2449 = vpack.c.bf16 %v2448, %v2447
    %s2450 = scalar_lea.vmem [#allocation3], 40
    %2451 = vst [vmem:[%s2450] sm:$0xff] %v2449
    %s2452 = scalar_lea.vmem [#allocation2], 288
    %v2453 = vld [vmem:[%s2452] sm:$0xff]
    %v2454 = vld [vmem:[%s2452 + $0x8] sm:$0xff]
    %v2455 = vld [vmem:[%s2452 + $0x10] sm:$0xff]
    %v2456 = vld [vmem:[%s2452 + $0x18] sm:$0xff]
    %v2457 = vld [vmem:[%s2452 + $0x20] sm:$0xff]
    %v2458 = vld [vmem:[%s2452 + $0x28] sm:$0xff]
    %v2459 = vld [vmem:[#allocation10] sm:$0xff]
    %v2460 = vld [vmem:[#allocation10 + $0x8] sm:$0xf]
    %v2461 = vld [vmem:[#allocation10 + $0xc] sm:$0xff]
    %v2462 = vld [vmem:[#allocation10 + $0x14] sm:$0xf]
    %v2463 = vld [vmem:[#allocation10 + $0x18] sm:$0xff]
    %v2464 = vld [vmem:[#allocation10 + $0x20] sm:$0xf]
    %v2465 = vld [vmem:[#allocation10 + $0x24] sm:$0xff]
    %v2466 = vld [vmem:[#allocation10 + $0x2c] sm:$0xf]
    %v2467 = vld [vmem:[#allocation10 + $0x30] sm:$0xff]
    %v2468 = vld [vmem:[#allocation10 + $0x38] sm:$0xf]
    %v2469 = vld [vmem:[#allocation10 + $0x3c] sm:$0xff]
    %v2470 = vld [vmem:[#allocation10 + $0x44] sm:$0xf]
    %v2471 = vld [vmem:[#allocation10 + $0x48] sm:$0xff]
    %v2472 = vld [vmem:[#allocation10 + $0x50] sm:$0xf]
    %v2473 = vld [vmem:[#allocation10 + $0x54] sm:$0xff]
    %v2474 = vld [vmem:[#allocation10 + $0x5c] sm:$0xf]
    %v2475 = vld [vmem:[#allocation10 + $0x60] sm:$0xff]
    %v2476 = vld [vmem:[#allocation10 + $0x68] sm:$0xf]
    %v2477 = vld [vmem:[#allocation10 + $0x6c] sm:$0xff]
    %v2478 = vld [vmem:[#allocation10 + $0x74] sm:$0xf]
    %v2479 = vld [vmem:[#allocation10 + $0x78] sm:$0xff]
    %v2480 = vld [vmem:[#allocation10 + $0x80] sm:$0xf]
    %v2481 = vld [vmem:[#allocation10 + $0x84] sm:$0xff]
    %v2482 = vld [vmem:[#allocation10 + $0x8c] sm:$0xf]
    %v2483 = vld [vmem:[#allocation10 + $0x90] sm:$0xff]
    %v2484 = vld [vmem:[#allocation10 + $0x98] sm:$0xf]
    %v2485 = vld [vmem:[#allocation10 + $0x9c] sm:$0xff]
    %v2486 = vld [vmem:[#allocation10 + $0xa4] sm:$0xf]
    %v2487 = vld [vmem:[#allocation10 + $0xa8] sm:$0xff]
    %v2488 = vld [vmem:[#allocation10 + $0xb0] sm:$0xf]
    %v2489 = vld [vmem:[#allocation10 + $0xb4] sm:$0xff]
    %v2490 = vld [vmem:[#allocation10 + $0xbc] sm:$0xf]
    %v2523 = vunpack.c.l.b16 %v2459
    %v2524 = vunpack.c.h.b16 %v2459
    %v2525 = vunpack.c.l.b16 %v2460
    %v2526 = vunpack.c.l.b16 %v2461
    %v2527 = vunpack.c.h.b16 %v2461
    %v2528 = vunpack.c.l.b16 %v2462
    %v2529 = vunpack.c.l.b16 %v2463
    %v2530 = vunpack.c.h.b16 %v2463
    %v2531 = vunpack.c.l.b16 %v2464
    %v2532 = vunpack.c.l.b16 %v2465
    %v2533 = vunpack.c.h.b16 %v2465
    %v2534 = vunpack.c.l.b16 %v2466
    %v2535 = vunpack.c.l.b16 %v2467
    %v2536 = vunpack.c.h.b16 %v2467
    %v2537 = vunpack.c.l.b16 %v2468
    %v2538 = vunpack.c.l.b16 %v2469
    %v2539 = vunpack.c.h.b16 %v2469
    %v2540 = vunpack.c.l.b16 %v2470
    %v2541 = vunpack.c.l.b16 %v2471
    %v2542 = vunpack.c.h.b16 %v2471
    %v2543 = vunpack.c.l.b16 %v2472
    %v2544 = vunpack.c.l.b16 %v2473
    %v2545 = vunpack.c.h.b16 %v2473
    %v2546 = vunpack.c.l.b16 %v2474
    %v2547 = vunpack.c.l.b16 %v2475
    %v2548 = vunpack.c.h.b16 %v2475
    %v2549 = vunpack.c.l.b16 %v2476
    %v2550 = vunpack.c.l.b16 %v2477
    %v2551 = vunpack.c.h.b16 %v2477
    %v2552 = vunpack.c.l.b16 %v2478
    %v2553 = vunpack.c.l.b16 %v2479
    %v2554 = vunpack.c.h.b16 %v2479
    %v2555 = vunpack.c.l.b16 %v2480
    %v2556 = vunpack.c.l.b16 %v2481
    %v2557 = vunpack.c.h.b16 %v2481
    %v2558 = vunpack.c.l.b16 %v2482
    %v2559 = vunpack.c.l.b16 %v2483
    %v2560 = vunpack.c.h.b16 %v2483
    %v2561 = vunpack.c.l.b16 %v2484
    %v2562 = vunpack.c.l.b16 %v2485
    %v2563 = vunpack.c.h.b16 %v2485
    %v2564 = vunpack.c.l.b16 %v2486
    %v2565 = vunpack.c.l.b16 %v2487
    %v2566 = vunpack.c.h.b16 %v2487
    %v2567 = vunpack.c.l.b16 %v2488
    %v2568 = vunpack.c.l.b16 %v2489
    %v2569 = vunpack.c.h.b16 %v2489
    %v2570 = vunpack.c.l.b16 %v2490
    %v2571 = vpack.c.b16 %v2526, %v2523
    %v2572 = vpack.c.b16 %v2527, %v2524
    %v2573 = vpack.c.b16 %v2528, %v2525
    %v2574 = vpack.c.b16 %v2532, %v2529
    %v2575 = vpack.c.b16 %v2533, %v2530
    %v2576 = vpack.c.b16 %v2534, %v2531
    %v2577 = vpack.c.b16 %v2538, %v2535
    %v2578 = vpack.c.b16 %v2539, %v2536
    %v2579 = vpack.c.b16 %v2540, %v2537
    %v2580 = vpack.c.b16 %v2544, %v2541
    %v2581 = vpack.c.b16 %v2545, %v2542
    %v2582 = vpack.c.b16 %v2546, %v2543
    %v2583 = vpack.c.b16 %v2550, %v2547
    %v2584 = vpack.c.b16 %v2551, %v2548
    %v2585 = vpack.c.b16 %v2552, %v2549
    %v2586 = vpack.c.b16 %v2556, %v2553
    %v2587 = vpack.c.b16 %v2557, %v2554
    %v2588 = vpack.c.b16 %v2558, %v2555
    %v2589 = vpack.c.b16 %v2562, %v2559
    %v2590 = vpack.c.b16 %v2563, %v2560
    %v2591 = vpack.c.b16 %v2564, %v2561
    %v2592 = vpack.c.b16 %v2568, %v2565
    %v2593 = vpack.c.b16 %v2569, %v2566
    %v2594 = vpack.c.b16 %v2570, %v2567
    %2619 = vmatprep.subr.bf16.mxu0 %v2572
    %2620 = vmatpush1.bf16.msra.mxu0 %v2571
    %2621 = vmatprep.subr.bf16.mxu0 %v2575
    %2622 = vmatpush1.bf16.msra.mxu0 %v2574
    %2623 = vmatprep.subr.bf16.mxu0 %v2578
    %2624 = vmatpush1.bf16.msra.mxu0 %v2577
    %2625 = vmatprep.subr.bf16.mxu0 %v2581
    %2626 = vmatpush1.bf16.msra.mxu0 %v2580
    %2627 = vmatprep.subr.bf16.mxu0 %v2584
    %2628 = vmatpush1.bf16.msra.mxu0 %v2583
    %2629 = vmatprep.subr.bf16.mxu0 %v2587
    %2630 = vmatpush1.bf16.msra.mxu0 %v2586
    %2631 = vmatprep.subr.bf16.mxu0 %v2590
    %2632 = vmatpush1.bf16.msra.mxu0 %v2589
    %2633 = vmatprep.subr.bf16.mxu0 %v2593
    %2634 = vmatpush1.bf16.msra.mxu0 %v2592
    %2635 = vmatprep.subr.bf16.mxu0 0
    %2636 = vmatpush1.bf16.msra.mxu0 0
    %2637 = vmatprep.subr.bf16.mxu0 0
    %2638 = vmatpush1.bf16.msra.mxu0 0
    %2639 = vmatprep.subr.bf16.mxu0 0
    %2640 = vmatpush1.bf16.msra.mxu0 0
    %2641 = vmatprep.subr.bf16.mxu0 0
    %2642 = vmatpush1.bf16.msra.mxu0 0
    %2643 = vmatprep.subr.bf16.mxu0 0
    %2644 = vmatpush1.bf16.msra.mxu0 0
    %2645 = vmatprep.subr.bf16.mxu0 0
    %2646 = vmatpush1.bf16.msra.mxu0 0
    %2647 = vmatprep.subr.bf16.mxu0 0
    %2648 = vmatpush1.bf16.msra.mxu0 0
    %2649 = vmatprep.subr.bf16.mxu0 0
    %2650 = vmatpush1.bf16.msra.mxu0 0
    %2651 = vmatprep.mubr.bf16.mxu0 0
    %2652 = vmatmul.mubr.bf16.gmra.mrb[0].mxu0 %v2449
    %v2653 = vpop.f32.mrb[0].mxu0
    %v2654 = vadd.f32 0.0, %v2653
    %v2655 = vpop.f32.mrb[0].mxu0
    %v2656 = vadd.f32 0.0, %v2655
    %v2657 = vpop.f32.mrb[0].mxu0
    %v2658 = vadd.f32 0.0, %v2657
    %v2659 = vpop.f32.mrb[0].mxu0
    %v2660 = vadd.f32 0.0, %v2659
    %2661 = vdwg.mxu0
    %2662 = vmatprep.subr.bf16.mxu0 0
    %2663 = vmatpush1.bf16.msra.mxu0 %v2573
    %2664 = vmatprep.subr.bf16.mxu0 0
    %2665 = vmatpush1.bf16.msra.mxu0 %v2576
    %2666 = vmatprep.subr.bf16.mxu0 0
    %2667 = vmatpush1.bf16.msra.mxu0 %v2579
    %2668 = vmatprep.subr.bf16.mxu0 0
    %2669 = vmatpush1.bf16.msra.mxu0 %v2582
    %2670 = vmatprep.subr.bf16.mxu0 0
    %2671 = vmatpush1.bf16.msra.mxu0 %v2585
    %2672 = vmatprep.subr.bf16.mxu0 0
    %2673 = vmatpush1.bf16.msra.mxu0 %v2588
    %2674 = vmatprep.subr.bf16.mxu0 0
    %2675 = vmatpush1.bf16.msra.mxu0 %v2591
    %2676 = vmatprep.subr.bf16.mxu0 0
    %2677 = vmatpush1.bf16.msra.mxu0 %v2594
    %2678 = vmatprep.subr.bf16.mxu0 0
    %2679 = vmatpush1.bf16.msra.mxu0 0
    %2680 = vmatprep.subr.bf16.mxu0 0
    %2681 = vmatpush1.bf16.msra.mxu0 0
    %2682 = vmatprep.subr.bf16.mxu0 0
    %2683 = vmatpush1.bf16.msra.mxu0 0
    %2684 = vmatprep.subr.bf16.mxu0 0
    %2685 = vmatpush1.bf16.msra.mxu0 0
    %2686 = vmatprep.subr.bf16.mxu0 0
    %2687 = vmatpush1.bf16.msra.mxu0 0
    %2688 = vmatprep.subr.bf16.mxu0 0
    %2689 = vmatpush1.bf16.msra.mxu0 0
    %2690 = vmatprep.subr.bf16.mxu0 0
    %2691 = vmatpush1.bf16.msra.mxu0 0
    %2692 = vmatprep.subr.bf16.mxu0 0
    %2693 = vmatpush1.bf16.msra.mxu0 0
    %2694 = vmatprep.mubr.bf16.mxu0 0
    %2695 = vmatmul.mubr.bf16.gmra.mrb[0].mxu0 %v2449
    %v2696 = vpop.f32.mrb[0].mxu0
    %v2697 = vadd.f32 0.0, %v2696
    %v2698 = vpop.f32.mrb[0].mxu0
    %v2699 = vpop.f32.mrb[0].mxu0
    %v2700 = vadd.f32 0.0, %v2699
    %v2701 = vpop.f32.mrb[0].mxu0
    %2702 = vdwg.mxu0
    %v2703 = vadd.f32 %v2453, %v2654
    %v2704 = vadd.f32 %v2456, %v2658
    %v2705 = vxor.u32 %v2703, 2147483648
    %v2706 = vxor.u32 %v2704, 2147483648
    %v2707 = vmul.f32 %v2705, 1.442695
    %v2708 = vpow.pop %v2707
    %v2709 = vmul.f32 %v2706, 1.442695
    %v2710 = vpow.pop %v2709
    %v2711 = vadd.f32 %v2708, 1.0
    %v2712 = vadd.f32 %v2710, 1.0
    %v2713 = vrcp.pop %v2711
    %v2714 = vmul.f32 1.0, %v2713
    %v2715 = vrcp.pop %v2712
    %v2716 = vmul.f32 1.0, %v2715
    %v2717 = vadd.f32 %v2454, %v2656
    %v2718 = vadd.f32 %v2457, %v2660
    %v2719 = vxor.u32 %v2717, 2147483648
    %v2720 = vxor.u32 %v2718, 2147483648
    %v2721 = vmul.f32 %v2719, 1.442695
    %v2722 = vpow.pop %v2721
    %v2723 = vmul.f32 %v2720, 1.442695
    %v2724 = vpow.pop %v2723
    %v2725 = vadd.f32 %v2722, 1.0
    %v2726 = vadd.f32 %v2724, 1.0
    %v2727 = vrcp.pop %v2725
    %v2728 = vmul.f32 1.0, %v2727
    %v2729 = vrcp.pop %v2726
    %v2730 = vmul.f32 1.0, %v2729
    %v2731 = vadd.f32 %v2697, %v673
    %v2732 = vadd.f32 %v2700, %v673
    %v2733 = vmul.f32 %v2714, %v2731
    %v2734 = vmul.f32 %v2716, %v2732
    %v2735 = vadd.f32 %v2455, %v2733
    %v2736 = vadd.f32 %v2458, %v2734
    %v2737 = vtanh.pop %v2735
    %v2738 = vtanh.pop %v2736
    %v2739 = vsub.f32 %v2447, %v2737
    %v2740 = vsub.f32 %v2448, %v2738
    %v2741 = vmul.f32 %v2728, %v2739
    %v2742 = vmul.f32 %v2730, %v2740
    %v2743 = vadd.f32 %v2737, %v2741
    %v2744 = vadd.f32 %v2738, %v2742
    %v2745 = vpack.c.bf16 %v2744, %v2743
    %s2746 = scalar_lea.vmem [#allocation3], 48
    %2747 = vst [vmem:[%s2746] sm:$0xff] %v2745
    %s2748 = scalar_lea.vmem [#allocation2], 336
    %v2749 = vld [vmem:[%s2748] sm:$0xff]
    %v2750 = vld [vmem:[%s2748 + $0x8] sm:$0xff]
    %v2751 = vld [vmem:[%s2748 + $0x10] sm:$0xff]
    %v2752 = vld [vmem:[%s2748 + $0x18] sm:$0xff]
    %v2753 = vld [vmem:[%s2748 + $0x20] sm:$0xff]
    %v2754 = vld [vmem:[%s2748 + $0x28] sm:$0xff]
    %v2755 = vld [vmem:[#allocation10] sm:$0xff]
    %v2756 = vld [vmem:[#allocation10 + $0x8] sm:$0xf]
    %v2757 = vld [vmem:[#allocation10 + $0xc] sm:$0xff]
    %v2758 = vld [vmem:[#allocation10 + $0x14] sm:$0xf]
    %v2759 = vld [vmem:[#allocation10 + $0x18] sm:$0xff]
    %v2760 = vld [vmem:[#allocation10 + $0x20] sm:$0xf]
    %v2761 = vld [vmem:[#allocation10 + $0x24] sm:$0xff]
    %v2762 = vld [vmem:[#allocation10 + $0x2c] sm:$0xf]
    %v2763 = vld [vmem:[#allocation10 + $0x30] sm:$0xff]
    %v2764 = vld [vmem:[#allocation10 + $0x38] sm:$0xf]
    %v2765 = vld [vmem:[#allocation10 + $0x3c] sm:$0xff]
    %v2766 = vld [vmem:[#allocation10 + $0x44] sm:$0xf]
    %v2767 = vld [vmem:[#allocation10 + $0x48] sm:$0xff]
    %v2768 = vld [vmem:[#allocation10 + $0x50] sm:$0xf]
    %v2769 = vld [vmem:[#allocation10 + $0x54] sm:$0xff]
    %v2770 = vld [vmem:[#allocation10 + $0x5c] sm:$0xf]
    %v2771 = vld [vmem:[#allocation10 + $0x60] sm:$0xff]
    %v2772 = vld [vmem:[#allocation10 + $0x68] sm:$0xf]
    %v2773 = vld [vmem:[#allocation10 + $0x6c] sm:$0xff]
    %v2774 = vld [vmem:[#allocation10 + $0x74] sm:$0xf]
    %v2775 = vld [vmem:[#allocation10 + $0x78] sm:$0xff]
    %v2776 = vld [vmem:[#allocation10 + $0x80] sm:$0xf]
    %v2777 = vld [vmem:[#allocation10 + $0x84] sm:$0xff]
    %v2778 = vld [vmem:[#allocation10 + $0x8c] sm:$0xf]
    %v2779 = vld [vmem:[#allocation10 + $0x90] sm:$0xff]
    %v2780 = vld [vmem:[#allocation10 + $0x98] sm:$0xf]
    %v2781 = vld [vmem:[#allocation10 + $0x9c] sm:$0xff]
    %v2782 = vld [vmem:[#allocation10 + $0xa4] sm:$0xf]
    %v2783 = vld [vmem:[#allocation10 + $0xa8] sm:$0xff]
    %v2784 = vld [vmem:[#allocation10 + $0xb0] sm:$0xf]
    %v2785 = vld [vmem:[#allocation10 + $0xb4] sm:$0xff]
    %v2786 = vld [vmem:[#allocation10 + $0xbc] sm:$0xf]
    %v2819 = vunpack.c.l.b16 %v2755
    %v2820 = vunpack.c.h.b16 %v2755
    %v2821 = vunpack.c.l.b16 %v2756
    %v2822 = vunpack.c.l.b16 %v2757
    %v2823 = vunpack.c.h.b16 %v2757
    %v2824 = vunpack.c.l.b16 %v2758
    %v2825 = vunpack.c.l.b16 %v2759
    %v2826 = vunpack.c.h.b16 %v2759
    %v2827 = vunpack.c.l.b16 %v2760
    %v2828 = vunpack.c.l.b16 %v2761
    %v2829 = vunpack.c.h.b16 %v2761
    %v2830 = vunpack.c.l.b16 %v2762
    %v2831 = vunpack.c.l.b16 %v2763
    %v2832 = vunpack.c.h.b16 %v2763
    %v2833 = vunpack.c.l.b16 %v2764
    %v2834 = vunpack.c.l.b16 %v2765
    %v2835 = vunpack.c.h.b16 %v2765
    %v2836 = vunpack.c.l.b16 %v2766
    %v2837 = vunpack.c.l.b16 %v2767
    %v2838 = vunpack.c.h.b16 %v2767
    %v2839 = vunpack.c.l.b16 %v2768
    %v2840 = vunpack.c.l.b16 %v2769
    %v2841 = vunpack.c.h.b16 %v2769
    %v2842 = vunpack.c.l.b16 %v2770
    %v2843 = vunpack.c.l.b16 %v2771
    %v2844 = vunpack.c.h.b16 %v2771
    %v2845 = vunpack.c.l.b16 %v2772
    %v2846 = vunpack.c.l.b16 %v2773
    %v2847 = vunpack.c.h.b16 %v2773
    %v2848 = vunpack.c.l.b16 %v2774
    %v2849 = vunpack.c.l.b16 %v2775
    %v2850 = vunpack.c.h.b16 %v2775
    %v2851 = vunpack.c.l.b16 %v2776
    %v2852 = vunpack.c.l.b16 %v2777
    %v2853 = vunpack.c.h.b16 %v2777
    %v2854 = vunpack.c.l.b16 %v2778
    %v2855 = vunpack.c.l.b16 %v2779
    %v2856 = vunpack.c.h.b16 %v2779
    %v2857 = vunpack.c.l.b16 %v2780
    %v2858 = vunpack.c.l.b16 %v2781
    %v2859 = vunpack.c.h.b16 %v2781
    %v2860 = vunpack.c.l.b16 %v2782
    %v2861 = vunpack.c.l.b16 %v2783
    %v2862 = vunpack.c.h.b16 %v2783
    %v2863 = vunpack.c.l.b16 %v2784
    %v2864 = vunpack.c.l.b16 %v2785
    %v2865 = vunpack.c.h.b16 %v2785
    %v2866 = vunpack.c.l.b16 %v2786
    %v2867 = vpack.c.b16 %v2822, %v2819
    %v2868 = vpack.c.b16 %v2823, %v2820
    %v2869 = vpack.c.b16 %v2824, %v2821
    %v2870 = vpack.c.b16 %v2828, %v2825
    %v2871 = vpack.c.b16 %v2829, %v2826
    %v2872 = vpack.c.b16 %v2830, %v2827
    %v2873 = vpack.c.b16 %v2834, %v2831
    %v2874 = vpack.c.b16 %v2835, %v2832
    %v2875 = vpack.c.b16 %v2836, %v2833
    %v2876 = vpack.c.b16 %v2840, %v2837
    %v2877 = vpack.c.b16 %v2841, %v2838
    %v2878 = vpack.c.b16 %v2842, %v2839
    %v2879 = vpack.c.b16 %v2846, %v2843
    %v2880 = vpack.c.b16 %v2847, %v2844
    %v2881 = vpack.c.b16 %v2848, %v2845
    %v2882 = vpack.c.b16 %v2852, %v2849
    %v2883 = vpack.c.b16 %v2853, %v2850
    %v2884 = vpack.c.b16 %v2854, %v2851
    %v2885 = vpack.c.b16 %v2858, %v2855
    %v2886 = vpack.c.b16 %v2859, %v2856
    %v2887 = vpack.c.b16 %v2860, %v2857
    %v2888 = vpack.c.b16 %v2864, %v2861
    %v2889 = vpack.c.b16 %v2865, %v2862
    %v2890 = vpack.c.b16 %v2866, %v2863
    %2915 = vmatprep.subr.bf16.mxu0 %v2868
    %2916 = vmatpush1.bf16.msra.mxu0 %v2867
    %2917 = vmatprep.subr.bf16.mxu0 %v2871
    %2918 = vmatpush1.bf16.msra.mxu0 %v2870
    %2919 = vmatprep.subr.bf16.mxu0 %v2874
    %2920 = vmatpush1.bf16.msra.mxu0 %v2873
    %2921 = vmatprep.subr.bf16.mxu0 %v2877
    %2922 = vmatpush1.bf16.msra.mxu0 %v2876
    %2923 = vmatprep.subr.bf16.mxu0 %v2880
    %2924 = vmatpush1.bf16.msra.mxu0 %v2879
    %2925 = vmatprep.subr.bf16.mxu0 %v2883
    %2926 = vmatpush1.bf16.msra.mxu0 %v2882
    %2927 = vmatprep.subr.bf16.mxu0 %v2886
    %2928 = vmatpush1.bf16.msra.mxu0 %v2885
    %2929 = vmatprep.subr.bf16.mxu0 %v2889
    %2930 = vmatpush1.bf16.msra.mxu0 %v2888
    %2931 = vmatprep.subr.bf16.mxu0 0
    %2932 = vmatpush1.bf16.msra.mxu0 0
    %2933 = vmatprep.subr.bf16.mxu0 0
    %2934 = vmatpush1.bf16.msra.mxu0 0
    %2935 = vmatprep.subr.bf16.mxu0 0
    %2936 = vmatpush1.bf16.msra.mxu0 0
    %2937 = vmatprep.subr.bf16.mxu0 0
    %2938 = vmatpush1.bf16.msra.mxu0 0
    %2939 = vmatprep.subr.bf16.mxu0 0
    %2940 = vmatpush1.bf16.msra.mxu0 0
    %2941 = vmatprep.subr.bf16.mxu0 0
    %2942 = vmatpush1.bf16.msra.mxu0 0
    %2943 = vmatprep.subr.bf16.mxu0 0
    %2944 = vmatpush1.bf16.msra.mxu0 0
    %2945 = vmatprep.subr.bf16.mxu0 0
    %2946 = vmatpush1.bf16.msra.mxu0 0
    %2947 = vmatprep.mubr.bf16.mxu0 0
    %2948 = vmatmul.mubr.bf16.gmra.mrb[0].mxu0 %v2745
    %v2949 = vpop.f32.mrb[0].mxu0
    %v2950 = vadd.f32 0.0, %v2949
    %v2951 = vpop.f32.mrb[0].mxu0
    %v2952 = vadd.f32 0.0, %v2951
    %v2953 = vpop.f32.mrb[0].mxu0
    %v2954 = vadd.f32 0.0, %v2953
    %v2955 = vpop.f32.mrb[0].mxu0
    %v2956 = vadd.f32 0.0, %v2955
    %2957 = vdwg.mxu0
    %2958 = vmatprep.subr.bf16.mxu0 0
    %2959 = vmatpush1.bf16.msra.mxu0 %v2869
    %2960 = vmatprep.subr.bf16.mxu0 0
    %2961 = vmatpush1.bf16.msra.mxu0 %v2872
    %2962 = vmatprep.subr.bf16.mxu0 0
    %2963 = vmatpush1.bf16.msra.mxu0 %v2875
    %2964 = vmatprep.subr.bf16.mxu0 0
    %2965 = vmatpush1.bf16.msra.mxu0 %v2878
    %2966 = vmatprep.subr.bf16.mxu0 0
    %2967 = vmatpush1.bf16.msra.mxu0 %v2881
    %2968 = vmatprep.subr.bf16.mxu0 0
    %2969 = vmatpush1.bf16.msra.mxu0 %v2884
    %2970 = vmatprep.subr.bf16.mxu0 0
    %2971 = vmatpush1.bf16.msra.mxu0 %v2887
    %2972 = vmatprep.subr.bf16.mxu0 0
    %2973 = vmatpush1.bf16.msra.mxu0 %v2890
    %2974 = vmatprep.subr.bf16.mxu0 0
    %2975 = vmatpush1.bf16.msra.mxu0 0
    %2976 = vmatprep.subr.bf16.mxu0 0
    %2977 = vmatpush1.bf16.msra.mxu0 0
    %2978 = vmatprep.subr.bf16.mxu0 0
    %2979 = vmatpush1.bf16.msra.mxu0 0
    %2980 = vmatprep.subr.bf16.mxu0 0
    %2981 = vmatpush1.bf16.msra.mxu0 0
    %2982 = vmatprep.subr.bf16.mxu0 0
    %2983 = vmatpush1.bf16.msra.mxu0 0
    %2984 = vmatprep.subr.bf16.mxu0 0
    %2985 = vmatpush1.bf16.msra.mxu0 0
    %2986 = vmatprep.subr.bf16.mxu0 0
    %2987 = vmatpush1.bf16.msra.mxu0 0
    %2988 = vmatprep.subr.bf16.mxu0 0
    %2989 = vmatpush1.bf16.msra.mxu0 0
    %2990 = vmatprep.mubr.bf16.mxu0 0
    %2991 = vmatmul.mubr.bf16.gmra.mrb[0].mxu0 %v2745
    %v2992 = vpop.f32.mrb[0].mxu0
    %v2993 = vadd.f32 0.0, %v2992
    %v2994 = vpop.f32.mrb[0].mxu0
    %v2995 = vpop.f32.mrb[0].mxu0
    %v2996 = vadd.f32 0.0, %v2995
    %v2997 = vpop.f32.mrb[0].mxu0
    %2998 = vdwg.mxu0
    %v2999 = vadd.f32 %v2749, %v2950
    %v3000 = vadd.f32 %v2752, %v2954
    %v3001 = vxor.u32 %v2999, 2147483648
    %v3002 = vxor.u32 %v3000, 2147483648
    %v3003 = vmul.f32 %v3001, 1.442695
    %v3004 = vpow.pop %v3003
    %v3005 = vmul.f32 %v3002, 1.442695
    %v3006 = vpow.pop %v3005
    %v3007 = vadd.f32 %v3004, 1.0
    %v3008 = vadd.f32 %v3006, 1.0
    %v3009 = vrcp.pop %v3007
    %v3010 = vmul.f32 1.0, %v3009
    %v3011 = vrcp.pop %v3008
    %v3012 = vmul.f32 1.0, %v3011
    %v3013 = vadd.f32 %v2750, %v2952
    %v3014 = vadd.f32 %v2753, %v2956
    %v3015 = vxor.u32 %v3013, 2147483648
    %v3016 = vxor.u32 %v3014, 2147483648
    %v3017 = vmul.f32 %v3015, 1.442695
    %v3018 = vpow.pop %v3017
    %v3019 = vmul.f32 %v3016, 1.442695
    %v3020 = vpow.pop %v3019
    %v3021 = vadd.f32 %v3018, 1.0
    %v3022 = vadd.f32 %v3020, 1.0
    %v3023 = vrcp.pop %v3021
    %v3024 = vmul.f32 1.0, %v3023
    %v3025 = vrcp.pop %v3022
    %v3026 = vmul.f32 1.0, %v3025
    %v3027 = vadd.f32 %v2993, %v673
    %v3028 = vadd.f32 %v2996, %v673
    %v3029 = vmul.f32 %v3010, %v3027
    %v3030 = vmul.f32 %v3012, %v3028
    %v3031 = vadd.f32 %v2751, %v3029
    %v3032 = vadd.f32 %v2754, %v3030
    %v3033 = vtanh.pop %v3031
    %v3034 = vtanh.pop %v3032
    %v3035 = vsub.f32 %v2743, %v3033
    %v3036 = vsub.f32 %v2744, %v3034
    %v3037 = vmul.f32 %v3024, %v3035
    %v3038 = vmul.f32 %v3026, %v3036
    %v3039 = vadd.f32 %v3033, %v3037
    %v3040 = vadd.f32 %v3034, %v3038
    %v3041 = vpack.c.bf16 %v3040, %v3039
    %s3042 = scalar_lea.vmem [#allocation3], 56
    %3043 = vst [vmem:[%s3042] sm:$0xff] %v3041
    %3044 = vst [vmem:[#allocation4] sm:$0xff] %v3039
    %3045 = vst [vmem:[#allocation4 + $0x8] sm:$0xff] %v3040
    %v3046 = vld [vmem:[#allocation3] sm:$0xff]
    %v3047 = vld [vmem:[#allocation3 + $0x8] sm:$0xff]
    %v3048 = vld [vmem:[#allocation3 + $0x10] sm:$0xff]
    %v3049 = vld [vmem:[#allocation3 + $0x18] sm:$0xff]
    %v3050 = vld [vmem:[#allocation3 + $0x20] sm:$0xff]
    %v3051 = vld [vmem:[#allocation3 + $0x28] sm:$0xff]
    %v3052 = vld [vmem:[#allocation3 + $0x30] sm:$0xff]
    %v3053 = vld [vmem:[#allocation3 + $0x38] sm:$0xff]
    %v3054 = vld [vmem:[#allocation11] sm:$0xff]
    %v3055 = vld [vmem:[#allocation11 + $0x8] sm:$0xf]
    %v3056 = vld [vmem:[#allocation11 + $0xc] sm:$0xff]
    %v3057 = vld [vmem:[#allocation11 + $0x14] sm:$0xf]
    %v3058 = vld [vmem:[#allocation11 + $0x18] sm:$0xff]
    %v3059 = vld [vmem:[#allocation11 + $0x20] sm:$0xf]
    %v3060 = vld [vmem:[#allocation11 + $0x24] sm:$0xff]
    %v3061 = vld [vmem:[#allocation11 + $0x2c] sm:$0xf]
    %v3062 = vld [vmem:[#allocation11 + $0x30] sm:$0xff]
    %v3063 = vld [vmem:[#allocation11 + $0x38] sm:$0xf]
    %v3064 = vld [vmem:[#allocation11 + $0x3c] sm:$0xff]
    %v3065 = vld [vmem:[#allocation11 + $0x44] sm:$0xf]
    %v3066 = vld [vmem:[#allocation11 + $0x48] sm:$0xff]
    %v3067 = vld [vmem:[#allocation11 + $0x50] sm:$0xf]
    %v3068 = vld [vmem:[#allocation11 + $0x54] sm:$0xff]
    %v3069 = vld [vmem:[#allocation11 + $0x5c] sm:$0xf]
    %v3070 = vld [vmem:[#allocation11 + $0x60] sm:$0xff]
    %v3071 = vld [vmem:[#allocation11 + $0x68] sm:$0xf]
    %v3072 = vld [vmem:[#allocation11 + $0x6c] sm:$0xff]
    %v3073 = vld [vmem:[#allocation11 + $0x74] sm:$0xf]
    %v3074 = vld [vmem:[#allocation11 + $0x78] sm:$0xff]
    %v3075 = vld [vmem:[#allocation11 + $0x80] sm:$0xf]
    %v3076 = vld [vmem:[#allocation11 + $0x84] sm:$0xff]
    %v3077 = vld [vmem:[#allocation11 + $0x8c] sm:$0xf]
    %v3078 = vld [vmem:[#allocation11 + $0x90] sm:$0xff]
    %v3079 = vld [vmem:[#allocation11 + $0x98] sm:$0xf]
    %v3080 = vld [vmem:[#allocation11 + $0x9c] sm:$0xff]
    %v3081 = vld [vmem:[#allocation11 + $0xa4] sm:$0xf]
    %v3082 = vld [vmem:[#allocation11 + $0xa8] sm:$0xff]
    %v3083 = vld [vmem:[#allocation11 + $0xb0] sm:$0xf]
    %v3084 = vld [vmem:[#allocation11 + $0xb4] sm:$0xff]
    %v3085 = vld [vmem:[#allocation11 + $0xbc] sm:$0xf]
    %v3086 = vld [vmem:[%s7] sm:$0x7]
    %v3088 = vlaneseq
    %v3089 = vshrl.u32 %v3088, 7
    %v3090 = vsub.s32 0, %v3089
    %v3091 = vrot.slane %v3086, %v3090
    %v3092 = vlaneseq
    %v3093 = vshrl.u32 %v3092, 7
    %v3094 = vsub.s32 1, %v3093
    %v3095 = vrot.slane %v3086, %v3094
    %v3096 = vlaneseq
    %v3097 = vshrl.u32 %v3096, 7
    %v3098 = vsub.s32 2, %v3097
    %v3099 = vrot.slane %v3086, %v3098
    %v3135 = vunpack.c.l.b16 %v3054
    %v3136 = vunpack.c.h.b16 %v3054
    %v3137 = vunpack.c.l.b16 %v3055
    %v3138 = vunpack.c.l.b16 %v3056
    %v3139 = vunpack.c.h.b16 %v3056
    %v3140 = vunpack.c.l.b16 %v3057
    %v3141 = vunpack.c.l.b16 %v3058
    %v3142 = vunpack.c.h.b16 %v3058
    %v3143 = vunpack.c.l.b16 %v3059
    %v3144 = vunpack.c.l.b16 %v3060
    %v3145 = vunpack.c.h.b16 %v3060
    %v3146 = vunpack.c.l.b16 %v3061
    %v3147 = vunpack.c.l.b16 %v3062
    %v3148 = vunpack.c.h.b16 %v3062
    %v3149 = vunpack.c.l.b16 %v3063
    %v3150 = vunpack.c.l.b16 %v3064
    %v3151 = vunpack.c.h.b16 %v3064
    %v3152 = vunpack.c.l.b16 %v3065
    %v3153 = vunpack.c.l.b16 %v3066
    %v3154 = vunpack.c.h.b16 %v3066
    %v3155 = vunpack.c.l.b16 %v3067
    %v3156 = vunpack.c.l.b16 %v3068
    %v3157 = vunpack.c.h.b16 %v3068
    %v3158 = vunpack.c.l.b16 %v3069
    %v3159 = vunpack.c.l.b16 %v3070
    %v3160 = vunpack.c.h.b16 %v3070
    %v3161 = vunpack.c.l.b16 %v3071
    %v3162 = vunpack.c.l.b16 %v3072
    %v3163 = vunpack.c.h.b16 %v3072
    %v3164 = vunpack.c.l.b16 %v3073
    %v3165 = vunpack.c.l.b16 %v3074
    %v3166 = vunpack.c.h.b16 %v3074
    %v3167 = vunpack.c.l.b16 %v3075
    %v3168 = vunpack.c.l.b16 %v3076
    %v3169 = vunpack.c.h.b16 %v3076
    %v3170 = vunpack.c.l.b16 %v3077
    %v3171 = vunpack.c.l.b16 %v3078
    %v3172 = vunpack.c.h.b16 %v3078
    %v3173 = vunpack.c.l.b16 %v3079
    %v3174 = vunpack.c.l.b16 %v3080
    %v3175 = vunpack.c.h.b16 %v3080
    %v3176 = vunpack.c.l.b16 %v3081
    %v3177 = vunpack.c.l.b16 %v3082
    %v3178 = vunpack.c.h.b16 %v3082
    %v3179 = vunpack.c.l.b16 %v3083
    %v3180 = vunpack.c.l.b16 %v3084
    %v3181 = vunpack.c.h.b16 %v3084
    %v3182 = vunpack.c.l.b16 %v3085
    %v3183 = vpack.c.b16 %v3138, %v3135
    %v3184 = vpack.c.b16 %v3139, %v3136
    %v3185 = vpack.c.b16 %v3140, %v3137
    %v3186 = vpack.c.b16 %v3144, %v3141
    %v3187 = vpack.c.b16 %v3145, %v3142
    %v3188 = vpack.c.b16 %v3146, %v3143
    %v3189 = vpack.c.b16 %v3150, %v3147
    %v3190 = vpack.c.b16 %v3151, %v3148
    %v3191 = vpack.c.b16 %v3152, %v3149
    %v3192 = vpack.c.b16 %v3156, %v3153
    %v3193 = vpack.c.b16 %v3157, %v3154
    %v3194 = vpack.c.b16 %v3158, %v3155
    %v3195 = vpack.c.b16 %v3162, %v3159
    %v3196 = vpack.c.b16 %v3163, %v3160
    %v3197 = vpack.c.b16 %v3164, %v3161
    %v3198 = vpack.c.b16 %v3168, %v3165
    %v3199 = vpack.c.b16 %v3169, %v3166
    %v3200 = vpack.c.b16 %v3170, %v3167
    %v3201 = vpack.c.b16 %v3174, %v3171
    %v3202 = vpack.c.b16 %v3175, %v3172
    %v3203 = vpack.c.b16 %v3176, %v3173
    %v3204 = vpack.c.b16 %v3180, %v3177
    %v3205 = vpack.c.b16 %v3181, %v3178
    %v3206 = vpack.c.b16 %v3182, %v3179
    %3231 = vmatprep.subr.bf16.mxu0 %v3184
    %3232 = vmatpush1.bf16.msra.mxu0 %v3183
    %3233 = vmatprep.subr.bf16.mxu0 %v3187
    %3234 = vmatpush1.bf16.msra.mxu0 %v3186
    %3235 = vmatprep.subr.bf16.mxu0 %v3190
    %3236 = vmatpush1.bf16.msra.mxu0 %v3189
    %3237 = vmatprep.subr.bf16.mxu0 %v3193
    %3238 = vmatpush1.bf16.msra.mxu0 %v3192
    %3239 = vmatprep.subr.bf16.mxu0 %v3196
    %3240 = vmatpush1.bf16.msra.mxu0 %v3195
    %3241 = vmatprep.subr.bf16.mxu0 %v3199
    %3242 = vmatpush1.bf16.msra.mxu0 %v3198
    %3243 = vmatprep.subr.bf16.mxu0 %v3202
    %3244 = vmatpush1.bf16.msra.mxu0 %v3201
    %3245 = vmatprep.subr.bf16.mxu0 %v3205
    %3246 = vmatpush1.bf16.msra.mxu0 %v3204
    %3247 = vmatprep.subr.bf16.mxu0 0
    %3248 = vmatpush1.bf16.msra.mxu0 0
    %3249 = vmatprep.subr.bf16.mxu0 0
    %3250 = vmatpush1.bf16.msra.mxu0 0
    %3251 = vmatprep.subr.bf16.mxu0 0
    %3252 = vmatpush1.bf16.msra.mxu0 0
    %3253 = vmatprep.subr.bf16.mxu0 0
    %3254 = vmatpush1.bf16.msra.mxu0 0
    %3255 = vmatprep.subr.bf16.mxu0 0
    %3256 = vmatpush1.bf16.msra.mxu0 0
    %3257 = vmatprep.subr.bf16.mxu0 0
    %3258 = vmatpush1.bf16.msra.mxu0 0
    %3259 = vmatprep.subr.bf16.mxu0 0
    %3260 = vmatpush1.bf16.msra.mxu0 0
    %3261 = vmatprep.subr.bf16.mxu0 0
    %3262 = vmatpush1.bf16.msra.mxu0 0
    %3263 = vmatprep.mubr.bf16.mxu0 0
    %3264 = vmatmul.mubr.bf16.gmra.mrb[0].mxu0 %v3046
    %v3265 = vpop.f32.mrb[0].mxu0
    %v3266 = vadd.f32 %v3091, %v3265
    %v3267 = vpop.f32.mrb[0].mxu0
    %v3268 = vadd.f32 %v3095, %v3267
    %v3269 = vpop.f32.mrb[0].mxu0
    %v3270 = vadd.f32 %v3091, %v3269
    %v3271 = vpop.f32.mrb[0].mxu0
    %v3272 = vadd.f32 %v3095, %v3271
    %3273 = vmatprep.mubr.bf16.mxu0 0
    %3274 = vmatmul.mubr.bf16.gmra.mrb[0].mxu0 %v3047
    %v3275 = vpop.f32.mrb[0].mxu0
    %v3276 = vadd.f32 %v3091, %v3275
    %v3277 = vpop.f32.mrb[0].mxu0
    %v3278 = vadd.f32 %v3095, %v3277
    %v3279 = vpop.f32.mrb[0].mxu0
    %v3280 = vadd.f32 %v3091, %v3279
    %v3281 = vpop.f32.mrb[0].mxu0
    %v3282 = vadd.f32 %v3095, %v3281
    %3283 = vmatprep.mubr.bf16.mxu0 0
    %3284 = vmatmul.mubr.bf16.gmra.mrb[0].mxu0 %v3048
    %v3285 = vpop.f32.mrb[0].mxu0
    %v3286 = vadd.f32 %v3091, %v3285
    %v3287 = vpop.f32.mrb[0].mxu0
    %v3288 = vadd.f32 %v3095, %v3287
    %v3289 = vpop.f32.mrb[0].mxu0
    %v3290 = vadd.f32 %v3091, %v3289
    %v3291 = vpop.f32.mrb[0].mxu0
    %v3292 = vadd.f32 %v3095, %v3291
    %3293 = vmatprep.mubr.bf16.mxu0 0
    %3294 = vmatmul.mubr.bf16.gmra.mrb[0].mxu0 %v3049
    %v3295 = vpop.f32.mrb[0].mxu0
    %v3296 = vadd.f32 %v3091, %v3295
    %v3297 = vpop.f32.mrb[0].mxu0
    %v3298 = vadd.f32 %v3095, %v3297
    %v3299 = vpop.f32.mrb[0].mxu0
    %v3300 = vadd.f32 %v3091, %v3299
    %v3301 = vpop.f32.mrb[0].mxu0
    %v3302 = vadd.f32 %v3095, %v3301
    %3303 = vmatprep.mubr.bf16.mxu0 0
    %3304 = vmatmul.mubr.bf16.gmra.mrb[0].mxu0 %v3050
    %v3305 = vpop.f32.mrb[0].mxu0
    %v3306 = vadd.f32 %v3091, %v3305
    %v3307 = vpop.f32.mrb[0].mxu0
    %v3308 = vadd.f32 %v3095, %v3307
    %v3309 = vpop.f32.mrb[0].mxu0
    %v3310 = vadd.f32 %v3091, %v3309
    %v3311 = vpop.f32.mrb[0].mxu0
    %v3312 = vadd.f32 %v3095, %v3311
    %3313 = vmatprep.mubr.bf16.mxu0 0
    %3314 = vmatmul.mubr.bf16.gmra.mrb[0].mxu0 %v3051
    %v3315 = vpop.f32.mrb[0].mxu0
    %v3316 = vadd.f32 %v3091, %v3315
    %v3317 = vpop.f32.mrb[0].mxu0
    %v3318 = vadd.f32 %v3095, %v3317
    %v3319 = vpop.f32.mrb[0].mxu0
    %v3320 = vadd.f32 %v3091, %v3319
    %v3321 = vpop.f32.mrb[0].mxu0
    %v3322 = vadd.f32 %v3095, %v3321
    %3323 = vmatprep.mubr.bf16.mxu0 0
    %3324 = vmatmul.mubr.bf16.gmra.mrb[0].mxu0 %v3052
    %v3325 = vpop.f32.mrb[0].mxu0
    %v3326 = vadd.f32 %v3091, %v3325
    %v3327 = vpop.f32.mrb[0].mxu0
    %v3328 = vadd.f32 %v3095, %v3327
    %v3329 = vpop.f32.mrb[0].mxu0
    %v3330 = vadd.f32 %v3091, %v3329
    %v3331 = vpop.f32.mrb[0].mxu0
    %v3332 = vadd.f32 %v3095, %v3331
    %3333 = vmatprep.mubr.bf16.mxu0 0
    %3334 = vmatmul.mubr.bf16.gmra.mrb[0].mxu0 %v3053
    %v3335 = vpop.f32.mrb[0].mxu0
    %v3336 = vadd.f32 %v3091, %v3335
    %v3337 = vpop.f32.mrb[0].mxu0
    %v3338 = vadd.f32 %v3095, %v3337
    %v3339 = vpop.f32.mrb[0].mxu0
    %v3340 = vadd.f32 %v3091, %v3339
    %v3341 = vpop.f32.mrb[0].mxu0
    %v3342 = vadd.f32 %v3095, %v3341
    %3343 = vdwg.mxu0
    %3344 = vmatprep.subr.bf16.mxu0 0
    %3345 = vmatpush1.bf16.msra.mxu0 %v3185
    %3346 = vmatprep.subr.bf16.mxu0 0
    %3347 = vmatpush1.bf16.msra.mxu0 %v3188
    %3348 = vmatprep.subr.bf16.mxu0 0
    %3349 = vmatpush1.bf16.msra.mxu0 %v3191
    %3350 = vmatprep.subr.bf16.mxu0 0
    %3351 = vmatpush1.bf16.msra.mxu0 %v3194
    %3352 = vmatprep.subr.bf16.mxu0 0
    %3353 = vmatpush1.bf16.msra.mxu0 %v3197
    %3354 = vmatprep.subr.bf16.mxu0 0
    %3355 = vmatpush1.bf16.msra.mxu0 %v3200
    %3356 = vmatprep.subr.bf16.mxu0 0
    %3357 = vmatpush1.bf16.msra.mxu0 %v3203
    %3358 = vmatprep.subr.bf16.mxu0 0
    %3359 = vmatpush1.bf16.msra.mxu0 %v3206
    %3360 = vmatprep.subr.bf16.mxu0 0
    %3361 = vmatpush1.bf16.msra.mxu0 0
    %3362 = vmatprep.subr.bf16.mxu0 0
    %3363 = vmatpush1.bf16.msra.mxu0 0
    %3364 = vmatprep.subr.bf16.mxu0 0
    %3365 = vmatpush1.bf16.msra.mxu0 0
    %3366 = vmatprep.subr.bf16.mxu0 0
    %3367 = vmatpush1.bf16.msra.mxu0 0
    %3368 = vmatprep.subr.bf16.mxu0 0
    %3369 = vmatpush1.bf16.msra.mxu0 0
    %3370 = vmatprep.subr.bf16.mxu0 0
    %3371 = vmatpush1.bf16.msra.mxu0 0
    %3372 = vmatprep.subr.bf16.mxu0 0
    %3373 = vmatpush1.bf16.msra.mxu0 0
    %3374 = vmatprep.subr.bf16.mxu0 0
    %3375 = vmatpush1.bf16.msra.mxu0 0
    %3376 = vmatprep.mubr.bf16.mxu0 0
    %3377 = vmatmul.mubr.bf16.gmra.mrb[0].mxu0 %v3046
    %v3378 = vpop.f32.mrb[0].mxu0
    %v3379 = vadd.f32 %v3099, %v3378
    %v3380 = vpop.f32.mrb[0].mxu0
    %v3381 = vpop.f32.mrb[0].mxu0
    %v3382 = vadd.f32 %v3099, %v3381
    %v3383 = vpop.f32.mrb[0].mxu0
    %3384 = vmatprep.mubr.bf16.mxu0 0
    %3385 = vmatmul.mubr.bf16.gmra.mrb[0].mxu0 %v3047
    %v3386 = vpop.f32.mrb[0].mxu0
    %v3387 = vadd.f32 %v3099, %v3386
    %v3388 = vpop.f32.mrb[0].mxu0
    %v3389 = vpop.f32.mrb[0].mxu0
    %v3390 = vadd.f32 %v3099, %v3389
    %v3391 = vpop.f32.mrb[0].mxu0
    %3392 = vmatprep.mubr.bf16.mxu0 0
    %3393 = vmatmul.mubr.bf16.gmra.mrb[0].mxu0 %v3048
    %v3394 = vpop.f32.mrb[0].mxu0
    %v3395 = vadd.f32 %v3099, %v3394
    %v3396 = vpop.f32.mrb[0].mxu0
    %v3397 = vpop.f32.mrb[0].mxu0
    %v3398 = vadd.f32 %v3099, %v3397
    %v3399 = vpop.f32.mrb[0].mxu0
    %3400 = vmatprep.mubr.bf16.mxu0 0
    %3401 = vmatmul.mubr.bf16.gmra.mrb[0].mxu0 %v3049
    %v3402 = vpop.f32.mrb[0].mxu0
    %v3403 = vadd.f32 %v3099, %v3402
    %v3404 = vpop.f32.mrb[0].mxu0
    %v3405 = vpop.f32.mrb[0].mxu0
    %v3406 = vadd.f32 %v3099, %v3405
    %v3407 = vpop.f32.mrb[0].mxu0
    %3408 = vmatprep.mubr.bf16.mxu0 0
    %3409 = vmatmul.mubr.bf16.gmra.mrb[0].mxu0 %v3050
    %v3410 = vpop.f32.mrb[0].mxu0
    %v3411 = vadd.f32 %v3099, %v3410
    %v3412 = vpop.f32.mrb[0].mxu0
    %v3413 = vpop.f32.mrb[0].mxu0
    %v3414 = vadd.f32 %v3099, %v3413
    %v3415 = vpop.f32.mrb[0].mxu0
    %3416 = vmatprep.mubr.bf16.mxu0 0
    %3417 = vmatmul.mubr.bf16.gmra.mrb[0].mxu0 %v3051
    %v3418 = vpop.f32.mrb[0].mxu0
    %v3419 = vadd.f32 %v3099, %v3418
    %v3420 = vpop.f32.mrb[0].mxu0
    %v3421 = vpop.f32.mrb[0].mxu0
    %v3422 = vadd.f32 %v3099, %v3421
    %v3423 = vpop.f32.mrb[0].mxu0
    %3424 = vmatprep.mubr.bf16.mxu0 0
    %3425 = vmatmul.mubr.bf16.gmra.mrb[0].mxu0 %v3052
    %v3426 = vpop.f32.mrb[0].mxu0
    %v3427 = vadd.f32 %v3099, %v3426
    %v3428 = vpop.f32.mrb[0].mxu0
    %v3429 = vpop.f32.mrb[0].mxu0
    %v3430 = vadd.f32 %v3099, %v3429
    %v3431 = vpop.f32.mrb[0].mxu0
    %3432 = vmatprep.mubr.bf16.mxu0 0
    %3433 = vmatmul.mubr.bf16.gmra.mrb[0].mxu0 %v3053
    %v3434 = vpop.f32.mrb[0].mxu0
    %v3435 = vadd.f32 %v3099, %v3434
    %v3436 = vpop.f32.mrb[0].mxu0
    %v3437 = vpop.f32.mrb[0].mxu0
    %v3438 = vadd.f32 %v3099, %v3437
    %v3439 = vpop.f32.mrb[0].mxu0
    %3440 = vdwg.mxu0
    %3441 = vst [vmem:[#allocation2] sm:$0xff] %v3266
    %3442 = vst [vmem:[#allocation2 + $0x8] sm:$0xff] %v3268
    %3443 = vst [vmem:[#allocation2 + $0x10] sm:$0xff] %v3379
    %3444 = vst [vmem:[#allocation2 + $0x18] sm:$0xff] %v3270
    %3445 = vst [vmem:[#allocation2 + $0x20] sm:$0xff] %v3272
    %3446 = vst [vmem:[#allocation2 + $0x28] sm:$0xff] %v3382
    %3447 = vst [vmem:[#allocation2 + $0x30] sm:$0xff] %v3276
    %3448 = vst [vmem:[#allocation2 + $0x38] sm:$0xff] %v3278
    %3449 = vst [vmem:[#allocation2 + $0x40] sm:$0xff] %v3387
    %3450 = vst [vmem:[#allocation2 + $0x48] sm:$0xff] %v3280
    %3451 = vst [vmem:[#allocation2 + $0x50] sm:$0xff] %v3282
    %3452 = vst [vmem:[#allocation2 + $0x58] sm:$0xff] %v3390
    %3453 = vst [vmem:[#allocation2 + $0x60] sm:$0xff] %v3286
    %3454 = vst [vmem:[#allocation2 + $0x68] sm:$0xff] %v3288
    %3455 = vst [vmem:[#allocation2 + $0x70] sm:$0xff] %v3395
    %3456 = vst [vmem:[#allocation2 + $0x78] sm:$0xff] %v3290
    %3457 = vst [vmem:[#allocation2 + $0x80] sm:$0xff] %v3292
    %3458 = vst [vmem:[#allocation2 + $0x88] sm:$0xff] %v3398
    %3459 = vst [vmem:[#allocation2 + $0x90] sm:$0xff] %v3296
    %3460 = vst [vmem:[#allocation2 + $0x98] sm:$0xff] %v3298
    %3461 = vst [vmem:[#allocation2 + $0xa0] sm:$0xff] %v3403
    %3462 = vst [vmem:[#allocation2 + $0xa8] sm:$0xff] %v3300
    %3463 = vst [vmem:[#allocation2 + $0xb0] sm:$0xff] %v3302
    %3464 = vst [vmem:[#allocation2 + $0xb8] sm:$0xff] %v3406
    %3465 = vst [vmem:[#allocation2 + $0xc0] sm:$0xff] %v3306
    %3466 = vst [vmem:[#allocation2 + $0xc8] sm:$0xff] %v3308
    %3467 = vst [vmem:[#allocation2 + $0xd0] sm:$0xff] %v3411
    %3468 = vst [vmem:[#allocation2 + $0xd8] sm:$0xff] %v3310
    %3469 = vst [vmem:[#allocation2 + $0xe0] sm:$0xff] %v3312
    %3470 = vst [vmem:[#allocation2 + $0xe8] sm:$0xff] %v3414
    %3471 = vst [vmem:[#allocation2 + $0xf0] sm:$0xff] %v3316
    %3472 = vst [vmem:[#allocation2 + $0xf8] sm:$0xff] %v3318
    %3473 = vst [vmem:[#allocation2 + $0x100] sm:$0xff] %v3419
    %3474 = vst [vmem:[#allocation2 + $0x108] sm:$0xff] %v3320
    %3475 = vst [vmem:[#allocation2 + $0x110] sm:$0xff] %v3322
    %3476 = vst [vmem:[#allocation2 + $0x118] sm:$0xff] %v3422
    %3477 = vst [vmem:[#allocation2 + $0x120] sm:$0xff] %v3326
    %3478 = vst [vmem:[#allocation2 + $0x128] sm:$0xff] %v3328
    %3479 = vst [vmem:[#allocation2 + $0x130] sm:$0xff] %v3427
    %3480 = vst [vmem:[#allocation2 + $0x138] sm:$0xff] %v3330
    %3481 = vst [vmem:[#allocation2 + $0x140] sm:$0xff] %v3332
    %3482 = vst [vmem:[#allocation2 + $0x148] sm:$0xff] %v3430
    %3483 = vst [vmem:[#allocation2 + $0x150] sm:$0xff] %v3336
    %3484 = vst [vmem:[#allocation2 + $0x158] sm:$0xff] %v3338
    %3485 = vst [vmem:[#allocation2 + $0x160] sm:$0xff] %v3435
    %3486 = vst [vmem:[#allocation2 + $0x168] sm:$0xff] %v3340
    %3487 = vst [vmem:[#allocation2 + $0x170] sm:$0xff] %v3342
    %3488 = vst [vmem:[#allocation2 + $0x178] sm:$0xff] %v3438
    %v3489 = vld [vmem:[%s8] sm:$0x1]
    %v3491 = vlaneseq
    %v3492 = vshrl.u32 %v3491, 7
    %v3493 = vsub.s32 0, %v3492
    %v3494 = vrot.slane %v3489, %v3493
    %s3496 = scalar_lea.vmem [#allocation4], 16
    %v3497 = vld [vmem:[%s3496] sm:$0xff]
    %v3498 = vld [vmem:[%s3496 + $0x8] sm:$0xff]
    %v3499 = vld [vmem:[#allocation2] sm:$0xff]
    %v3500 = vld [vmem:[#allocation2 + $0x8] sm:$0xff]
    %v3501 = vld [vmem:[#allocation2 + $0x10] sm:$0xff]
    %v3502 = vld [vmem:[#allocation2 + $0x18] sm:$0xff]
    %v3503 = vld [vmem:[#allocation2 + $0x20] sm:$0xff]
    %v3504 = vld [vmem:[#allocation2 + $0x28] sm:$0xff]
    %v3505 = vpack.c.bf16 %v3498, %v3497
    %v3506 = vld [vmem:[#allocation13] sm:$0xff]
    %v3507 = vld [vmem:[#allocation13 + $0x8] sm:$0xf]
    %v3508 = vld [vmem:[#allocation13 + $0xc] sm:$0xff]
    %v3509 = vld [vmem:[#allocation13 + $0x14] sm:$0xf]
    %v3510 = vld [vmem:[#allocation13 + $0x18] sm:$0xff]
    %v3511 = vld [vmem:[#allocation13 + $0x20] sm:$0xf]
    %v3512 = vld [vmem:[#allocation13 + $0x24] sm:$0xff]
    %v3513 = vld [vmem:[#allocation13 + $0x2c] sm:$0xf]
    %v3514 = vld [vmem:[#allocation13 + $0x30] sm:$0xff]
    %v3515 = vld [vmem:[#allocation13 + $0x38] sm:$0xf]
    %v3516 = vld [vmem:[#allocation13 + $0x3c] sm:$0xff]
    %v3517 = vld [vmem:[#allocation13 + $0x44] sm:$0xf]
    %v3518 = vld [vmem:[#allocation13 + $0x48] sm:$0xff]
    %v3519 = vld [vmem:[#allocation13 + $0x50] sm:$0xf]
    %v3520 = vld [vmem:[#allocation13 + $0x54] sm:$0xff]
    %v3521 = vld [vmem:[#allocation13 + $0x5c] sm:$0xf]
    %v3522 = vld [vmem:[#allocation13 + $0x60] sm:$0xff]
    %v3523 = vld [vmem:[#allocation13 + $0x68] sm:$0xf]
    %v3524 = vld [vmem:[#allocation13 + $0x6c] sm:$0xff]
    %v3525 = vld [vmem:[#allocation13 + $0x74] sm:$0xf]
    %v3526 = vld [vmem:[#allocation13 + $0x78] sm:$0xff]
    %v3527 = vld [vmem:[#allocation13 + $0x80] sm:$0xf]
    %v3528 = vld [vmem:[#allocation13 + $0x84] sm:$0xff]
    %v3529 = vld [vmem:[#allocation13 + $0x8c] sm:$0xf]
    %v3530 = vld [vmem:[#allocation13 + $0x90] sm:$0xff]
    %v3531 = vld [vmem:[#allocation13 + $0x98] sm:$0xf]
    %v3532 = vld [vmem:[#allocation13 + $0x9c] sm:$0xff]
    %v3533 = vld [vmem:[#allocation13 + $0xa4] sm:$0xf]
    %v3534 = vld [vmem:[#allocation13 + $0xa8] sm:$0xff]
    %v3535 = vld [vmem:[#allocation13 + $0xb0] sm:$0xf]
    %v3536 = vld [vmem:[#allocation13 + $0xb4] sm:$0xff]
    %v3537 = vld [vmem:[#allocation13 + $0xbc] sm:$0xf]
    %v3570 = vunpack.c.l.b16 %v3506
    %v3571 = vunpack.c.h.b16 %v3506
    %v3572 = vunpack.c.l.b16 %v3507
    %v3573 = vunpack.c.l.b16 %v3508
    %v3574 = vunpack.c.h.b16 %v3508
    %v3575 = vunpack.c.l.b16 %v3509
    %v3576 = vunpack.c.l.b16 %v3510
    %v3577 = vunpack.c.h.b16 %v3510
    %v3578 = vunpack.c.l.b16 %v3511
    %v3579 = vunpack.c.l.b16 %v3512
    %v3580 = vunpack.c.h.b16 %v3512
    %v3581 = vunpack.c.l.b16 %v3513
    %v3582 = vunpack.c.l.b16 %v3514
    %v3583 = vunpack.c.h.b16 %v3514
    %v3584 = vunpack.c.l.b16 %v3515
    %v3585 = vunpack.c.l.b16 %v3516
    %v3586 = vunpack.c.h.b16 %v3516
    %v3587 = vunpack.c.l.b16 %v3517
    %v3588 = vunpack.c.l.b16 %v3518
    %v3589 = vunpack.c.h.b16 %v3518
    %v3590 = vunpack.c.l.b16 %v3519
    %v3591 = vunpack.c.l.b16 %v3520
    %v3592 = vunpack.c.h.b16 %v3520
    %v3593 = vunpack.c.l.b16 %v3521
    %v3594 = vunpack.c.l.b16 %v3522
    %v3595 = vunpack.c.h.b16 %v3522
    %v3596 = vunpack.c.l.b16 %v3523
    %v3597 = vunpack.c.l.b16 %v3524
    %v3598 = vunpack.c.h.b16 %v3524
    %v3599 = vunpack.c.l.b16 %v3525
    %v3600 = vunpack.c.l.b16 %v3526
    %v3601 = vunpack.c.h.b16 %v3526
    %v3602 = vunpack.c.l.b16 %v3527
    %v3603 = vunpack.c.l.b16 %v3528
    %v3604 = vunpack.c.h.b16 %v3528
    %v3605 = vunpack.c.l.b16 %v3529
    %v3606 = vunpack.c.l.b16 %v3530
    %v3607 = vunpack.c.h.b16 %v3530
    %v3608 = vunpack.c.l.b16 %v3531
    %v3609 = vunpack.c.l.b16 %v3532
    %v3610 = vunpack.c.h.b16 %v3532
    %v3611 = vunpack.c.l.b16 %v3533
    %v3612 = vunpack.c.l.b16 %v3534
    %v3613 = vunpack.c.h.b16 %v3534
    %v3614 = vunpack.c.l.b16 %v3535
    %v3615 = vunpack.c.l.b16 %v3536
    %v3616 = vunpack.c.h.b16 %v3536
    %v3617 = vunpack.c.l.b16 %v3537
    %v3618 = vpack.c.b16 %v3573, %v3570
    %v3619 = vpack.c.b16 %v3574, %v3571
    %v3620 = vpack.c.b16 %v3575, %v3572
    %v3621 = vpack.c.b16 %v3579, %v3576
    %v3622 = vpack.c.b16 %v3580, %v3577
    %v3623 = vpack.c.b16 %v3581, %v3578
    %v3624 = vpack.c.b16 %v3585, %v3582
    %v3625 = vpack.c.b16 %v3586, %v3583
    %v3626 = vpack.c.b16 %v3587, %v3584
    %v3627 = vpack.c.b16 %v3591, %v3588
    %v3628 = vpack.c.b16 %v3592, %v3589
    %v3629 = vpack.c.b16 %v3593, %v3590
    %v3630 = vpack.c.b16 %v3597, %v3594
    %v3631 = vpack.c.b16 %v3598, %v3595
    %v3632 = vpack.c.b16 %v3599, %v3596
    %v3633 = vpack.c.b16 %v3603, %v3600
    %v3634 = vpack.c.b16 %v3604, %v3601
    %v3635 = vpack.c.b16 %v3605, %v3602
    %v3636 = vpack.c.b16 %v3609, %v3606
    %v3637 = vpack.c.b16 %v3610, %v3607
    %v3638 = vpack.c.b16 %v3611, %v3608
    %v3639 = vpack.c.b16 %v3615, %v3612
    %v3640 = vpack.c.b16 %v3616, %v3613
    %v3641 = vpack.c.b16 %v3617, %v3614
    %3666 = vmatprep.subr.bf16.mxu0 %v3619
    %3667 = vmatpush1.bf16.msra.mxu0 %v3618
    %3668 = vmatprep.subr.bf16.mxu0 %v3622
    %3669 = vmatpush1.bf16.msra.mxu0 %v3621
    %3670 = vmatprep.subr.bf16.mxu0 %v3625
    %3671 = vmatpush1.bf16.msra.mxu0 %v3624
    %3672 = vmatprep.subr.bf16.mxu0 %v3628
    %3673 = vmatpush1.bf16.msra.mxu0 %v3627
    %3674 = vmatprep.subr.bf16.mxu0 %v3631
    %3675 = vmatpush1.bf16.msra.mxu0 %v3630
    %3676 = vmatprep.subr.bf16.mxu0 %v3634
    %3677 = vmatpush1.bf16.msra.mxu0 %v3633
    %3678 = vmatprep.subr.bf16.mxu0 %v3637
    %3679 = vmatpush1.bf16.msra.mxu0 %v3636
    %3680 = vmatprep.subr.bf16.mxu0 %v3640
    %3681 = vmatpush1.bf16.msra.mxu0 %v3639
    %3682 = vmatprep.subr.bf16.mxu0 0
    %3683 = vmatpush1.bf16.msra.mxu0 0
    %3684 = vmatprep.subr.bf16.mxu0 0
    %3685 = vmatpush1.bf16.msra.mxu0 0
    %3686 = vmatprep.subr.bf16.mxu0 0
    %3687 = vmatpush1.bf16.msra.mxu0 0
    %3688 = vmatprep.subr.bf16.mxu0 0
    %3689 = vmatpush1.bf16.msra.mxu0 0
    %3690 = vmatprep.subr.bf16.mxu0 0
    %3691 = vmatpush1.bf16.msra.mxu0 0
    %3692 = vmatprep.subr.bf16.mxu0 0
    %3693 = vmatpush1.bf16.msra.mxu0 0
    %3694 = vmatprep.subr.bf16.mxu0 0
    %3695 = vmatpush1.bf16.msra.mxu0 0
    %3696 = vmatprep.subr.bf16.mxu0 0
    %3697 = vmatpush1.bf16.msra.mxu0 0
    %3698 = vmatprep.mubr.bf16.mxu0 0
    %3699 = vmatmul.mubr.bf16.gmra.mrb[0].mxu0 %v3505
    %v3700 = vpop.f32.mrb[0].mxu0
    %v3701 = vadd.f32 0.0, %v3700
    %v3702 = vpop.f32.mrb[0].mxu0
    %v3703 = vadd.f32 0.0, %v3702
    %v3704 = vpop.f32.mrb[0].mxu0
    %v3705 = vadd.f32 0.0, %v3704
    %v3706 = vpop.f32.mrb[0].mxu0
    %v3707 = vadd.f32 0.0, %v3706
    %3708 = vdwg.mxu0
    %3709 = vmatprep.subr.bf16.mxu0 0
    %3710 = vmatpush1.bf16.msra.mxu0 %v3620
    %3711 = vmatprep.subr.bf16.mxu0 0
    %3712 = vmatpush1.bf16.msra.mxu0 %v3623
    %3713 = vmatprep.subr.bf16.mxu0 0
    %3714 = vmatpush1.bf16.msra.mxu0 %v3626
    %3715 = vmatprep.subr.bf16.mxu0 0
    %3716 = vmatpush1.bf16.msra.mxu0 %v3629
    %3717 = vmatprep.subr.bf16.mxu0 0
    %3718 = vmatpush1.bf16.msra.mxu0 %v3632
    %3719 = vmatprep.subr.bf16.mxu0 0
    %3720 = vmatpush1.bf16.msra.mxu0 %v3635
    %3721 = vmatprep.subr.bf16.mxu0 0
    %3722 = vmatpush1.bf16.msra.mxu0 %v3638
    %3723 = vmatprep.subr.bf16.mxu0 0
    %3724 = vmatpush1.bf16.msra.mxu0 %v3641
    %3725 = vmatprep.subr.bf16.mxu0 0
    %3726 = vmatpush1.bf16.msra.mxu0 0
    %3727 = vmatprep.subr.bf16.mxu0 0
    %3728 = vmatpush1.bf16.msra.mxu0 0
    %3729 = vmatprep.subr.bf16.mxu0 0
    %3730 = vmatpush1.bf16.msra.mxu0 0
    %3731 = vmatprep.subr.bf16.mxu0 0
    %3732 = vmatpush1.bf16.msra.mxu0 0
    %3733 = vmatprep.subr.bf16.mxu0 0
    %3734 = vmatpush1.bf16.msra.mxu0 0
    %3735 = vmatprep.subr.bf16.mxu0 0
    %3736 = vmatpush1.bf16.msra.mxu0 0
    %3737 = vmatprep.subr.bf16.mxu0 0
    %3738 = vmatpush1.bf16.msra.mxu0 0
    %3739 = vmatprep.subr.bf16.mxu0 0
    %3740 = vmatpush1.bf16.msra.mxu0 0
    %3741 = vmatprep.mubr.bf16.mxu0 0
    %3742 = vmatmul.mubr.bf16.gmra.mrb[0].mxu0 %v3505
    %v3743 = vpop.f32.mrb[0].mxu0
    %v3744 = vadd.f32 0.0, %v3743
    %v3745 = vpop.f32.mrb[0].mxu0
    %v3746 = vpop.f32.mrb[0].mxu0
    %v3747 = vadd.f32 0.0, %v3746
    %v3748 = vpop.f32.mrb[0].mxu0
    %3749 = vdwg.mxu0
    %v3750 = vadd.f32 %v3499, %v3701
    %v3751 = vadd.f32 %v3502, %v3705
    %v3752 = vxor.u32 %v3750, 2147483648
    %v3753 = vxor.u32 %v3751, 2147483648
    %v3754 = vmul.f32 %v3752, 1.442695
    %v3755 = vpow.pop %v3754
    %v3756 = vmul.f32 %v3753, 1.442695
    %v3757 = vpow.pop %v3756
    %v3758 = vadd.f32 %v3755, 1.0
    %v3759 = vadd.f32 %v3757, 1.0
    %v3760 = vrcp.pop %v3758
    %v3761 = vmul.f32 1.0, %v3760
    %v3762 = vrcp.pop %v3759
    %v3763 = vmul.f32 1.0, %v3762
    %v3764 = vadd.f32 %v3500, %v3703
    %v3765 = vadd.f32 %v3503, %v3707
    %v3766 = vxor.u32 %v3764, 2147483648
    %v3767 = vxor.u32 %v3765, 2147483648
    %v3768 = vmul.f32 %v3766, 1.442695
    %v3769 = vpow.pop %v3768
    %v3770 = vmul.f32 %v3767, 1.442695
    %v3771 = vpow.pop %v3770
    %v3772 = vadd.f32 %v3769, 1.0
    %v3773 = vadd.f32 %v3771, 1.0
    %v3774 = vrcp.pop %v3772
    %v3775 = vmul.f32 1.0, %v3774
    %v3776 = vrcp.pop %v3773
    %v3777 = vmul.f32 1.0, %v3776
    %v3778 = vadd.f32 %v3744, %v3494
    %v3779 = vadd.f32 %v3747, %v3494
    %v3780 = vmul.f32 %v3761, %v3778
    %v3781 = vmul.f32 %v3763, %v3779
    %v3782 = vadd.f32 %v3501, %v3780
    %v3783 = vadd.f32 %v3504, %v3781
    %v3784 = vtanh.pop %v3782
    %v3785 = vtanh.pop %v3783
    %v3786 = vsub.f32 %v3497, %v3784
    %v3787 = vsub.f32 %v3498, %v3785
    %v3788 = vmul.f32 %v3775, %v3786
    %v3789 = vmul.f32 %v3777, %v3787
    %v3790 = vadd.f32 %v3784, %v3788
    %v3791 = vadd.f32 %v3785, %v3789
    %v3792 = vld [vmem:[%s972] sm:$0xff]
    %v3793 = vld [vmem:[%s972 + $0x8] sm:$0xff]
    %v3794 = vld [vmem:[%s972 + $0x10] sm:$0xff]
    %v3795 = vld [vmem:[%s972 + $0x18] sm:$0xff]
    %v3796 = vld [vmem:[%s972 + $0x20] sm:$0xff]
    %v3797 = vld [vmem:[%s972 + $0x28] sm:$0xff]
    %v3798 = vpack.c.bf16 %v3791, %v3790
    %3799 = vmatprep.subr.bf16.mxu0 %v3619
    %3800 = vmatpush1.bf16.msra.mxu0 %v3618
    %3801 = vmatprep.subr.bf16.mxu0 %v3622
    %3802 = vmatpush1.bf16.msra.mxu0 %v3621
    %3803 = vmatprep.subr.bf16.mxu0 %v3625
    %3804 = vmatpush1.bf16.msra.mxu0 %v3624
    %3805 = vmatprep.subr.bf16.mxu0 %v3628
    %3806 = vmatpush1.bf16.msra.mxu0 %v3627
    %3807 = vmatprep.subr.bf16.mxu0 %v3631
    %3808 = vmatpush1.bf16.msra.mxu0 %v3630
    %3809 = vmatprep.subr.bf16.mxu0 %v3634
    %3810 = vmatpush1.bf16.msra.mxu0 %v3633
    %3811 = vmatprep.subr.bf16.mxu0 %v3637
    %3812 = vmatpush1.bf16.msra.mxu0 %v3636
    %3813 = vmatprep.subr.bf16.mxu0 %v3640
    %3814 = vmatpush1.bf16.msra.mxu0 %v3639
    %3815 = vmatprep.subr.bf16.mxu0 0
    %3816 = vmatpush1.bf16.msra.mxu0 0
    %3817 = vmatprep.subr.bf16.mxu0 0
    %3818 = vmatpush1.bf16.msra.mxu0 0
    %3819 = vmatprep.subr.bf16.mxu0 0
    %3820 = vmatpush1.bf16.msra.mxu0 0
    %3821 = vmatprep.subr.bf16.mxu0 0
    %3822 = vmatpush1.bf16.msra.mxu0 0
    %3823 = vmatprep.subr.bf16.mxu0 0
    %3824 = vmatpush1.bf16.msra.mxu0 0
    %3825 = vmatprep.subr.bf16.mxu0 0
    %3826 = vmatpush1.bf16.msra.mxu0 0
    %3827 = vmatprep.subr.bf16.mxu0 0
    %3828 = vmatpush1.bf16.msra.mxu0 0
    %3829 = vmatprep.subr.bf16.mxu0 0
    %3830 = vmatpush1.bf16.msra.mxu0 0
    %3831 = vmatprep.mubr.bf16.mxu0 0
    %3832 = vmatmul.mubr.bf16.gmra.mrb[0].mxu0 %v3798
    %v3833 = vpop.f32.mrb[0].mxu0
    %v3834 = vadd.f32 0.0, %v3833
    %v3835 = vpop.f32.mrb[0].mxu0
    %v3836 = vadd.f32 0.0, %v3835
    %v3837 = vpop.f32.mrb[0].mxu0
    %v3838 = vadd.f32 0.0, %v3837
    %v3839 = vpop.f32.mrb[0].mxu0
    %v3840 = vadd.f32 0.0, %v3839
    %3841 = vdwg.mxu0
    %3842 = vmatprep.subr.bf16.mxu0 0
    %3843 = vmatpush1.bf16.msra.mxu0 %v3620
    %3844 = vmatprep.subr.bf16.mxu0 0
    %3845 = vmatpush1.bf16.msra.mxu0 %v3623
    %3846 = vmatprep.subr.bf16.mxu0 0
    %3847 = vmatpush1.bf16.msra.mxu0 %v3626
    %3848 = vmatprep.subr.bf16.mxu0 0
    %3849 = vmatpush1.bf16.msra.mxu0 %v3629
    %3850 = vmatprep.subr.bf16.mxu0 0
    %3851 = vmatpush1.bf16.msra.mxu0 %v3632
    %3852 = vmatprep.subr.bf16.mxu0 0
    %3853 = vmatpush1.bf16.msra.mxu0 %v3635
    %3854 = vmatprep.subr.bf16.mxu0 0
    %3855 = vmatpush1.bf16.msra.mxu0 %v3638
    %3856 = vmatprep.subr.bf16.mxu0 0
    %3857 = vmatpush1.bf16.msra.mxu0 %v3641
    %3858 = vmatprep.subr.bf16.mxu0 0
    %3859 = vmatpush1.bf16.msra.mxu0 0
    %3860 = vmatprep.subr.bf16.mxu0 0
    %3861 = vmatpush1.bf16.msra.mxu0 0
    %3862 = vmatprep.subr.bf16.mxu0 0
    %3863 = vmatpush1.bf16.msra.mxu0 0
    %3864 = vmatprep.subr.bf16.mxu0 0
    %3865 = vmatpush1.bf16.msra.mxu0 0
    %3866 = vmatprep.subr.bf16.mxu0 0
    %3867 = vmatpush1.bf16.msra.mxu0 0
    %3868 = vmatprep.subr.bf16.mxu0 0
    %3869 = vmatpush1.bf16.msra.mxu0 0
    %3870 = vmatprep.subr.bf16.mxu0 0
    %3871 = vmatpush1.bf16.msra.mxu0 0
    %3872 = vmatprep.subr.bf16.mxu0 0
    %3873 = vmatpush1.bf16.msra.mxu0 0
    %3874 = vmatprep.mubr.bf16.mxu0 0
    %3875 = vmatmul.mubr.bf16.gmra.mrb[0].mxu0 %v3798
    %v3876 = vpop.f32.mrb[0].mxu0
    %v3877 = vadd.f32 0.0, %v3876
    %v3878 = vpop.f32.mrb[0].mxu0
    %v3879 = vpop.f32.mrb[0].mxu0
    %v3880 = vadd.f32 0.0, %v3879
    %v3881 = vpop.f32.mrb[0].mxu0
    %3882 = vdwg.mxu0
    %v3883 = vadd.f32 %v3792, %v3834
    %v3884 = vadd.f32 %v3795, %v3838
    %v3885 = vxor.u32 %v3883, 2147483648
    %v3886 = vxor.u32 %v3884, 2147483648
    %v3887 = vmul.f32 %v3885, 1.442695
    %v3888 = vpow.pop %v3887
    %v3889 = vmul.f32 %v3886, 1.442695
    %v3890 = vpow.pop %v3889
    %v3891 = vadd.f32 %v3888, 1.0
    %v3892 = vadd.f32 %v3890, 1.0
    %v3893 = vrcp.pop %v3891
    %v3894 = vmul.f32 1.0, %v3893
    %v3895 = vrcp.pop %v3892
    %v3896 = vmul.f32 1.0, %v3895
    %v3897 = vadd.f32 %v3793, %v3836
    %v3898 = vadd.f32 %v3796, %v3840
    %v3899 = vxor.u32 %v3897, 2147483648
    %v3900 = vxor.u32 %v3898, 2147483648
    %v3901 = vmul.f32 %v3899, 1.442695
    %v3902 = vpow.pop %v3901
    %v3903 = vmul.f32 %v3900, 1.442695
    %v3904 = vpow.pop %v3903
    %v3905 = vadd.f32 %v3902, 1.0
    %v3906 = vadd.f32 %v3904, 1.0
    %v3907 = vrcp.pop %v3905
    %v3908 = vmul.f32 1.0, %v3907
    %v3909 = vrcp.pop %v3906
    %v3910 = vmul.f32 1.0, %v3909
    %v3911 = vadd.f32 %v3877, %v3494
    %v3912 = vadd.f32 %v3880, %v3494
    %v3913 = vmul.f32 %v3894, %v3911
    %v3914 = vmul.f32 %v3896, %v3912
    %v3915 = vadd.f32 %v3794, %v3913
    %v3916 = vadd.f32 %v3797, %v3914
    %v3917 = vtanh.pop %v3915
    %v3918 = vtanh.pop %v3916
    %v3919 = vsub.f32 %v3790, %v3917
    %v3920 = vsub.f32 %v3791, %v3918
    %v3921 = vmul.f32 %v3908, %v3919
    %v3922 = vmul.f32 %v3910, %v3920
    %v3923 = vadd.f32 %v3917, %v3921
    %v3924 = vadd.f32 %v3918, %v3922
    %v3925 = vld [vmem:[%s1268] sm:$0xff]
    %v3926 = vld [vmem:[%s1268 + $0x8] sm:$0xff]
    %v3927 = vld [vmem:[%s1268 + $0x10] sm:$0xff]
    %v3928 = vld [vmem:[%s1268 + $0x18] sm:$0xff]
    %v3929 = vld [vmem:[%s1268 + $0x20] sm:$0xff]
    %v3930 = vld [vmem:[%s1268 + $0x28] sm:$0xff]
    %v3931 = vpack.c.bf16 %v3924, %v3923
    %3932 = vmatprep.subr.bf16.mxu0 %v3619
    %3933 = vmatpush1.bf16.msra.mxu0 %v3618
    %3934 = vmatprep.subr.bf16.mxu0 %v3622
    %3935 = vmatpush1.bf16.msra.mxu0 %v3621
    %3936 = vmatprep.subr.bf16.mxu0 %v3625
    %3937 = vmatpush1.bf16.msra.mxu0 %v3624
    %3938 = vmatprep.subr.bf16.mxu0 %v3628
    %3939 = vmatpush1.bf16.msra.mxu0 %v3627
    %3940 = vmatprep.subr.bf16.mxu0 %v3631
    %3941 = vmatpush1.bf16.msra.mxu0 %v3630
    %3942 = vmatprep.subr.bf16.mxu0 %v3634
    %3943 = vmatpush1.bf16.msra.mxu0 %v3633
    %3944 = vmatprep.subr.bf16.mxu0 %v3637
    %3945 = vmatpush1.bf16.msra.mxu0 %v3636
    %3946 = vmatprep.subr.bf16.mxu0 %v3640
    %3947 = vmatpush1.bf16.msra.mxu0 %v3639
    %3948 = vmatprep.subr.bf16.mxu0 0
    %3949 = vmatpush1.bf16.msra.mxu0 0
    %3950 = vmatprep.subr.bf16.mxu0 0
    %3951 = vmatpush1.bf16.msra.mxu0 0
    %3952 = vmatprep.subr.bf16.mxu0 0
    %3953 = vmatpush1.bf16.msra.mxu0 0
    %3954 = vmatprep.subr.bf16.mxu0 0
    %3955 = vmatpush1.bf16.msra.mxu0 0
    %3956 = vmatprep.subr.bf16.mxu0 0
    %3957 = vmatpush1.bf16.msra.mxu0 0
    %3958 = vmatprep.subr.bf16.mxu0 0
    %3959 = vmatpush1.bf16.msra.mxu0 0
    %3960 = vmatprep.subr.bf16.mxu0 0
    %3961 = vmatpush1.bf16.msra.mxu0 0
    %3962 = vmatprep.subr.bf16.mxu0 0
    %3963 = vmatpush1.bf16.msra.mxu0 0
    %3964 = vmatprep.mubr.bf16.mxu0 0
    %3965 = vmatmul.mubr.bf16.gmra.mrb[0].mxu0 %v3931
    %v3966 = vpop.f32.mrb[0].mxu0
    %v3967 = vadd.f32 0.0, %v3966
    %v3968 = vpop.f32.mrb[0].mxu0
    %v3969 = vadd.f32 0.0, %v3968
    %v3970 = vpop.f32.mrb[0].mxu0
    %v3971 = vadd.f32 0.0, %v3970
    %v3972 = vpop.f32.mrb[0].mxu0
    %v3973 = vadd.f32 0.0, %v3972
    %3974 = vdwg.mxu0
    %3975 = vmatprep.subr.bf16.mxu0 0
    %3976 = vmatpush1.bf16.msra.mxu0 %v3620
    %3977 = vmatprep.subr.bf16.mxu0 0
    %3978 = vmatpush1.bf16.msra.mxu0 %v3623
    %3979 = vmatprep.subr.bf16.mxu0 0
    %3980 = vmatpush1.bf16.msra.mxu0 %v3626
    %3981 = vmatprep.subr.bf16.mxu0 0
    %3982 = vmatpush1.bf16.msra.mxu0 %v3629
    %3983 = vmatprep.subr.bf16.mxu0 0
    %3984 = vmatpush1.bf16.msra.mxu0 %v3632
    %3985 = vmatprep.subr.bf16.mxu0 0
    %3986 = vmatpush1.bf16.msra.mxu0 %v3635
    %3987 = vmatprep.subr.bf16.mxu0 0
    %3988 = vmatpush1.bf16.msra.mxu0 %v3638
    %3989 = vmatprep.subr.bf16.mxu0 0
    %3990 = vmatpush1.bf16.msra.mxu0 %v3641
    %3991 = vmatprep.subr.bf16.mxu0 0
    %3992 = vmatpush1.bf16.msra.mxu0 0
    %3993 = vmatprep.subr.bf16.mxu0 0
    %3994 = vmatpush1.bf16.msra.mxu0 0
    %3995 = vmatprep.subr.bf16.mxu0 0
    %3996 = vmatpush1.bf16.msra.mxu0 0
    %3997 = vmatprep.subr.bf16.mxu0 0
    %3998 = vmatpush1.bf16.msra.mxu0 0
    %3999 = vmatprep.subr.bf16.mxu0 0
    %4000 = vmatpush1.bf16.msra.mxu0 0
    %4001 = vmatprep.subr.bf16.mxu0 0
    %4002 = vmatpush1.bf16.msra.mxu0 0
    %4003 = vmatprep.subr.bf16.mxu0 0
    %4004 = vmatpush1.bf16.msra.mxu0 0
    %4005 = vmatprep.subr.bf16.mxu0 0
    %4006 = vmatpush1.bf16.msra.mxu0 0
    %4007 = vmatprep.mubr.bf16.mxu0 0
    %4008 = vmatmul.mubr.bf16.gmra.mrb[0].mxu0 %v3931
    %v4009 = vpop.f32.mrb[0].mxu0
    %v4010 = vadd.f32 0.0, %v4009
    %v4011 = vpop.f32.mrb[0].mxu0
    %v4012 = vpop.f32.mrb[0].mxu0
    %v4013 = vadd.f32 0.0, %v4012
    %v4014 = vpop.f32.mrb[0].mxu0
    %4015 = vdwg.mxu0
    %v4016 = vadd.f32 %v3925, %v3967
    %v4017 = vadd.f32 %v3928, %v3971
    %v4018 = vxor.u32 %v4016, 2147483648
    %v4019 = vxor.u32 %v4017, 2147483648
    %v4020 = vmul.f32 %v4018, 1.442695
    %v4021 = vpow.pop %v4020
    %v4022 = vmul.f32 %v4019, 1.442695
    %v4023 = vpow.pop %v4022
    %v4024 = vadd.f32 %v4021, 1.0
    %v4025 = vadd.f32 %v4023, 1.0
    %v4026 = vrcp.pop %v4024
    %v4027 = vmul.f32 1.0, %v4026
    %v4028 = vrcp.pop %v4025
    %v4029 = vmul.f32 1.0, %v4028
    %v4030 = vadd.f32 %v3926, %v3969
    %v4031 = vadd.f32 %v3929, %v3973
    %v4032 = vxor.u32 %v4030, 2147483648
    %v4033 = vxor.u32 %v4031, 2147483648
    %v4034 = vmul.f32 %v4032, 1.442695
    %v4035 = vpow.pop %v4034
    %v4036 = vmul.f32 %v4033, 1.442695
    %v4037 = vpow.pop %v4036
    %v4038 = vadd.f32 %v4035, 1.0
    %v4039 = vadd.f32 %v4037, 1.0
    %v4040 = vrcp.pop %v4038
    %v4041 = vmul.f32 1.0, %v4040
    %v4042 = vrcp.pop %v4039
    %v4043 = vmul.f32 1.0, %v4042
    %v4044 = vadd.f32 %v4010, %v3494
    %v4045 = vadd.f32 %v4013, %v3494
    %v4046 = vmul.f32 %v4027, %v4044
    %v4047 = vmul.f32 %v4029, %v4045
    %v4048 = vadd.f32 %v3927, %v4046
    %v4049 = vadd.f32 %v3930, %v4047
    %v4050 = vtanh.pop %v4048
    %v4051 = vtanh.pop %v4049
    %v4052 = vsub.f32 %v3923, %v4050
    %v4053 = vsub.f32 %v3924, %v4051
    %v4054 = vmul.f32 %v4041, %v4052
    %v4055 = vmul.f32 %v4043, %v4053
    %v4056 = vadd.f32 %v4050, %v4054
    %v4057 = vadd.f32 %v4051, %v4055
    %v4058 = vld [vmem:[%s1564] sm:$0xff]
    %v4059 = vld [vmem:[%s1564 + $0x8] sm:$0xff]
    %v4060 = vld [vmem:[%s1564 + $0x10] sm:$0xff]
    %v4061 = vld [vmem:[%s1564 + $0x18] sm:$0xff]
    %v4062 = vld [vmem:[%s1564 + $0x20] sm:$0xff]
    %v4063 = vld [vmem:[%s1564 + $0x28] sm:$0xff]
    %v4064 = vpack.c.bf16 %v4057, %v4056
    %4065 = vmatprep.subr.bf16.mxu0 %v3619
    %4066 = vmatpush1.bf16.msra.mxu0 %v3618
    %4067 = vmatprep.subr.bf16.mxu0 %v3622
    %4068 = vmatpush1.bf16.msra.mxu0 %v3621
    %4069 = vmatprep.subr.bf16.mxu0 %v3625
    %4070 = vmatpush1.bf16.msra.mxu0 %v3624
    %4071 = vmatprep.subr.bf16.mxu0 %v3628
    %4072 = vmatpush1.bf16.msra.mxu0 %v3627
    %4073 = vmatprep.subr.bf16.mxu0 %v3631
    %4074 = vmatpush1.bf16.msra.mxu0 %v3630
    %4075 = vmatprep.subr.bf16.mxu0 %v3634
    %4076 = vmatpush1.bf16.msra.mxu0 %v3633
    %4077 = vmatprep.subr.bf16.mxu0 %v3637
    %4078 = vmatpush1.bf16.msra.mxu0 %v3636
    %4079 = vmatprep.subr.bf16.mxu0 %v3640
    %4080 = vmatpush1.bf16.msra.mxu0 %v3639
    %4081 = vmatprep.subr.bf16.mxu0 0
    %4082 = vmatpush1.bf16.msra.mxu0 0
    %4083 = vmatprep.subr.bf16.mxu0 0
    %4084 = vmatpush1.bf16.msra.mxu0 0
    %4085 = vmatprep.subr.bf16.mxu0 0
    %4086 = vmatpush1.bf16.msra.mxu0 0
    %4087 = vmatprep.subr.bf16.mxu0 0
    %4088 = vmatpush1.bf16.msra.mxu0 0
    %4089 = vmatprep.subr.bf16.mxu0 0
    %4090 = vmatpush1.bf16.msra.mxu0 0
    %4091 = vmatprep.subr.bf16.mxu0 0
    %4092 = vmatpush1.bf16.msra.mxu0 0
    %4093 = vmatprep.subr.bf16.mxu0 0
    %4094 = vmatpush1.bf16.msra.mxu0 0
    %4095 = vmatprep.subr.bf16.mxu0 0
    %4096 = vmatpush1.bf16.msra.mxu0 0
    %4097 = vmatprep.mubr.bf16.mxu0 0
    %4098 = vmatmul.mubr.bf16.gmra.mrb[0].mxu0 %v4064
    %v4099 = vpop.f32.mrb[0].mxu0
    %v4100 = vadd.f32 0.0, %v4099
    %v4101 = vpop.f32.mrb[0].mxu0
    %v4102 = vadd.f32 0.0, %v4101
    %v4103 = vpop.f32.mrb[0].mxu0
    %v4104 = vadd.f32 0.0, %v4103
    %v4105 = vpop.f32.mrb[0].mxu0
    %v4106 = vadd.f32 0.0, %v4105
    %4107 = vdwg.mxu0
    %4108 = vmatprep.subr.bf16.mxu0 0
    %4109 = vmatpush1.bf16.msra.mxu0 %v3620
    %4110 = vmatprep.subr.bf16.mxu0 0
    %4111 = vmatpush1.bf16.msra.mxu0 %v3623
    %4112 = vmatprep.subr.bf16.mxu0 0
    %4113 = vmatpush1.bf16.msra.mxu0 %v3626
    %4114 = vmatprep.subr.bf16.mxu0 0
    %4115 = vmatpush1.bf16.msra.mxu0 %v3629
    %4116 = vmatprep.subr.bf16.mxu0 0
    %4117 = vmatpush1.bf16.msra.mxu0 %v3632
    %4118 = vmatprep.subr.bf16.mxu0 0
    %4119 = vmatpush1.bf16.msra.mxu0 %v3635
    %4120 = vmatprep.subr.bf16.mxu0 0
    %4121 = vmatpush1.bf16.msra.mxu0 %v3638
    %4122 = vmatprep.subr.bf16.mxu0 0
    %4123 = vmatpush1.bf16.msra.mxu0 %v3641
    %4124 = vmatprep.subr.bf16.mxu0 0
    %4125 = vmatpush1.bf16.msra.mxu0 0
    %4126 = vmatprep.subr.bf16.mxu0 0
    %4127 = vmatpush1.bf16.msra.mxu0 0
    %4128 = vmatprep.subr.bf16.mxu0 0
    %4129 = vmatpush1.bf16.msra.mxu0 0
    %4130 = vmatprep.subr.bf16.mxu0 0
    %4131 = vmatpush1.bf16.msra.mxu0 0
    %4132 = vmatprep.subr.bf16.mxu0 0
    %4133 = vmatpush1.bf16.msra.mxu0 0
    %4134 = vmatprep.subr.bf16.mxu0 0
    %4135 = vmatpush1.bf16.msra.mxu0 0
    %4136 = vmatprep.subr.bf16.mxu0 0
    %4137 = vmatpush1.bf16.msra.mxu0 0
    %4138 = vmatprep.subr.bf16.mxu0 0
    %4139 = vmatpush1.bf16.msra.mxu0 0
    %4140 = vmatprep.mubr.bf16.mxu0 0
    %4141 = vmatmul.mubr.bf16.gmra.mrb[0].mxu0 %v4064
    %v4142 = vpop.f32.mrb[0].mxu0
    %v4143 = vadd.f32 0.0, %v4142
    %v4144 = vpop.f32.mrb[0].mxu0
    %v4145 = vpop.f32.mrb[0].mxu0
    %v4146 = vadd.f32 0.0, %v4145
    %v4147 = vpop.f32.mrb[0].mxu0
    %4148 = vdwg.mxu0
    %v4149 = vadd.f32 %v4058, %v4100
    %v4150 = vadd.f32 %v4061, %v4104
    %v4151 = vxor.u32 %v4149, 2147483648
    %v4152 = vxor.u32 %v4150, 2147483648
    %v4153 = vmul.f32 %v4151, 1.442695
    %v4154 = vpow.pop %v4153
    %v4155 = vmul.f32 %v4152, 1.442695
    %v4156 = vpow.pop %v4155
    %v4157 = vadd.f32 %v4154, 1.0
    %v4158 = vadd.f32 %v4156, 1.0
    %v4159 = vrcp.pop %v4157
    %v4160 = vmul.f32 1.0, %v4159
    %v4161 = vrcp.pop %v4158
    %v4162 = vmul.f32 1.0, %v4161
    %v4163 = vadd.f32 %v4059, %v4102
    %v4164 = vadd.f32 %v4062, %v4106
    %v4165 = vxor.u32 %v4163, 2147483648
    %v4166 = vxor.u32 %v4164, 2147483648
    %v4167 = vmul.f32 %v4165, 1.442695
    %v4168 = vpow.pop %v4167
    %v4169 = vmul.f32 %v4166, 1.442695
    %v4170 = vpow.pop %v4169
    %v4171 = vadd.f32 %v4168, 1.0
    %v4172 = vadd.f32 %v4170, 1.0
    %v4173 = vrcp.pop %v4171
    %v4174 = vmul.f32 1.0, %v4173
    %v4175 = vrcp.pop %v4172
    %v4176 = vmul.f32 1.0, %v4175
    %v4177 = vadd.f32 %v4143, %v3494
    %v4178 = vadd.f32 %v4146, %v3494
    %v4179 = vmul.f32 %v4160, %v4177
    %v4180 = vmul.f32 %v4162, %v4178
    %v4181 = vadd.f32 %v4060, %v4179
    %v4182 = vadd.f32 %v4063, %v4180
    %v4183 = vtanh.pop %v4181
    %v4184 = vtanh.pop %v4182
    %v4185 = vsub.f32 %v4056, %v4183
    %v4186 = vsub.f32 %v4057, %v4184
    %v4187 = vmul.f32 %v4174, %v4185
    %v4188 = vmul.f32 %v4176, %v4186
    %v4189 = vadd.f32 %v4183, %v4187
    %v4190 = vadd.f32 %v4184, %v4188
    %v4191 = vld [vmem:[%s1860] sm:$0xff]
    %v4192 = vld [vmem:[%s1860 + $0x8] sm:$0xff]
    %v4193 = vld [vmem:[%s1860 + $0x10] sm:$0xff]
    %v4194 = vld [vmem:[%s1860 + $0x18] sm:$0xff]
    %v4195 = vld [vmem:[%s1860 + $0x20] sm:$0xff]
    %v4196 = vld [vmem:[%s1860 + $0x28] sm:$0xff]
    %v4197 = vpack.c.bf16 %v4190, %v4189
    %4198 = vmatprep.subr.bf16.mxu0 %v3619
    %4199 = vmatpush1.bf16.msra.mxu0 %v3618
    %4200 = vmatprep.subr.bf16.mxu0 %v3622
    %4201 = vmatpush1.bf16.msra.mxu0 %v3621
    %4202 = vmatprep.subr.bf16.mxu0 %v3625
    %4203 = vmatpush1.bf16.msra.mxu0 %v3624
    %4204 = vmatprep.subr.bf16.mxu0 %v3628
    %4205 = vmatpush1.bf16.msra.mxu0 %v3627
    %4206 = vmatprep.subr.bf16.mxu0 %v3631
    %4207 = vmatpush1.bf16.msra.mxu0 %v3630
    %4208 = vmatprep.subr.bf16.mxu0 %v3634
    %4209 = vmatpush1.bf16.msra.mxu0 %v3633
    %4210 = vmatprep.subr.bf16.mxu0 %v3637
    %4211 = vmatpush1.bf16.msra.mxu0 %v3636
    %4212 = vmatprep.subr.bf16.mxu0 %v3640
    %4213 = vmatpush1.bf16.msra.mxu0 %v3639
    %4214 = vmatprep.subr.bf16.mxu0 0
    %4215 = vmatpush1.bf16.msra.mxu0 0
    %4216 = vmatprep.subr.bf16.mxu0 0
    %4217 = vmatpush1.bf16.msra.mxu0 0
    %4218 = vmatprep.subr.bf16.mxu0 0
    %4219 = vmatpush1.bf16.msra.mxu0 0
    %4220 = vmatprep.subr.bf16.mxu0 0
    %4221 = vmatpush1.bf16.msra.mxu0 0
    %4222 = vmatprep.subr.bf16.mxu0 0
    %4223 = vmatpush1.bf16.msra.mxu0 0
    %4224 = vmatprep.subr.bf16.mxu0 0
    %4225 = vmatpush1.bf16.msra.mxu0 0
    %4226 = vmatprep.subr.bf16.mxu0 0
    %4227 = vmatpush1.bf16.msra.mxu0 0
    %4228 = vmatprep.subr.bf16.mxu0 0
    %4229 = vmatpush1.bf16.msra.mxu0 0
    %4230 = vmatprep.mubr.bf16.mxu0 0
    %4231 = vmatmul.mubr.bf16.gmra.mrb[0].mxu0 %v4197
    %v4232 = vpop.f32.mrb[0].mxu0
    %v4233 = vadd.f32 0.0, %v4232
    %v4234 = vpop.f32.mrb[0].mxu0
    %v4235 = vadd.f32 0.0, %v4234
    %v4236 = vpop.f32.mrb[0].mxu0
    %v4237 = vadd.f32 0.0, %v4236
    %v4238 = vpop.f32.mrb[0].mxu0
    %v4239 = vadd.f32 0.0, %v4238
    %4240 = vdwg.mxu0
    %4241 = vmatprep.subr.bf16.mxu0 0
    %4242 = vmatpush1.bf16.msra.mxu0 %v3620
    %4243 = vmatprep.subr.bf16.mxu0 0
    %4244 = vmatpush1.bf16.msra.mxu0 %v3623
    %4245 = vmatprep.subr.bf16.mxu0 0
    %4246 = vmatpush1.bf16.msra.mxu0 %v3626
    %4247 = vmatprep.subr.bf16.mxu0 0
    %4248 = vmatpush1.bf16.msra.mxu0 %v3629
    %4249 = vmatprep.subr.bf16.mxu0 0
    %4250 = vmatpush1.bf16.msra.mxu0 %v3632
    %4251 = vmatprep.subr.bf16.mxu0 0
    %4252 = vmatpush1.bf16.msra.mxu0 %v3635
    %4253 = vmatprep.subr.bf16.mxu0 0
    %4254 = vmatpush1.bf16.msra.mxu0 %v3638
    %4255 = vmatprep.subr.bf16.mxu0 0
    %4256 = vmatpush1.bf16.msra.mxu0 %v3641
    %4257 = vmatprep.subr.bf16.mxu0 0
    %4258 = vmatpush1.bf16.msra.mxu0 0
    %4259 = vmatprep.subr.bf16.mxu0 0
    %4260 = vmatpush1.bf16.msra.mxu0 0
    %4261 = vmatprep.subr.bf16.mxu0 0
    %4262 = vmatpush1.bf16.msra.mxu0 0
    %4263 = vmatprep.subr.bf16.mxu0 0
    %4264 = vmatpush1.bf16.msra.mxu0 0
    %4265 = vmatprep.subr.bf16.mxu0 0
    %4266 = vmatpush1.bf16.msra.mxu0 0
    %4267 = vmatprep.subr.bf16.mxu0 0
    %4268 = vmatpush1.bf16.msra.mxu0 0
    %4269 = vmatprep.subr.bf16.mxu0 0
    %4270 = vmatpush1.bf16.msra.mxu0 0
    %4271 = vmatprep.subr.bf16.mxu0 0
    %4272 = vmatpush1.bf16.msra.mxu0 0
    %4273 = vmatprep.mubr.bf16.mxu0 0
    %4274 = vmatmul.mubr.bf16.gmra.mrb[0].mxu0 %v4197
    %v4275 = vpop.f32.mrb[0].mxu0
    %v4276 = vadd.f32 0.0, %v4275
    %v4277 = vpop.f32.mrb[0].mxu0
    %v4278 = vpop.f32.mrb[0].mxu0
    %v4279 = vadd.f32 0.0, %v4278
    %v4280 = vpop.f32.mrb[0].mxu0
    %4281 = vdwg.mxu0
    %v4282 = vadd.f32 %v4191, %v4233
    %v4283 = vadd.f32 %v4194, %v4237
    %v4284 = vxor.u32 %v4282, 2147483648
    %v4285 = vxor.u32 %v4283, 2147483648
    %v4286 = vmul.f32 %v4284, 1.442695
    %v4287 = vpow.pop %v4286
    %v4288 = vmul.f32 %v4285, 1.442695
    %v4289 = vpow.pop %v4288
    %v4290 = vadd.f32 %v4287, 1.0
    %v4291 = vadd.f32 %v4289, 1.0
    %v4292 = vrcp.pop %v4290
    %v4293 = vmul.f32 1.0, %v4292
    %v4294 = vrcp.pop %v4291
    %v4295 = vmul.f32 1.0, %v4294
    %v4296 = vadd.f32 %v4192, %v4235
    %v4297 = vadd.f32 %v4195, %v4239
    %v4298 = vxor.u32 %v4296, 2147483648
    %v4299 = vxor.u32 %v4297, 2147483648
    %v4300 = vmul.f32 %v4298, 1.442695
    %v4301 = vpow.pop %v4300
    %v4302 = vmul.f32 %v4299, 1.442695
    %v4303 = vpow.pop %v4302
    %v4304 = vadd.f32 %v4301, 1.0
    %v4305 = vadd.f32 %v4303, 1.0
    %v4306 = vrcp.pop %v4304
    %v4307 = vmul.f32 1.0, %v4306
    %v4308 = vrcp.pop %v4305
    %v4309 = vmul.f32 1.0, %v4308
    %v4310 = vadd.f32 %v4276, %v3494
    %v4311 = vadd.f32 %v4279, %v3494
    %v4312 = vmul.f32 %v4293, %v4310
    %v4313 = vmul.f32 %v4295, %v4311
    %v4314 = vadd.f32 %v4193, %v4312
    %v4315 = vadd.f32 %v4196, %v4313
    %v4316 = vtanh.pop %v4314
    %v4317 = vtanh.pop %v4315
    %v4318 = vsub.f32 %v4189, %v4316
    %v4319 = vsub.f32 %v4190, %v4317
    %v4320 = vmul.f32 %v4307, %v4318
    %v4321 = vmul.f32 %v4309, %v4319
    %v4322 = vadd.f32 %v4316, %v4320
    %v4323 = vadd.f32 %v4317, %v4321
    %v4324 = vld [vmem:[%s2156] sm:$0xff]
    %v4325 = vld [vmem:[%s2156 + $0x8] sm:$0xff]
    %v4326 = vld [vmem:[%s2156 + $0x10] sm:$0xff]
    %v4327 = vld [vmem:[%s2156 + $0x18] sm:$0xff]
    %v4328 = vld [vmem:[%s2156 + $0x20] sm:$0xff]
    %v4329 = vld [vmem:[%s2156 + $0x28] sm:$0xff]
    %v4330 = vpack.c.bf16 %v4323, %v4322
    %4331 = vmatprep.subr.bf16.mxu0 %v3619
    %4332 = vmatpush1.bf16.msra.mxu0 %v3618
    %4333 = vmatprep.subr.bf16.mxu0 %v3622
    %4334 = vmatpush1.bf16.msra.mxu0 %v3621
    %4335 = vmatprep.subr.bf16.mxu0 %v3625
    %4336 = vmatpush1.bf16.msra.mxu0 %v3624
    %4337 = vmatprep.subr.bf16.mxu0 %v3628
    %4338 = vmatpush1.bf16.msra.mxu0 %v3627
    %4339 = vmatprep.subr.bf16.mxu0 %v3631
    %4340 = vmatpush1.bf16.msra.mxu0 %v3630
    %4341 = vmatprep.subr.bf16.mxu0 %v3634
    %4342 = vmatpush1.bf16.msra.mxu0 %v3633
    %4343 = vmatprep.subr.bf16.mxu0 %v3637
    %4344 = vmatpush1.bf16.msra.mxu0 %v3636
    %4345 = vmatprep.subr.bf16.mxu0 %v3640
    %4346 = vmatpush1.bf16.msra.mxu0 %v3639
    %4347 = vmatprep.subr.bf16.mxu0 0
    %4348 = vmatpush1.bf16.msra.mxu0 0
    %4349 = vmatprep.subr.bf16.mxu0 0
    %4350 = vmatpush1.bf16.msra.mxu0 0
    %4351 = vmatprep.subr.bf16.mxu0 0
    %4352 = vmatpush1.bf16.msra.mxu0 0
    %4353 = vmatprep.subr.bf16.mxu0 0
    %4354 = vmatpush1.bf16.msra.mxu0 0
    %4355 = vmatprep.subr.bf16.mxu0 0
    %4356 = vmatpush1.bf16.msra.mxu0 0
    %4357 = vmatprep.subr.bf16.mxu0 0
    %4358 = vmatpush1.bf16.msra.mxu0 0
    %4359 = vmatprep.subr.bf16.mxu0 0
    %4360 = vmatpush1.bf16.msra.mxu0 0
    %4361 = vmatprep.subr.bf16.mxu0 0
    %4362 = vmatpush1.bf16.msra.mxu0 0
    %4363 = vmatprep.mubr.bf16.mxu0 0
    %4364 = vmatmul.mubr.bf16.gmra.mrb[0].mxu0 %v4330
    %v4365 = vpop.f32.mrb[0].mxu0
    %v4366 = vadd.f32 0.0, %v4365
    %v4367 = vpop.f32.mrb[0].mxu0
    %v4368 = vadd.f32 0.0, %v4367
    %v4369 = vpop.f32.mrb[0].mxu0
    %v4370 = vadd.f32 0.0, %v4369
    %v4371 = vpop.f32.mrb[0].mxu0
    %v4372 = vadd.f32 0.0, %v4371
    %4373 = vdwg.mxu0
    %4374 = vmatprep.subr.bf16.mxu0 0
    %4375 = vmatpush1.bf16.msra.mxu0 %v3620
    %4376 = vmatprep.subr.bf16.mxu0 0
    %4377 = vmatpush1.bf16.msra.mxu0 %v3623
    %4378 = vmatprep.subr.bf16.mxu0 0
    %4379 = vmatpush1.bf16.msra.mxu0 %v3626
    %4380 = vmatprep.subr.bf16.mxu0 0
    %4381 = vmatpush1.bf16.msra.mxu0 %v3629
    %4382 = vmatprep.subr.bf16.mxu0 0
    %4383 = vmatpush1.bf16.msra.mxu0 %v3632
    %4384 = vmatprep.subr.bf16.mxu0 0
    %4385 = vmatpush1.bf16.msra.mxu0 %v3635
    %4386 = vmatprep.subr.bf16.mxu0 0
    %4387 = vmatpush1.bf16.msra.mxu0 %v3638
    %4388 = vmatprep.subr.bf16.mxu0 0
    %4389 = vmatpush1.bf16.msra.mxu0 %v3641
    %4390 = vmatprep.subr.bf16.mxu0 0
    %4391 = vmatpush1.bf16.msra.mxu0 0
    %4392 = vmatprep.subr.bf16.mxu0 0
    %4393 = vmatpush1.bf16.msra.mxu0 0
    %4394 = vmatprep.subr.bf16.mxu0 0
    %4395 = vmatpush1.bf16.msra.mxu0 0
    %4396 = vmatprep.subr.bf16.mxu0 0
    %4397 = vmatpush1.bf16.msra.mxu0 0
    %4398 = vmatprep.subr.bf16.mxu0 0
    %4399 = vmatpush1.bf16.msra.mxu0 0
    %4400 = vmatprep.subr.bf16.mxu0 0
    %4401 = vmatpush1.bf16.msra.mxu0 0
    %4402 = vmatprep.subr.bf16.mxu0 0
    %4403 = vmatpush1.bf16.msra.mxu0 0
    %4404 = vmatprep.subr.bf16.mxu0 0
    %4405 = vmatpush1.bf16.msra.mxu0 0
    %4406 = vmatprep.mubr.bf16.mxu0 0
    %4407 = vmatmul.mubr.bf16.gmra.mrb[0].mxu0 %v4330
    %v4408 = vpop.f32.mrb[0].mxu0
    %v4409 = vadd.f32 0.0, %v4408
    %v4410 = vpop.f32.mrb[0].mxu0
    %v4411 = vpop.f32.mrb[0].mxu0
    %v4412 = vadd.f32 0.0, %v4411
    %v4413 = vpop.f32.mrb[0].mxu0
    %4414 = vdwg.mxu0
    %v4415 = vadd.f32 %v4324, %v4366
    %v4416 = vadd.f32 %v4327, %v4370
    %v4417 = vxor.u32 %v4415, 2147483648
    %v4418 = vxor.u32 %v4416, 2147483648
    %v4419 = vmul.f32 %v4417, 1.442695
    %v4420 = vpow.pop %v4419
    %v4421 = vmul.f32 %v4418, 1.442695
    %v4422 = vpow.pop %v4421
    %v4423 = vadd.f32 %v4420, 1.0
    %v4424 = vadd.f32 %v4422, 1.0
    %v4425 = vrcp.pop %v4423
    %v4426 = vmul.f32 1.0, %v4425
    %v4427 = vrcp.pop %v4424
    %v4428 = vmul.f32 1.0, %v4427
    %v4429 = vadd.f32 %v4325, %v4368
    %v4430 = vadd.f32 %v4328, %v4372
    %v4431 = vxor.u32 %v4429, 2147483648
    %v4432 = vxor.u32 %v4430, 2147483648
    %v4433 = vmul.f32 %v4431, 1.442695
    %v4434 = vpow.pop %v4433
    %v4435 = vmul.f32 %v4432, 1.442695
    %v4436 = vpow.pop %v4435
    %v4437 = vadd.f32 %v4434, 1.0
    %v4438 = vadd.f32 %v4436, 1.0
    %v4439 = vrcp.pop %v4437
    %v4440 = vmul.f32 1.0, %v4439
    %v4441 = vrcp.pop %v4438
    %v4442 = vmul.f32 1.0, %v4441
    %v4443 = vadd.f32 %v4409, %v3494
    %v4444 = vadd.f32 %v4412, %v3494
    %v4445 = vmul.f32 %v4426, %v4443
    %v4446 = vmul.f32 %v4428, %v4444
    %v4447 = vadd.f32 %v4326, %v4445
    %v4448 = vadd.f32 %v4329, %v4446
    %v4449 = vtanh.pop %v4447
    %v4450 = vtanh.pop %v4448
    %v4451 = vsub.f32 %v4322, %v4449
    %v4452 = vsub.f32 %v4323, %v4450
    %v4453 = vmul.f32 %v4440, %v4451
    %v4454 = vmul.f32 %v4442, %v4452
    %v4455 = vadd.f32 %v4449, %v4453
    %v4456 = vadd.f32 %v4450, %v4454
    %v4457 = vld [vmem:[%s2452] sm:$0xff]
    %v4458 = vld [vmem:[%s2452 + $0x8] sm:$0xff]
    %v4459 = vld [vmem:[%s2452 + $0x10] sm:$0xff]
    %v4460 = vld [vmem:[%s2452 + $0x18] sm:$0xff]
    %v4461 = vld [vmem:[%s2452 + $0x20] sm:$0xff]
    %v4462 = vld [vmem:[%s2452 + $0x28] sm:$0xff]
    %v4463 = vpack.c.bf16 %v4456, %v4455
    %4464 = vmatprep.subr.bf16.mxu0 %v3619
    %4465 = vmatpush1.bf16.msra.mxu0 %v3618
    %4466 = vmatprep.subr.bf16.mxu0 %v3622
    %4467 = vmatpush1.bf16.msra.mxu0 %v3621
    %4468 = vmatprep.subr.bf16.mxu0 %v3625
    %4469 = vmatpush1.bf16.msra.mxu0 %v3624
    %4470 = vmatprep.subr.bf16.mxu0 %v3628
    %4471 = vmatpush1.bf16.msra.mxu0 %v3627
    %4472 = vmatprep.subr.bf16.mxu0 %v3631
    %4473 = vmatpush1.bf16.msra.mxu0 %v3630
    %4474 = vmatprep.subr.bf16.mxu0 %v3634
    %4475 = vmatpush1.bf16.msra.mxu0 %v3633
    %4476 = vmatprep.subr.bf16.mxu0 %v3637
    %4477 = vmatpush1.bf16.msra.mxu0 %v3636
    %4478 = vmatprep.subr.bf16.mxu0 %v3640
    %4479 = vmatpush1.bf16.msra.mxu0 %v3639
    %4480 = vmatprep.subr.bf16.mxu0 0
    %4481 = vmatpush1.bf16.msra.mxu0 0
    %4482 = vmatprep.subr.bf16.mxu0 0
    %4483 = vmatpush1.bf16.msra.mxu0 0
    %4484 = vmatprep.subr.bf16.mxu0 0
    %4485 = vmatpush1.bf16.msra.mxu0 0
    %4486 = vmatprep.subr.bf16.mxu0 0
    %4487 = vmatpush1.bf16.msra.mxu0 0
    %4488 = vmatprep.subr.bf16.mxu0 0
    %4489 = vmatpush1.bf16.msra.mxu0 0
    %4490 = vmatprep.subr.bf16.mxu0 0
    %4491 = vmatpush1.bf16.msra.mxu0 0
    %4492 = vmatprep.subr.bf16.mxu0 0
    %4493 = vmatpush1.bf16.msra.mxu0 0
    %4494 = vmatprep.subr.bf16.mxu0 0
    %4495 = vmatpush1.bf16.msra.mxu0 0
    %4496 = vmatprep.mubr.bf16.mxu0 0
    %4497 = vmatmul.mubr.bf16.gmra.mrb[0].mxu0 %v4463
    %v4498 = vpop.f32.mrb[0].mxu0
    %v4499 = vadd.f32 0.0, %v4498
    %v4500 = vpop.f32.mrb[0].mxu0
    %v4501 = vadd.f32 0.0, %v4500
    %v4502 = vpop.f32.mrb[0].mxu0
    %v4503 = vadd.f32 0.0, %v4502
    %v4504 = vpop.f32.mrb[0].mxu0
    %v4505 = vadd.f32 0.0, %v4504
    %4506 = vdwg.mxu0
    %4507 = vmatprep.subr.bf16.mxu0 0
    %4508 = vmatpush1.bf16.msra.mxu0 %v3620
    %4509 = vmatprep.subr.bf16.mxu0 0
    %4510 = vmatpush1.bf16.msra.mxu0 %v3623
    %4511 = vmatprep.subr.bf16.mxu0 0
    %4512 = vmatpush1.bf16.msra.mxu0 %v3626
    %4513 = vmatprep.subr.bf16.mxu0 0
    %4514 = vmatpush1.bf16.msra.mxu0 %v3629
    %4515 = vmatprep.subr.bf16.mxu0 0
    %4516 = vmatpush1.bf16.msra.mxu0 %v3632
    %4517 = vmatprep.subr.bf16.mxu0 0
    %4518 = vmatpush1.bf16.msra.mxu0 %v3635
    %4519 = vmatprep.subr.bf16.mxu0 0
    %4520 = vmatpush1.bf16.msra.mxu0 %v3638
    %4521 = vmatprep.subr.bf16.mxu0 0
    %4522 = vmatpush1.bf16.msra.mxu0 %v3641
    %4523 = vmatprep.subr.bf16.mxu0 0
    %4524 = vmatpush1.bf16.msra.mxu0 0
    %4525 = vmatprep.subr.bf16.mxu0 0
    %4526 = vmatpush1.bf16.msra.mxu0 0
    %4527 = vmatprep.subr.bf16.mxu0 0
    %4528 = vmatpush1.bf16.msra.mxu0 0
    %4529 = vmatprep.subr.bf16.mxu0 0
    %4530 = vmatpush1.bf16.msra.mxu0 0
    %4531 = vmatprep.subr.bf16.mxu0 0
    %4532 = vmatpush1.bf16.msra.mxu0 0
    %4533 = vmatprep.subr.bf16.mxu0 0
    %4534 = vmatpush1.bf16.msra.mxu0 0
    %4535 = vmatprep.subr.bf16.mxu0 0
    %4536 = vmatpush1.bf16.msra.mxu0 0
    %4537 = vmatprep.subr.bf16.mxu0 0
    %4538 = vmatpush1.bf16.msra.mxu0 0
    %4539 = vmatprep.mubr.bf16.mxu0 0
    %4540 = vmatmul.mubr.bf16.gmra.mrb[0].mxu0 %v4463
    %v4541 = vpop.f32.mrb[0].mxu0
    %v4542 = vadd.f32 0.0, %v4541
    %v4543 = vpop.f32.mrb[0].mxu0
    %v4544 = vpop.f32.mrb[0].mxu0
    %v4545 = vadd.f32 0.0, %v4544
    %v4546 = vpop.f32.mrb[0].mxu0
    %4547 = vdwg.mxu0
    %v4548 = vadd.f32 %v4457, %v4499
    %v4549 = vadd.f32 %v4460, %v4503
    %v4550 = vxor.u32 %v4548, 2147483648
    %v4551 = vxor.u32 %v4549, 2147483648
    %v4552 = vmul.f32 %v4550, 1.442695
    %v4553 = vpow.pop %v4552
    %v4554 = vmul.f32 %v4551, 1.442695
    %v4555 = vpow.pop %v4554
    %v4556 = vadd.f32 %v4553, 1.0
    %v4557 = vadd.f32 %v4555, 1.0
    %v4558 = vrcp.pop %v4556
    %v4559 = vmul.f32 1.0, %v4558
    %v4560 = vrcp.pop %v4557
    %v4561 = vmul.f32 1.0, %v4560
    %v4562 = vadd.f32 %v4458, %v4501
    %v4563 = vadd.f32 %v4461, %v4505
    %v4564 = vxor.u32 %v4562, 2147483648
    %v4565 = vxor.u32 %v4563, 2147483648
    %v4566 = vmul.f32 %v4564, 1.442695
    %v4567 = vpow.pop %v4566
    %v4568 = vmul.f32 %v4565, 1.442695
    %v4569 = vpow.pop %v4568
    %v4570 = vadd.f32 %v4567, 1.0
    %v4571 = vadd.f32 %v4569, 1.0
    %v4572 = vrcp.pop %v4570
    %v4573 = vmul.f32 1.0, %v4572
    %v4574 = vrcp.pop %v4571
    %v4575 = vmul.f32 1.0, %v4574
    %v4576 = vadd.f32 %v4542, %v3494
    %v4577 = vadd.f32 %v4545, %v3494
    %v4578 = vmul.f32 %v4559, %v4576
    %v4579 = vmul.f32 %v4561, %v4577
    %v4580 = vadd.f32 %v4459, %v4578
    %v4581 = vadd.f32 %v4462, %v4579
    %v4582 = vtanh.pop %v4580
    %v4583 = vtanh.pop %v4581
    %v4584 = vsub.f32 %v4455, %v4582
    %v4585 = vsub.f32 %v4456, %v4583
    %v4586 = vmul.f32 %v4573, %v4584
    %v4587 = vmul.f32 %v4575, %v4585
    %v4588 = vadd.f32 %v4582, %v4586
    %v4589 = vadd.f32 %v4583, %v4587
    %v4590 = vld [vmem:[%s2748] sm:$0xff]
    %v4591 = vld [vmem:[%s2748 + $0x8] sm:$0xff]
    %v4592 = vld [vmem:[%s2748 + $0x10] sm:$0xff]
    %v4593 = vld [vmem:[%s2748 + $0x18] sm:$0xff]
    %v4594 = vld [vmem:[%s2748 + $0x20] sm:$0xff]
    %v4595 = vld [vmem:[%s2748 + $0x28] sm:$0xff]
    %v4596 = vpack.c.bf16 %v4589, %v4588
    %4597 = vmatprep.subr.bf16.mxu0 %v3619
    %4598 = vmatpush1.bf16.msra.mxu0 %v3618
    %4599 = vmatprep.subr.bf16.mxu0 %v3622
    %4600 = vmatpush1.bf16.msra.mxu0 %v3621
    %4601 = vmatprep.subr.bf16.mxu0 %v3625
    %4602 = vmatpush1.bf16.msra.mxu0 %v3624
    %4603 = vmatprep.subr.bf16.mxu0 %v3628
    %4604 = vmatpush1.bf16.msra.mxu0 %v3627
    %4605 = vmatprep.subr.bf16.mxu0 %v3631
    %4606 = vmatpush1.bf16.msra.mxu0 %v3630
    %4607 = vmatprep.subr.bf16.mxu0 %v3634
    %4608 = vmatpush1.bf16.msra.mxu0 %v3633
    %4609 = vmatprep.subr.bf16.mxu0 %v3637
    %4610 = vmatpush1.bf16.msra.mxu0 %v3636
    %4611 = vmatprep.subr.bf16.mxu0 %v3640
    %4612 = vmatpush1.bf16.msra.mxu0 %v3639
    %4613 = vmatprep.subr.bf16.mxu0 0
    %4614 = vmatpush1.bf16.msra.mxu0 0
    %4615 = vmatprep.subr.bf16.mxu0 0
    %4616 = vmatpush1.bf16.msra.mxu0 0
    %4617 = vmatprep.subr.bf16.mxu0 0
    %4618 = vmatpush1.bf16.msra.mxu0 0
    %4619 = vmatprep.subr.bf16.mxu0 0
    %4620 = vmatpush1.bf16.msra.mxu0 0
    %4621 = vmatprep.subr.bf16.mxu0 0
    %4622 = vmatpush1.bf16.msra.mxu0 0
    %4623 = vmatprep.subr.bf16.mxu0 0
    %4624 = vmatpush1.bf16.msra.mxu0 0
    %4625 = vmatprep.subr.bf16.mxu0 0
    %4626 = vmatpush1.bf16.msra.mxu0 0
    %4627 = vmatprep.subr.bf16.mxu0 0
    %4628 = vmatpush1.bf16.msra.mxu0 0
    %4629 = vmatprep.mubr.bf16.mxu0 0
    %4630 = vmatmul.mubr.bf16.gmra.mrb[0].mxu0 %v4596
    %v4631 = vpop.f32.mrb[0].mxu0
    %v4632 = vadd.f32 0.0, %v4631
    %v4633 = vpop.f32.mrb[0].mxu0
    %v4634 = vadd.f32 0.0, %v4633
    %v4635 = vpop.f32.mrb[0].mxu0
    %v4636 = vadd.f32 0.0, %v4635
    %v4637 = vpop.f32.mrb[0].mxu0
    %v4638 = vadd.f32 0.0, %v4637
    %4639 = vdwg.mxu0
    %4640 = vmatprep.subr.bf16.mxu0 0
    %4641 = vmatpush1.bf16.msra.mxu0 %v3620
    %4642 = vmatprep.subr.bf16.mxu0 0
    %4643 = vmatpush1.bf16.msra.mxu0 %v3623
    %4644 = vmatprep.subr.bf16.mxu0 0
    %4645 = vmatpush1.bf16.msra.mxu0 %v3626
    %4646 = vmatprep.subr.bf16.mxu0 0
    %4647 = vmatpush1.bf16.msra.mxu0 %v3629
    %4648 = vmatprep.subr.bf16.mxu0 0
    %4649 = vmatpush1.bf16.msra.mxu0 %v3632
    %4650 = vmatprep.subr.bf16.mxu0 0
    %4651 = vmatpush1.bf16.msra.mxu0 %v3635
    %4652 = vmatprep.subr.bf16.mxu0 0
    %4653 = vmatpush1.bf16.msra.mxu0 %v3638
    %4654 = vmatprep.subr.bf16.mxu0 0
    %4655 = vmatpush1.bf16.msra.mxu0 %v3641
    %4656 = vmatprep.subr.bf16.mxu0 0
    %4657 = vmatpush1.bf16.msra.mxu0 0
    %4658 = vmatprep.subr.bf16.mxu0 0
    %4659 = vmatpush1.bf16.msra.mxu0 0
    %4660 = vmatprep.subr.bf16.mxu0 0
    %4661 = vmatpush1.bf16.msra.mxu0 0
    %4662 = vmatprep.subr.bf16.mxu0 0
    %4663 = vmatpush1.bf16.msra.mxu0 0
    %4664 = vmatprep.subr.bf16.mxu0 0
    %4665 = vmatpush1.bf16.msra.mxu0 0
    %4666 = vmatprep.subr.bf16.mxu0 0
    %4667 = vmatpush1.bf16.msra.mxu0 0
    %4668 = vmatprep.subr.bf16.mxu0 0
    %4669 = vmatpush1.bf16.msra.mxu0 0
    %4670 = vmatprep.subr.bf16.mxu0 0
    %4671 = vmatpush1.bf16.msra.mxu0 0
    %4672 = vmatprep.mubr.bf16.mxu0 0
    %4673 = vmatmul.mubr.bf16.gmra.mrb[0].mxu0 %v4596
    %v4674 = vpop.f32.mrb[0].mxu0
    %v4675 = vadd.f32 0.0, %v4674
    %v4676 = vpop.f32.mrb[0].mxu0
    %v4677 = vpop.f32.mrb[0].mxu0
    %v4678 = vadd.f32 0.0, %v4677
    %v4679 = vpop.f32.mrb[0].mxu0
    %4680 = vdwg.mxu0
    %v4681 = vadd.f32 %v4590, %v4632
    %v4682 = vadd.f32 %v4593, %v4636
    %v4683 = vxor.u32 %v4681, 2147483648
    %v4684 = vxor.u32 %v4682, 2147483648
    %v4685 = vmul.f32 %v4683, 1.442695
    %v4686 = vpow.pop %v4685
    %v4687 = vmul.f32 %v4684, 1.442695
    %v4688 = vpow.pop %v4687
    %v4689 = vadd.f32 %v4686, 1.0
    %v4690 = vadd.f32 %v4688, 1.0
    %v4691 = vrcp.pop %v4689
    %v4692 = vmul.f32 1.0, %v4691
    %v4693 = vrcp.pop %v4690
    %v4694 = vmul.f32 1.0, %v4693
    %v4695 = vadd.f32 %v4591, %v4634
    %v4696 = vadd.f32 %v4594, %v4638
    %v4697 = vxor.u32 %v4695, 2147483648
    %v4698 = vxor.u32 %v4696, 2147483648
    %v4699 = vmul.f32 %v4697, 1.442695
    %v4700 = vpow.pop %v4699
    %v4701 = vmul.f32 %v4698, 1.442695
    %v4702 = vpow.pop %v4701
    %v4703 = vadd.f32 %v4700, 1.0
    %v4704 = vadd.f32 %v4702, 1.0
    %v4705 = vrcp.pop %v4703
    %v4706 = vmul.f32 1.0, %v4705
    %v4707 = vrcp.pop %v4704
    %v4708 = vmul.f32 1.0, %v4707
    %v4709 = vadd.f32 %v4675, %v3494
    %v4710 = vadd.f32 %v4678, %v3494
    %v4711 = vmul.f32 %v4692, %v4709
    %v4712 = vmul.f32 %v4694, %v4710
    %v4713 = vadd.f32 %v4592, %v4711
    %v4714 = vadd.f32 %v4595, %v4712
    %v4715 = vtanh.pop %v4713
    %v4716 = vtanh.pop %v4714
    %v4717 = vsub.f32 %v4588, %v4715
    %v4718 = vsub.f32 %v4589, %v4716
    %v4719 = vmul.f32 %v4706, %v4717
    %v4720 = vmul.f32 %v4708, %v4718
    %v4721 = vadd.f32 %v4715, %v4719
    %v4722 = vadd.f32 %v4716, %v4720
    %4723 = vst [vmem:[%s3496] sm:$0xff] %v4721
    %4724 = vst [vmem:[%s3496 + $0x8] sm:$0xff] %v4722
    // Predicated region
    $region98: #{tpu_custom_call.1} parent=1 // pred_check
      %p4725 = pneg %p161
    $region99: #{tpu_custom_call.1} parent=1 // pred_check_branch
      %4727 = sbr.rel (%p4725) target = $region101
    $region100: #{tpu_custom_call.1} parent=1 // pred_region
      %v4728 = vld [vmem:[%s3496] sm:$0xff]
      %v4729 = vld [vmem:[%s3496 + $0x8] sm:$0xff]
      %v4730 = vpack.c.bf16 %v4729, %v4728
      %v4731 = vld [vmem:[#allocation14] sm:$0xf]
      %v4732 = vld [vmem:[#allocation14 + $0x4] sm:$0xf]
      %v4733 = vld [vmem:[#allocation14 + $0x8] sm:$0xf]
      %v4734 = vld [vmem:[#allocation14 + $0xc] sm:$0xf]
      %v4735 = vld [vmem:[#allocation14 + $0x10] sm:$0xf]
      %v4736 = vld [vmem:[#allocation14 + $0x14] sm:$0xf]
      %v4737 = vld [vmem:[#allocation14 + $0x18] sm:$0xf]
      %v4738 = vld [vmem:[#allocation14 + $0x1c] sm:$0xf]
      %v4739 = vld [vmem:[#allocation14 + $0x20] sm:$0xf]
      %v4740 = vld [vmem:[#allocation14 + $0x24] sm:$0xf]
      %v4741 = vld [vmem:[#allocation14 + $0x28] sm:$0xf]
      %v4742 = vld [vmem:[#allocation14 + $0x2c] sm:$0xf]
      %v4743 = vld [vmem:[#allocation14 + $0x30] sm:$0xf]
      %v4744 = vld [vmem:[#allocation14 + $0x34] sm:$0xf]
      %v4745 = vld [vmem:[#allocation14 + $0x38] sm:$0xf]
      %v4746 = vld [vmem:[#allocation14 + $0x3c] sm:$0xf]
      %v4747 = vld [vmem:[%s10] sm:$0x1]
      %v4749 = vlaneseq
      %v4750 = vshrl.u32 %v4749, 7
      %v4751 = vsub.s32 0, %v4750
      %v4752 = vrot.slane %v4747, %v4751
      %v4770 = vunpack.c.l.b16 %v4731
      %v4771 = vunpack.c.l.b16 %v4732
      %v4772 = vunpack.c.l.b16 %v4733
      %v4773 = vunpack.c.l.b16 %v4734
      %v4774 = vunpack.c.l.b16 %v4735
      %v4775 = vunpack.c.l.b16 %v4736
      %v4776 = vunpack.c.l.b16 %v4737
      %v4777 = vunpack.c.l.b16 %v4738
      %v4778 = vunpack.c.l.b16 %v4739
      %v4779 = vunpack.c.l.b16 %v4740
      %v4780 = vunpack.c.l.b16 %v4741
      %v4781 = vunpack.c.l.b16 %v4742
      %v4782 = vunpack.c.l.b16 %v4743
      %v4783 = vunpack.c.l.b16 %v4744
      %v4784 = vunpack.c.l.b16 %v4745
      %v4785 = vunpack.c.l.b16 %v4746
      %v4786 = vpack.c.b16 %v4771, %v4770
      %v4787 = vpack.c.b16 %v4773, %v4772
      %v4788 = vpack.c.b16 %v4775, %v4774
      %v4789 = vpack.c.b16 %v4777, %v4776
      %v4790 = vpack.c.b16 %v4779, %v4778
      %v4791 = vpack.c.b16 %v4781, %v4780
      %v4792 = vpack.c.b16 %v4783, %v4782
      %v4793 = vpack.c.b16 %v4785, %v4784
      %4802 = vmatprep.subr.bf16.mxu0 0
      %4803 = vmatpush1.bf16.msra.mxu0 %v4786
      %4804 = vmatprep.subr.bf16.mxu0 0
      %4805 = vmatpush1.bf16.msra.mxu0 %v4787
      %4806 = vmatprep.subr.bf16.mxu0 0
      %4807 = vmatpush1.bf16.msra.mxu0 %v4788
      %4808 = vmatprep.subr.bf16.mxu0 0
      %4809 = vmatpush1.bf16.msra.mxu0 %v4789
      %4810 = vmatprep.subr.bf16.mxu0 0
      %4811 = vmatpush1.bf16.msra.mxu0 %v4790
      %4812 = vmatprep.subr.bf16.mxu0 0
      %4813 = vmatpush1.bf16.msra.mxu0 %v4791
      %4814 = vmatprep.subr.bf16.mxu0 0
      %4815 = vmatpush1.bf16.msra.mxu0 %v4792
      %4816 = vmatprep.subr.bf16.mxu0 0
      %4817 = vmatpush1.bf16.msra.mxu0 %v4793
      %4818 = vmatprep.subr.bf16.mxu0 0
      %4819 = vmatpush1.bf16.msra.mxu0 0
      %4820 = vmatprep.subr.bf16.mxu0 0
      %4821 = vmatpush1.bf16.msra.mxu0 0
      %4822 = vmatprep.subr.bf16.mxu0 0
      %4823 = vmatpush1.bf16.msra.mxu0 0
      %4824 = vmatprep.subr.bf16.mxu0 0
      %4825 = vmatpush1.bf16.msra.mxu0 0
      %4826 = vmatprep.subr.bf16.mxu0 0
      %4827 = vmatpush1.bf16.msra.mxu0 0
      %4828 = vmatprep.subr.bf16.mxu0 0
      %4829 = vmatpush1.bf16.msra.mxu0 0
      %4830 = vmatprep.subr.bf16.mxu0 0
      %4831 = vmatpush1.bf16.msra.mxu0 0
      %4832 = vmatprep.subr.bf16.mxu0 0
      %4833 = vmatpush1.bf16.msra.mxu0 0
      %4834 = vmatprep.mubr.bf16.mxu0 0
      %4835 = vmatmul.mubr.bf16.gmra.mrb[0].mxu0 %v4730
      %v4836 = vpop.f32.mrb[0].mxu0
      %v4837 = vadd.f32 %v4752, %v4836
      %v4838 = vpop.f32.mrb[0].mxu0
      %v4839 = vpop.f32.mrb[0].mxu0
      %v4840 = vadd.f32 %v4752, %v4839
      %v4841 = vpop.f32.mrb[0].mxu0
      %4842 = vdwg.mxu0
      %v4843 = vmax.f32 %v4837, 0.0
      %v4844 = vmax.f32 %v4840, 0.0
      %v4845 = vpack.c.bf16 %v4844, %v4843
      %v4846 = vld [vmem:[#allocation16] sm:$0xf]
      %v4847 = vld [vmem:[#allocation16 + $0x4] sm:$0xf]
      %v4848 = vld [vmem:[#allocation16 + $0x8] sm:$0xf]
      %v4849 = vld [vmem:[#allocation16 + $0xc] sm:$0xf]
      %v4850 = vld [vmem:[#allocation16 + $0x10] sm:$0xf]
      %v4851 = vld [vmem:[#allocation16 + $0x14] sm:$0xf]
      %v4852 = vld [vmem:[#allocation16 + $0x18] sm:$0xf]
      %v4853 = vld [vmem:[#allocation16 + $0x1c] sm:$0xf]
      %v4854 = vld [vmem:[#allocation16 + $0x20] sm:$0xf]
      %v4855 = vld [vmem:[#allocation16 + $0x24] sm:$0xf]
      %v4856 = vld [vmem:[#allocation16 + $0x28] sm:$0xf]
      %v4857 = vld [vmem:[#allocation16 + $0x2c] sm:$0xf]
      %v4858 = vld [vmem:[#allocation16 + $0x30] sm:$0xf]
      %v4859 = vld [vmem:[#allocation16 + $0x34] sm:$0xf]
      %v4860 = vld [vmem:[#allocation16 + $0x38] sm:$0xf]
      %v4861 = vld [vmem:[#allocation16 + $0x3c] sm:$0xf]
      %v4862 = vld [vmem:[%s12] sm:$0x1]
      %v4864 = vlaneseq
      %v4865 = vshrl.u32 %v4864, 7
      %v4866 = vsub.s32 0, %v4865
      %v4867 = vrot.slane %v4862, %v4866
      %v4885 = vunpack.c.l.b16 %v4846
      %v4886 = vunpack.c.l.b16 %v4847
      %v4887 = vunpack.c.l.b16 %v4848
      %v4888 = vunpack.c.l.b16 %v4849
      %v4889 = vunpack.c.l.b16 %v4850
      %v4890 = vunpack.c.l.b16 %v4851
      %v4891 = vunpack.c.l.b16 %v4852
      %v4892 = vunpack.c.l.b16 %v4853
      %v4893 = vunpack.c.l.b16 %v4854
      %v4894 = vunpack.c.l.b16 %v4855
      %v4895 = vunpack.c.l.b16 %v4856
      %v4896 = vunpack.c.l.b16 %v4857
      %v4897 = vunpack.c.l.b16 %v4858
      %v4898 = vunpack.c.l.b16 %v4859
      %v4899 = vunpack.c.l.b16 %v4860
      %v4900 = vunpack.c.l.b16 %v4861
      %v4901 = vpack.c.b16 %v4886, %v4885
      %v4902 = vpack.c.b16 %v4888, %v4887
      %v4903 = vpack.c.b16 %v4890, %v4889
      %v4904 = vpack.c.b16 %v4892, %v4891
      %v4905 = vpack.c.b16 %v4894, %v4893
      %v4906 = vpack.c.b16 %v4896, %v4895
      %v4907 = vpack.c.b16 %v4898, %v4897
      %v4908 = vpack.c.b16 %v4900, %v4899
      %4917 = vmatprep.subr.bf16.mxu0 0
      %4918 = vmatpush1.bf16.msra.mxu0 %v4901
      %4919 = vmatprep.subr.bf16.mxu0 0
      %4920 = vmatpush1.bf16.msra.mxu0 %v4902
      %4921 = vmatprep.subr.bf16.mxu0 0
      %4922 = vmatpush1.bf16.msra.mxu0 %v4903
      %4923 = vmatprep.subr.bf16.mxu0 0
      %4924 = vmatpush1.bf16.msra.mxu0 %v4904
      %4925 = vmatprep.subr.bf16.mxu0 0
      %4926 = vmatpush1.bf16.msra.mxu0 %v4905
      %4927 = vmatprep.subr.bf16.mxu0 0
      %4928 = vmatpush1.bf16.msra.mxu0 %v4906
      %4929 = vmatprep.subr.bf16.mxu0 0
      %4930 = vmatpush1.bf16.msra.mxu0 %v4907
      %4931 = vmatprep.subr.bf16.mxu0 0
      %4932 = vmatpush1.bf16.msra.mxu0 %v4908
      %4933 = vmatprep.subr.bf16.mxu0 0
      %4934 = vmatpush1.bf16.msra.mxu0 0
      %4935 = vmatprep.subr.bf16.mxu0 0
      %4936 = vmatpush1.bf16.msra.mxu0 0
      %4937 = vmatprep.subr.bf16.mxu0 0
      %4938 = vmatpush1.bf16.msra.mxu0 0
      %4939 = vmatprep.subr.bf16.mxu0 0
      %4940 = vmatpush1.bf16.msra.mxu0 0
      %4941 = vmatprep.subr.bf16.mxu0 0
      %4942 = vmatpush1.bf16.msra.mxu0 0
      %4943 = vmatprep.subr.bf16.mxu0 0
      %4944 = vmatpush1.bf16.msra.mxu0 0
      %4945 = vmatprep.subr.bf16.mxu0 0
      %4946 = vmatpush1.bf16.msra.mxu0 0
      %4947 = vmatprep.subr.bf16.mxu0 0
      %4948 = vmatpush1.bf16.msra.mxu0 0
      %4949 = vmatprep.mubr.bf16.mxu0 0
      %4950 = vmatmul.mubr.bf16.gmra.mrb[0].mxu0 %v4845
      %v4951 = vpop.f32.mrb[0].mxu0
      %v4952 = vadd.f32 %v4867, %v4951
      %v4953 = vpop.f32.mrb[0].mxu0
      %v4954 = vpop.f32.mrb[0].mxu0
      %v4955 = vadd.f32 %v4867, %v4954
      %v4956 = vpop.f32.mrb[0].mxu0
      %4957 = vdwg.mxu0
      %v4958 = vmax.f32 %v4952, 0.0
      %v4959 = vmax.f32 %v4955, 0.0
      %v4960 = vpack.c.bf16 %v4959, %v4958
      %v4961 = vld [vmem:[#allocation17] sm:$0xf]
      %v4962 = vld [vmem:[#allocation17 + $0x4] sm:$0xf]
      %v4963 = vld [vmem:[#allocation17 + $0x8] sm:$0xf]
      %v4964 = vld [vmem:[#allocation17 + $0xc] sm:$0xf]
      %v4965 = vld [vmem:[#allocation17 + $0x10] sm:$0xf]
      %v4966 = vld [vmem:[#allocation17 + $0x14] sm:$0xf]
      %v4967 = vld [vmem:[#allocation17 + $0x18] sm:$0xf]
      %v4968 = vld [vmem:[#allocation17 + $0x1c] sm:$0xf]
      %v4969 = vld [vmem:[#allocation17 + $0x20] sm:$0xf]
      %v4970 = vld [vmem:[#allocation17 + $0x24] sm:$0xf]
      %v4971 = vld [vmem:[#allocation17 + $0x28] sm:$0xf]
      %v4972 = vld [vmem:[#allocation17 + $0x2c] sm:$0xf]
      %v4973 = vld [vmem:[#allocation17 + $0x30] sm:$0xf]
      %v4974 = vld [vmem:[#allocation17 + $0x34] sm:$0xf]
      %v4975 = vld [vmem:[#allocation17 + $0x38] sm:$0xf]
      %v4976 = vld [vmem:[#allocation17 + $0x3c] sm:$0xf]
      %v4977 = vld [vmem:[%s14] sm:$0x1]
      %v4979 = vlaneseq
      %v4980 = vshrl.u32 %v4979, 7
      %v4981 = vsub.s32 0, %v4980
      %v4982 = vrot.slane %v4977, %v4981
      %v5000 = vunpack.c.l.b16 %v4961
      %v5001 = vunpack.c.l.b16 %v4962
      %v5002 = vunpack.c.l.b16 %v4963
      %v5003 = vunpack.c.l.b16 %v4964
      %v5004 = vunpack.c.l.b16 %v4965
      %v5005 = vunpack.c.l.b16 %v4966
      %v5006 = vunpack.c.l.b16 %v4967
      %v5007 = vunpack.c.l.b16 %v4968
      %v5008 = vunpack.c.l.b16 %v4969
      %v5009 = vunpack.c.l.b16 %v4970
      %v5010 = vunpack.c.l.b16 %v4971
      %v5011 = vunpack.c.l.b16 %v4972
      %v5012 = vunpack.c.l.b16 %v4973
      %v5013 = vunpack.c.l.b16 %v4974
      %v5014 = vunpack.c.l.b16 %v4975
      %v5015 = vunpack.c.l.b16 %v4976
      %v5016 = vpack.c.b16 %v5001, %v5000
      %v5017 = vpack.c.b16 %v5003, %v5002
      %v5018 = vpack.c.b16 %v5005, %v5004
      %v5019 = vpack.c.b16 %v5007, %v5006
      %v5020 = vpack.c.b16 %v5009, %v5008
      %v5021 = vpack.c.b16 %v5011, %v5010
      %v5022 = vpack.c.b16 %v5013, %v5012
      %v5023 = vpack.c.b16 %v5015, %v5014
      %5032 = vmatprep.subr.bf16.mxu0 0
      %5033 = vmatpush1.bf16.msra.mxu0 %v5016
      %5034 = vmatprep.subr.bf16.mxu0 0
      %5035 = vmatpush1.bf16.msra.mxu0 %v5017
      %5036 = vmatprep.subr.bf16.mxu0 0
      %5037 = vmatpush1.bf16.msra.mxu0 %v5018
      %5038 = vmatprep.subr.bf16.mxu0 0
      %5039 = vmatpush1.bf16.msra.mxu0 %v5019
      %5040 = vmatprep.subr.bf16.mxu0 0
      %5041 = vmatpush1.bf16.msra.mxu0 %v5020
      %5042 = vmatprep.subr.bf16.mxu0 0
      %5043 = vmatpush1.bf16.msra.mxu0 %v5021
      %5044 = vmatprep.subr.bf16.mxu0 0
      %5045 = vmatpush1.bf16.msra.mxu0 %v5022
      %5046 = vmatprep.subr.bf16.mxu0 0
      %5047 = vmatpush1.bf16.msra.mxu0 %v5023
      %5048 = vmatprep.subr.bf16.mxu0 0
      %5049 = vmatpush1.bf16.msra.mxu0 0
      %5050 = vmatprep.subr.bf16.mxu0 0
      %5051 = vmatpush1.bf16.msra.mxu0 0
      %5052 = vmatprep.subr.bf16.mxu0 0
      %5053 = vmatpush1.bf16.msra.mxu0 0
      %5054 = vmatprep.subr.bf16.mxu0 0
      %5055 = vmatpush1.bf16.msra.mxu0 0
      %5056 = vmatprep.subr.bf16.mxu0 0
      %5057 = vmatpush1.bf16.msra.mxu0 0
      %5058 = vmatprep.subr.bf16.mxu0 0
      %5059 = vmatpush1.bf16.msra.mxu0 0
      %5060 = vmatprep.subr.bf16.mxu0 0
      %5061 = vmatpush1.bf16.msra.mxu0 0
      %5062 = vmatprep.subr.bf16.mxu0 0
      %5063 = vmatpush1.bf16.msra.mxu0 0
      %5064 = vmatprep.mubr.bf16.mxu0 0
      %5065 = vmatmul.mubr.bf16.gmra.mrb[0].mxu0 %v4960
      %v5066 = vpop.f32.mrb[0].mxu0
      %v5067 = vadd.f32 %v4982, %v5066
      %v5068 = vpop.f32.mrb[0].mxu0
      %v5069 = vpop.f32.mrb[0].mxu0
      %v5070 = vadd.f32 %v4982, %v5069
      %v5071 = vpop.f32.mrb[0].mxu0
      %5072 = vdwg.mxu0
      %5073 = vst [vmem:[#allocation19] sm:$0xff] %v5067
      %5074 = vst [vmem:[#allocation19 + $0x8] sm:$0xff] %v5070
    $region101: #{tpu_custom_call.1} parent=1 // pred_fallthru
      _
    // Predicated region
    $region102: #{tpu_custom_call.1} parent=1 // pred_check
      _
    $region103: #{tpu_custom_call.1} parent=1 // pred_check_branch
      %5076 = sbr.rel (0) target = $region105
    $region104: #{tpu_custom_call.1} parent=1 // pred_region
      %s5078 = ssub.s32 256, 256
      %5079 = vsyncadd [#allocation7], %s5078
      %s5080 = sshll.u32 [#allocation19], 4
      %s5081 = int_to_ptr.vmem [resolvable:$true] %s5080
      %5086 = dma.vmem_to_hbm [thread:$0]  %s5081, 256, %s15, [#allocation7], 128, 128, 8
    $region105: #{tpu_custom_call.1} parent=1 // pred_fallthru
      _
    // Predicated region
    $region106: #{tpu_custom_call.1} parent=1 // pred_check
      _
    $region107: #{tpu_custom_call.1} parent=1 // pred_check_branch
      %5088 = sbr.rel (0) target = $region109
    $region108: #{tpu_custom_call.1} parent=1 // pred_region
      %5089 = dma.done [#allocation7], 256
    $region109: #{tpu_custom_call.1} parent=1 // pred_fallthru
      _
    %5090 = vsyncpa [#allocation6], 1
    %5091 = vsyncpa [#allocation9], 1
    %5092 = vsyncpa [#allocation12], 1
    %5093 = vsyncpa [#allocation15], 1
    %5094 = vsyncpa [#allocation18], 1
    %5095 = vsyncpa [#allocation7], 1

</llo_original>
